<compile_context>
chip_gen: v7x
topology: tpu7x:2x2x1
jax: 0.10.0
libtpu: 0.0.40
codegen_flags: <defaults>
</compile_context>

<pallas_src>
import functools

import jax
import jax.numpy as jnp
from jax.experimental import pallas as pl
from jax.experimental.pallas import tpu as pltpu


def _round_up(x, m):
    return ((x + m - 1) // m) * m


# ----------------------------------------------------------------------------
# Pallas kernel: fused gather + ConvKB (1x3 conv + ReLU + FC-to-scalar).
# ----------------------------------------------------------------------------
def _convkb_kernel(idx_ref,                  # SMEM (3, B_pad) int32  [scalar prefetch]
                   ent_hbm, rel_hbm,         # ANY  (N, D) / (R, D)   [HBM tables]
                   fw_ref,                   # VMEM (C, D) f32        [FC weight, resident]
                   cw_ref, cb_ref, fb_ref,   # SMEM (C, 3), (C,), (1,)
                   o_ref,                    # VMEM (tb, 1) f32       [scores]
                   hbuf, rbuf, tbuf,         # VMEM (tb, D) scratch   [gathered rows]
                   sem,                      # DMA semaphores (2,)
                   *, num_channels, chunk, tb):
    n_chunks = tb // chunk
    base = pl.program_id(0) * tb

    def _row_copy(table, row_idx, buf, dst, s):
        pltpu.make_async_copy(table.at[pl.ds(row_idx, 1), :],
                              buf.at[pl.ds(dst, 1), :], s).start()

    def issue_chunk(c):
        # Start the 3*chunk row-gather DMAs of local chunk c.  All copies of a
        # chunk signal sem[c % 2] and have identical sizes (one (1, D) row).
        s = sem.at[c % 2]
        for j in range(chunk):                      # static unroll
            row = base + c * chunk + j              # global (padded) triple id
            dst = c * chunk + j                     # row inside VMEM buffers
            _row_copy(ent_hbm, idx_ref[0, row], hbuf, dst, s)
            _row_copy(rel_hbm, idx_ref[1, row], rbuf, dst, s)
            _row_copy(ent_hbm, idx_ref[2, row], tbuf, dst, s)

    def wait_chunk(c):
        # All copies of a chunk have the same size, so waiting 3*chunk times
        # with a same-shaped descriptor drains exactly this chunk's arrivals.
        s = sem.at[c % 2]
        for _ in range(3 * chunk):
            pltpu.make_async_copy(ent_hbm.at[pl.ds(0, 1), :],
                                  hbuf.at[pl.ds(0, 1), :], s).wait()

    def compute_chunk(c):
        off = pl.multiple_of(c * chunk, chunk)
        h = hbuf[pl.ds(off, chunk), :]
        r = rbuf[pl.ds(off, chunk), :]
        t = tbuf[pl.ds(off, chunk), :]
        cdt = h.dtype                               # compute in embedding dtype
        acc = jnp.zeros((chunk, h.shape[-1]), jnp.float32)
        for ch in range(num_channels):              # C is small: static unroll
            pre = (cw_ref[ch, 0].astype(cdt) * h
                   + cw_ref[ch, 1].astype(cdt) * r
                   + cw_ref[ch, 2].astype(cdt) * t
                   + cb_ref[ch].astype(cdt))
            act = jnp.maximum(pre, 0.0)             # ReLU, stays in cdt
            # Fold channel ch's FC weight into one f32 accumulator: a single
            # cross-lane reduction per chunk instead of one per channel.
            acc = acc + act.astype(jnp.float32) * fw_ref[ch, :][None, :]
        score = jnp.sum(acc, axis=-1, keepdims=True) + fb_ref[0]
        o_ref[pl.ds(off, chunk), :] = score

    issue_chunk(0)                                  # prologue

    @pl.loop(0, n_chunks)
    def _(c):
        @pl.when(c + 1 < n_chunks)
        def _():
            issue_chunk(c + 1)                      # prefetch next chunk's rows
        wait_chunk(c)
        compute_chunk(c)


def convkb_scores(triples, ent_emb, rel_emb, conv_w, conv_b, fc_w, fc_b,
                  *, tb=512, chunk=32):
    """Fused gather + ConvKB scoring.

    triples : (B, 3) int (head, relation, tail) indices
    ent_emb : (N, D), rel_emb : (R, D)  -- same float dtype (f32 or bf16)
    conv_w  : (C, 3) f32, conv_b : (C,) f32
    fc_w    : (1, C*D) f32, fc_b : (1,) f32
    returns (B, 1) f32 scores
    """
    B = triples.shape[0]
    _, D = ent_emb.shape
    C = conv_w.shape[0]
    assert D % 128 == 0, "embedding dim must be a multiple of 128 (pad it)"
    assert ent_emb.dtype == rel_emb.dtype

    # Chunk bounds vreg pressure (~<=16 KiB live per operand) and shrinks for
    # tiny batches; tile is a multiple of the chunk, batch padded to the tile.
    chunk = max(8, min(chunk, ((4096 // D) // 8) * 8))
    chunk = min(chunk, max(8, ((_round_up(B, 8) // 2) // 8) * 8))
    tb = max(2 * chunk, min(tb, _round_up(B, chunk)))
    tb = (tb // chunk) * chunk
    b_pad = _round_up(B, tb)
    grid = (b_pad // tb,)

    # Indices go to SMEM via scalar prefetch; long axis last to avoid the
    # 2-D SMEM padding blow-up.  Padding rows gather row 0, sliced off below.
    idx = jnp.zeros((3, b_pad), jnp.int32).at[:, :B].set(
        jnp.transpose(triples).astype(jnp.int32))

    # PyTorch flattens (B, C, D) -> (B, C*D) with index c*D + d.
    fc_w_cd = fc_w.reshape(C, D).astype(jnp.float32)

    kernel = functools.partial(_convkb_kernel, num_channels=C, chunk=chunk, tb=tb)
    out = pl.pallas_call(
        kernel,
        out_shape=jax.ShapeDtypeStruct((b_pad, 1), jnp.float32),
        grid_spec=pltpu.PrefetchScalarGridSpec(
            num_scalar_prefetch=1,
            grid=grid,
            in_specs=[
                pl.BlockSpec(memory_space=pl.ANY),                # entity table (HBM)
                pl.BlockSpec(memory_space=pl.ANY),                # relation table (HBM)
                pl.BlockSpec((C, D), lambda i, idx: (0, 0)),      # FC weight (resident)
                pl.BlockSpec(memory_space=pltpu.SMEM),            # conv weight (C, 3)
                pl.BlockSpec(memory_space=pltpu.SMEM),            # conv bias (C,)
                pl.BlockSpec(memory_space=pltpu.SMEM),            # fc bias (1,)
            ],
            out_specs=pl.BlockSpec((tb, 1), lambda i, idx: (i, 0)),
            scratch_shapes=[
                pltpu.VMEM((tb, D), ent_emb.dtype),               # gathered heads
                pltpu.VMEM((tb, D), rel_emb.dtype),               # gathered relations
                pltpu.VMEM((tb, D), ent_emb.dtype),               # gathered tails
                pltpu.SemaphoreType.DMA((2,)),
            ]),
        compiler_params=pltpu.CompilerParams(
            dimension_semantics=("parallel",)),
    )(idx, ent_emb, rel_emb, fc_w_cd,
      conv_w.astype(jnp.float32), conv_b.astype(jnp.float32),
      fc_b.astype(jnp.float32))
    return out[:B]


# ----------------------------------------------------------------------------
# Module wrapper (parameter setup = glue in plain JAX).
# ----------------------------------------------------------------------------
class SpKBGATConvOnlyPallas:
    def __init__(self, key, num_nodes, num_relations, entity_out_dim,
                 nheads_GAT, conv_out_channels):
        D = entity_out_dim[0] * nheads_GAT[0]
        C = conv_out_channels
        k = jax.random.split(key, 5)
        self.final_entity_embeddings = jax.random.normal(
            k[0], (num_nodes, D), jnp.float32)
        self.final_relation_embeddings = jax.random.normal(
            k[1], (num_relations, D), jnp.float32)
        # ConvKB params: Conv2d(1, C, (1,3)) weight (C,1,1,3)+bias(C,), Linear(C*D,1)
        self.conv_w = 0.1 * jax.random.normal(k[2], (C, 1, 1, 3), jnp.float32)
        self.conv_b = 0.1 * jax.random.normal(k[3], (C,), jnp.float32)
        kw, kb = jax.random.split(k[4])
        self.fc_w = 0.1 * jax.random.normal(kw, (1, C * D), jnp.float32)
        self.fc_b = 0.1 * jax.random.normal(kb, (1,), jnp.float32)
        self.D, self.C = D, C

    def forward(self, batch_inputs):
        # batch_inputs: (B, 3) int triples; gather happens inside the kernel.
        return convkb_scores(batch_inputs,
                             self.final_entity_embeddings,
                             self.final_relation_embeddings,
                             self.conv_w.reshape(self.C, 3), self.conv_b,
                             self.fc_w, self.fc_b)

    def forward_reference(self, batch_inputs):
        """Pure-JAX reference mirroring the PyTorch ops, for verification."""
        h = self.final_entity_embeddings[batch_inputs[:, 0], :]
        r = self.final_relation_embeddings[batch_inputs[:, 1], :]
        t = self.final_entity_embeddings[batch_inputs[:, 2], :]
        cw = self.conv_w.reshape(self.C, 3)                      # (C, 3)
        pre = (cw[None, :, 0, None] * h[:, None, :]
               + cw[None, :, 1, None] * r[:, None, :]
               + cw[None, :, 2, None] * t[:, None, :]
               + self.conv_b[None, :, None])                     # (B, C, D)
        act = jnp.maximum(pre, 0.0)
        flat = act.reshape(act.shape[0], -1)                     # (B, C*D)
        return flat @ self.fc_w.T + self.fc_b[None, :]           # (B, 1)


if __name__ == "__main__":
    key = jax.random.PRNGKey(0)
    k_model, k_h, k_r, k_t = jax.random.split(key, 4)

    # Small, module-consistent shapes:
    num_nodes = 32
    num_relations = 8
    entity_out_dim = [64, 32]
    nheads_GAT = [2, 2]           # -> D = 64 * 2 = 128
    conv_out_channels = 8
    batch = 20                    # deliberately not a multiple of the tile

    model = SpKBGATConvOnlyPallas(k_model, num_nodes, num_relations,
                                  entity_out_dim, nheads_GAT, conv_out_channels)

    heads = jax.random.randint(k_h, (batch,), 0, num_nodes, jnp.int32)
    rels = jax.random.randint(k_r, (batch,), 0, num_relations, jnp.int32)
    tails = jax.random.randint(k_t, (batch,), 0, num_nodes, jnp.int32)
    batch_inputs = jnp.stack([heads, rels, tails], axis=1)       # (B, 3)

    out = model.forward(batch_inputs)
    out = jax.block_until_ready(out)

    ref = model.forward_reference(batch_inputs)
    assert out.shape == (batch, 1), out.shape
    assert jnp.allclose(out, ref, atol=1e-4, rtol=1e-4), (
        "mismatch vs reference:\n%r\n%r" % (out, ref))

    print("KERNEL_OK")
</pallas_src>

<mosaic_0001>
module attributes {stable_mosaic.version = 11 : i64} {
  func.func @_convkb_kernel(%arg0: i32, %arg1: memref<3x24xi32, #tpu.memory_space<smem>>, %arg2: memref<32x128xf32, #tpu.memory_space<any>>, %arg3: memref<8x128xf32, #tpu.memory_space<any>>, %arg4: memref<8x128xf32, #tpu.memory_space<vmem>>, %arg5: memref<8x3xf32, #tpu.memory_space<smem>>, %arg6: memref<8xf32, #tpu.memory_space<smem>>, %arg7: memref<1xf32, #tpu.memory_space<smem>>, %arg8: memref<24x1xf32, #tpu.memory_space<vmem>>, %arg9: memref<24x128xf32, #tpu.memory_space<vmem>>, %arg10: memref<24x128xf32, #tpu.memory_space<vmem>>, %arg11: memref<24x128xf32, #tpu.memory_space<vmem>>, %arg12: memref<2x!tpu.dma_semaphore, #tpu.memory_space<semaphore_mem>>) attributes {dimension_semantics = [#tpu.dimension_semantics<parallel>], iteration_bounds = array<i64: 1>, scalar_prefetch = 1 : i64, scratch_operands = 4 : i64, tpu.core_type = #tpu.core_type<tc>, window_params = [{}, {}, {pipeline_mode = #tpu.pipeline_mode<synchronous>, transform_indices = @transform_2, window_bounds = array<i64: 8, 128>}, {transform_indices = @transform_3, window_bounds = array<i64: 8, 3>}, {transform_indices = @transform_4, window_bounds = array<i64: 8>}, {transform_indices = @transform_5, window_bounds = array<i64: 1>}, {transform_indices = @transform_6, window_bounds = array<i64: 24, 1>}]} {
    %c24_i32 = arith.constant 24 : i32
    %0 = arith.muli %arg0, %c24_i32 : i32
    %c0_i32 = arith.constant 0 : i32
    %1 = arith.addi %0, %c0_i32 : i32
    %c0_i32_0 = arith.constant 0 : i32
    %2 = arith.addi %1, %c0_i32_0 : i32
    %c0 = arith.constant 0 : index
    %3 = arith.index_cast %2 : i32 to index
    %4 = memref.load %arg1[%c0, %3] : memref<3x24xi32, #tpu.memory_space<smem>>
    %c0_i32_1 = arith.constant 0 : i32
    %c0_i32_2 = arith.constant 0 : i32
    %5 = tpu.memref_slice %arg2[%4, %c0_i32_2] : memref<32x128xf32, #tpu.memory_space<any>> -> memref<1x128xf32, #tpu.memory_space<any>>
    %c0_i32_3 = arith.constant 0 : i32
    %c0_i32_4 = arith.constant 0 : i32
    %6 = tpu.memref_slice %arg9[%c0_i32_3, %c0_i32_4] : memref<24x128xf32, #tpu.memory_space<vmem>> -> memref<1x128xf32, #tpu.memory_space<vmem>>
    %7 = tpu.memref_slice %arg12[%c0_i32_1] : memref<2x!tpu.dma_semaphore, #tpu.memory_space<semaphore_mem>> -> memref<1x!tpu.dma_semaphore, #tpu.memory_space<semaphore_mem>>
    %8 = tpu.memref_squeeze %7 : memref<1x!tpu.dma_semaphore, #tpu.memory_space<semaphore_mem>> -> memref<!tpu.dma_semaphore, #tpu.memory_space<semaphore_mem>>
    tpu.enqueue_dma source(%5 : memref<1x128xf32, #tpu.memory_space<any>>) target(%6 : memref<1x128xf32, #tpu.memory_space<vmem>>) target_semaphore(%8 : memref<!tpu.dma_semaphore, #tpu.memory_space<semaphore_mem>>)
    %c1 = arith.constant 1 : index
    %9 = arith.index_cast %2 : i32 to index
    %10 = memref.load %arg1[%c1, %9] : memref<3x24xi32, #tpu.memory_space<smem>>
    %c0_i32_5 = arith.constant 0 : i32
    %c0_i32_6 = arith.constant 0 : i32
    %11 = tpu.memref_slice %arg3[%10, %c0_i32_6] : memref<8x128xf32, #tpu.memory_space<any>> -> memref<1x128xf32, #tpu.memory_space<any>>
    %c0_i32_7 = arith.constant 0 : i32
    %c0_i32_8 = arith.constant 0 : i32
    %12 = tpu.memref_slice %arg10[%c0_i32_7, %c0_i32_8] : memref<24x128xf32, #tpu.memory_space<vmem>> -> memref<1x128xf32, #tpu.memory_space<vmem>>
    %13 = tpu.memref_slice %arg12[%c0_i32_5] : memref<2x!tpu.dma_semaphore, #tpu.memory_space<semaphore_mem>> -> memref<1x!tpu.dma_semaphore, #tpu.memory_space<semaphore_mem>>
    %14 = tpu.memref_squeeze %13 : memref<1x!tpu.dma_semaphore, #tpu.memory_space<semaphore_mem>> -> memref<!tpu.dma_semaphore, #tpu.memory_space<semaphore_mem>>
    tpu.enqueue_dma source(%11 : memref<1x128xf32, #tpu.memory_space<any>>) target(%12 : memref<1x128xf32, #tpu.memory_space<vmem>>) target_semaphore(%14 : memref<!tpu.dma_semaphore, #tpu.memory_space<semaphore_mem>>)
    %c2 = arith.constant 2 : index
    %15 = arith.index_cast %2 : i32 to index
    %16 = memref.load %arg1[%c2, %15] : memref<3x24xi32, #tpu.memory_space<smem>>
    %c0_i32_9 = arith.constant 0 : i32
    %c0_i32_10 = arith.constant 0 : i32
    %17 = tpu.memref_slice %arg2[%16, %c0_i32_10] : memref<32x128xf32, #tpu.memory_space<any>> -> memref<1x128xf32, #tpu.memory_space<any>>
    %c0_i32_11 = arith.constant 0 : i32
    %c0_i32_12 = arith.constant 0 : i32
    %18 = tpu.memref_slice %arg11[%c0_i32_11, %c0_i32_12] : memref<24x128xf32, #tpu.memory_space<vmem>> -> memref<1x128xf32, #tpu.memory_space<vmem>>
    %19 = tpu.memref_slice %arg12[%c0_i32_9] : memref<2x!tpu.dma_semaphore, #tpu.memory_space<semaphore_mem>> -> memref<1x!tpu.dma_semaphore, #tpu.memory_space<semaphore_mem>>
    %20 = tpu.memref_squeeze %19 : memref<1x!tpu.dma_semaphore, #tpu.memory_space<semaphore_mem>> -> memref<!tpu.dma_semaphore, #tpu.memory_space<semaphore_mem>>
    tpu.enqueue_dma source(%17 : memref<1x128xf32, #tpu.memory_space<any>>) target(%18 : memref<1x128xf32, #tpu.memory_space<vmem>>) target_semaphore(%20 : memref<!tpu.dma_semaphore, #tpu.memory_space<semaphore_mem>>)
    %c0_i32_13 = arith.constant 0 : i32
    %21 = arith.addi %0, %c0_i32_13 : i32
    %c1_i32 = arith.constant 1 : i32
    %22 = arith.addi %21, %c1_i32 : i32
    %c0_14 = arith.constant 0 : index
    %23 = arith.index_cast %22 : i32 to index
    %24 = memref.load %arg1[%c0_14, %23] : memref<3x24xi32, #tpu.memory_space<smem>>
    %c0_i32_15 = arith.constant 0 : i32
    %c0_i32_16 = arith.constant 0 : i32
    %25 = tpu.memref_slice %arg2[%24, %c0_i32_16] : memref<32x128xf32, #tpu.memory_space<any>> -> memref<1x128xf32, #tpu.memory_space<any>>
    %c1_i32_17 = arith.constant 1 : i32
    %c0_i32_18 = arith.constant 0 : i32
    %26 = tpu.memref_slice %arg9[%c1_i32_17, %c0_i32_18] : memref<24x128xf32, #tpu.memory_space<vmem>> -> memref<1x128xf32, #tpu.memory_space<vmem>>
    %27 = tpu.memref_slice %arg12[%c0_i32_15] : memref<2x!tpu.dma_semaphore, #tpu.memory_space<semaphore_mem>> -> memref<1x!tpu.dma_semaphore, #tpu.memory_space<semaphore_mem>>
    %28 = tpu.memref_squeeze %27 : memref<1x!tpu.dma_semaphore, #tpu.memory_space<semaphore_mem>> -> memref<!tpu.dma_semaphore, #tpu.memory_space<semaphore_mem>>
    tpu.enqueue_dma source(%25 : memref<1x128xf32, #tpu.memory_space<any>>) target(%26 : memref<1x128xf32, #tpu.memory_space<vmem>>) target_semaphore(%28 : memref<!tpu.dma_semaphore, #tpu.memory_space<semaphore_mem>>)
    %c1_19 = arith.constant 1 : index
    %29 = arith.index_cast %22 : i32 to index
    %30 = memref.load %arg1[%c1_19, %29] : memref<3x24xi32, #tpu.memory_space<smem>>
    %c0_i32_20 = arith.constant 0 : i32
    %c0_i32_21 = arith.constant 0 : i32
    %31 = tpu.memref_slice %arg3[%30, %c0_i32_21] : memref<8x128xf32, #tpu.memory_space<any>> -> memref<1x128xf32, #tpu.memory_space<any>>
    %c1_i32_22 = arith.constant 1 : i32
    %c0_i32_23 = arith.constant 0 : i32
    %32 = tpu.memref_slice %arg10[%c1_i32_22, %c0_i32_23] : memref<24x128xf32, #tpu.memory_space<vmem>> -> memref<1x128xf32, #tpu.memory_space<vmem>>
    %33 = tpu.memref_slice %arg12[%c0_i32_20] : memref<2x!tpu.dma_semaphore, #tpu.memory_space<semaphore_mem>> -> memref<1x!tpu.dma_semaphore, #tpu.memory_space<semaphore_mem>>
    %34 = tpu.memref_squeeze %33 : memref<1x!tpu.dma_semaphore, #tpu.memory_space<semaphore_mem>> -> memref<!tpu.dma_semaphore, #tpu.memory_space<semaphore_mem>>
    tpu.enqueue_dma source(%31 : memref<1x128xf32, #tpu.memory_space<any>>) target(%32 : memref<1x128xf32, #tpu.memory_space<vmem>>) target_semaphore(%34 : memref<!tpu.dma_semaphore, #tpu.memory_space<semaphore_mem>>)
    %c2_24 = arith.constant 2 : index
    %35 = arith.index_cast %22 : i32 to index
    %36 = memref.load %arg1[%c2_24, %35] : memref<3x24xi32, #tpu.memory_space<smem>>
    %c0_i32_25 = arith.constant 0 : i32
    %c0_i32_26 = arith.constant 0 : i32
    %37 = tpu.memref_slice %arg2[%36, %c0_i32_26] : memref<32x128xf32, #tpu.memory_space<any>> -> memref<1x128xf32, #tpu.memory_space<any>>
    %c1_i32_27 = arith.constant 1 : i32
    %c0_i32_28 = arith.constant 0 : i32
    %38 = tpu.memref_slice %arg11[%c1_i32_27, %c0_i32_28] : memref<24x128xf32, #tpu.memory_space<vmem>> -> memref<1x128xf32, #tpu.memory_space<vmem>>
    %39 = tpu.memref_slice %arg12[%c0_i32_25] : memref<2x!tpu.dma_semaphore, #tpu.memory_space<semaphore_mem>> -> memref<1x!tpu.dma_semaphore, #tpu.memory_space<semaphore_mem>>
    %40 = tpu.memref_squeeze %39 : memref<1x!tpu.dma_semaphore, #tpu.memory_space<semaphore_mem>> -> memref<!tpu.dma_semaphore, #tpu.memory_space<semaphore_mem>>
    tpu.enqueue_dma source(%37 : memref<1x128xf32, #tpu.memory_space<any>>) target(%38 : memref<1x128xf32, #tpu.memory_space<vmem>>) target_semaphore(%40 : memref<!tpu.dma_semaphore, #tpu.memory_space<semaphore_mem>>)
    %c0_i32_29 = arith.constant 0 : i32
    %41 = arith.addi %0, %c0_i32_29 : i32
    %c2_i32 = arith.constant 2 : i32
    %42 = arith.addi %41, %c2_i32 : i32
    %c0_30 = arith.constant 0 : index
    %43 = arith.index_cast %42 : i32 to index
    %44 = memref.load %arg1[%c0_30, %43] : memref<3x24xi32, #tpu.memory_space<smem>>
    %c0_i32_31 = arith.constant 0 : i32
    %c0_i32_32 = arith.constant 0 : i32
    %45 = tpu.memref_slice %arg2[%44, %c0_i32_32] : memref<32x128xf32, #tpu.memory_space<any>> -> memref<1x128xf32, #tpu.memory_space<any>>
    %c2_i32_33 = arith.constant 2 : i32
    %c0_i32_34 = arith.constant 0 : i32
    %46 = tpu.memref_slice %arg9[%c2_i32_33, %c0_i32_34] : memref<24x128xf32, #tpu.memory_space<vmem>> -> memref<1x128xf32, #tpu.memory_space<vmem>>
    %47 = tpu.memref_slice %arg12[%c0_i32_31] : memref<2x!tpu.dma_semaphore, #tpu.memory_space<semaphore_mem>> -> memref<1x!tpu.dma_semaphore, #tpu.memory_space<semaphore_mem>>
    %48 = tpu.memref_squeeze %47 : memref<1x!tpu.dma_semaphore, #tpu.memory_space<semaphore_mem>> -> memref<!tpu.dma_semaphore, #tpu.memory_space<semaphore_mem>>
    tpu.enqueue_dma source(%45 : memref<1x128xf32, #tpu.memory_space<any>>) target(%46 : memref<1x128xf32, #tpu.memory_space<vmem>>) target_semaphore(%48 : memref<!tpu.dma_semaphore, #tpu.memory_space<semaphore_mem>>)
    %c1_35 = arith.constant 1 : index
    %49 = arith.index_cast %42 : i32 to index
    %50 = memref.load %arg1[%c1_35, %49] : memref<3x24xi32, #tpu.memory_space<smem>>
    %c0_i32_36 = arith.constant 0 : i32
    %c0_i32_37 = arith.constant 0 : i32
    %51 = tpu.memref_slice %arg3[%50, %c0_i32_37] : memref<8x128xf32, #tpu.memory_space<any>> -> memref<1x128xf32, #tpu.memory_space<any>>
    %c2_i32_38 = arith.constant 2 : i32
    %c0_i32_39 = arith.constant 0 : i32
    %52 = tpu.memref_slice %arg10[%c2_i32_38, %c0_i32_39] : memref<24x128xf32, #tpu.memory_space<vmem>> -> memref<1x128xf32, #tpu.memory_space<vmem>>
    %53 = tpu.memref_slice %arg12[%c0_i32_36] : memref<2x!tpu.dma_semaphore, #tpu.memory_space<semaphore_mem>> -> memref<1x!tpu.dma_semaphore, #tpu.memory_space<semaphore_mem>>
    %54 = tpu.memref_squeeze %53 : memref<1x!tpu.dma_semaphore, #tpu.memory_space<semaphore_mem>> -> memref<!tpu.dma_semaphore, #tpu.memory_space<semaphore_mem>>
    tpu.enqueue_dma source(%51 : memref<1x128xf32, #tpu.memory_space<any>>) target(%52 : memref<1x128xf32, #tpu.memory_space<vmem>>) target_semaphore(%54 : memref<!tpu.dma_semaphore, #tpu.memory_space<semaphore_mem>>)
    %c2_40 = arith.constant 2 : index
    %55 = arith.index_cast %42 : i32 to index
    %56 = memref.load %arg1[%c2_40, %55] : memref<3x24xi32, #tpu.memory_space<smem>>
    %c0_i32_41 = arith.constant 0 : i32
    %c0_i32_42 = arith.constant 0 : i32
    %57 = tpu.memref_slice %arg2[%56, %c0_i32_42] : memref<32x128xf32, #tpu.memory_space<any>> -> memref<1x128xf32, #tpu.memory_space<any>>
    %c2_i32_43 = arith.constant 2 : i32
    %c0_i32_44 = arith.constant 0 : i32
    %58 = tpu.memref_slice %arg11[%c2_i32_43, %c0_i32_44] : memref<24x128xf32, #tpu.memory_space<vmem>> -> memref<1x128xf32, #tpu.memory_space<vmem>>
    %59 = tpu.memref_slice %arg12[%c0_i32_41] : memref<2x!tpu.dma_semaphore, #tpu.memory_space<semaphore_mem>> -> memref<1x!tpu.dma_semaphore, #tpu.memory_space<semaphore_mem>>
    %60 = tpu.memref_squeeze %59 : memref<1x!tpu.dma_semaphore, #tpu.memory_space<semaphore_mem>> -> memref<!tpu.dma_semaphore, #tpu.memory_space<semaphore_mem>>
    tpu.enqueue_dma source(%57 : memref<1x128xf32, #tpu.memory_space<any>>) target(%58 : memref<1x128xf32, #tpu.memory_space<vmem>>) target_semaphore(%60 : memref<!tpu.dma_semaphore, #tpu.memory_space<semaphore_mem>>)
    %c0_i32_45 = arith.constant 0 : i32
    %61 = arith.addi %0, %c0_i32_45 : i32
    %c3_i32 = arith.constant 3 : i32
    %62 = arith.addi %61, %c3_i32 : i32
    %c0_46 = arith.constant 0 : index
    %63 = arith.index_cast %62 : i32 to index
    %64 = memref.load %arg1[%c0_46, %63] : memref<3x24xi32, #tpu.memory_space<smem>>
    %c0_i32_47 = arith.constant 0 : i32
    %c0_i32_48 = arith.constant 0 : i32
    %65 = tpu.memref_slice %arg2[%64, %c0_i32_48] : memref<32x128xf32, #tpu.memory_space<any>> -> memref<1x128xf32, #tpu.memory_space<any>>
    %c3_i32_49 = arith.constant 3 : i32
    %c0_i32_50 = arith.constant 0 : i32
    %66 = tpu.memref_slice %arg9[%c3_i32_49, %c0_i32_50] : memref<24x128xf32, #tpu.memory_space<vmem>> -> memref<1x128xf32, #tpu.memory_space<vmem>>
    %67 = tpu.memref_slice %arg12[%c0_i32_47] : memref<2x!tpu.dma_semaphore, #tpu.memory_space<semaphore_mem>> -> memref<1x!tpu.dma_semaphore, #tpu.memory_space<semaphore_mem>>
    %68 = tpu.memref_squeeze %67 : memref<1x!tpu.dma_semaphore, #tpu.memory_space<semaphore_mem>> -> memref<!tpu.dma_semaphore, #tpu.memory_space<semaphore_mem>>
    tpu.enqueue_dma source(%65 : memref<1x128xf32, #tpu.memory_space<any>>) target(%66 : memref<1x128xf32, #tpu.memory_space<vmem>>) target_semaphore(%68 : memref<!tpu.dma_semaphore, #tpu.memory_space<semaphore_mem>>)
    %c1_51 = arith.constant 1 : index
    %69 = arith.index_cast %62 : i32 to index
    %70 = memref.load %arg1[%c1_51, %69] : memref<3x24xi32, #tpu.memory_space<smem>>
    %c0_i32_52 = arith.constant 0 : i32
    %c0_i32_53 = arith.constant 0 : i32
    %71 = tpu.memref_slice %arg3[%70, %c0_i32_53] : memref<8x128xf32, #tpu.memory_space<any>> -> memref<1x128xf32, #tpu.memory_space<any>>
    %c3_i32_54 = arith.constant 3 : i32
    %c0_i32_55 = arith.constant 0 : i32
    %72 = tpu.memref_slice %arg10[%c3_i32_54, %c0_i32_55] : memref<24x128xf32, #tpu.memory_space<vmem>> -> memref<1x128xf32, #tpu.memory_space<vmem>>
    %73 = tpu.memref_slice %arg12[%c0_i32_52] : memref<2x!tpu.dma_semaphore, #tpu.memory_space<semaphore_mem>> -> memref<1x!tpu.dma_semaphore, #tpu.memory_space<semaphore_mem>>
    %74 = tpu.memref_squeeze %73 : memref<1x!tpu.dma_semaphore, #tpu.memory_space<semaphore_mem>> -> memref<!tpu.dma_semaphore, #tpu.memory_space<semaphore_mem>>
    tpu.enqueue_dma source(%71 : memref<1x128xf32, #tpu.memory_space<any>>) target(%72 : memref<1x128xf32, #tpu.memory_space<vmem>>) target_semaphore(%74 : memref<!tpu.dma_semaphore, #tpu.memory_space<semaphore_mem>>)
    %c2_56 = arith.constant 2 : index
    %75 = arith.index_cast %62 : i32 to index
    %76 = memref.load %arg1[%c2_56, %75] : memref<3x24xi32, #tpu.memory_space<smem>>
    %c0_i32_57 = arith.constant 0 : i32
    %c0_i32_58 = arith.constant 0 : i32
    %77 = tpu.memref_slice %arg2[%76, %c0_i32_58] : memref<32x128xf32, #tpu.memory_space<any>> -> memref<1x128xf32, #tpu.memory_space<any>>
    %c3_i32_59 = arith.constant 3 : i32
    %c0_i32_60 = arith.constant 0 : i32
    %78 = tpu.memref_slice %arg11[%c3_i32_59, %c0_i32_60] : memref<24x128xf32, #tpu.memory_space<vmem>> -> memref<1x128xf32, #tpu.memory_space<vmem>>
    %79 = tpu.memref_slice %arg12[%c0_i32_57] : memref<2x!tpu.dma_semaphore, #tpu.memory_space<semaphore_mem>> -> memref<1x!tpu.dma_semaphore, #tpu.memory_space<semaphore_mem>>
    %80 = tpu.memref_squeeze %79 : memref<1x!tpu.dma_semaphore, #tpu.memory_space<semaphore_mem>> -> memref<!tpu.dma_semaphore, #tpu.memory_space<semaphore_mem>>
    tpu.enqueue_dma source(%77 : memref<1x128xf32, #tpu.memory_space<any>>) target(%78 : memref<1x128xf32, #tpu.memory_space<vmem>>) target_semaphore(%80 : memref<!tpu.dma_semaphore, #tpu.memory_space<semaphore_mem>>)
    %c0_i32_61 = arith.constant 0 : i32
    %81 = arith.addi %0, %c0_i32_61 : i32
    %c4_i32 = arith.constant 4 : i32
    %82 = arith.addi %81, %c4_i32 : i32
    %c0_62 = arith.constant 0 : index
    %83 = arith.index_cast %82 : i32 to index
    %84 = memref.load %arg1[%c0_62, %83] : memref<3x24xi32, #tpu.memory_space<smem>>
    %c0_i32_63 = arith.constant 0 : i32
    %c0_i32_64 = arith.constant 0 : i32
    %85 = tpu.memref_slice %arg2[%84, %c0_i32_64] : memref<32x128xf32, #tpu.memory_space<any>> -> memref<1x128xf32, #tpu.memory_space<any>>
    %c4_i32_65 = arith.constant 4 : i32
    %c0_i32_66 = arith.constant 0 : i32
    %86 = tpu.memref_slice %arg9[%c4_i32_65, %c0_i32_66] : memref<24x128xf32, #tpu.memory_space<vmem>> -> memref<1x128xf32, #tpu.memory_space<vmem>>
    %87 = tpu.memref_slice %arg12[%c0_i32_63] : memref<2x!tpu.dma_semaphore, #tpu.memory_space<semaphore_mem>> -> memref<1x!tpu.dma_semaphore, #tpu.memory_space<semaphore_mem>>
    %88 = tpu.memref_squeeze %87 : memref<1x!tpu.dma_semaphore, #tpu.memory_space<semaphore_mem>> -> memref<!tpu.dma_semaphore, #tpu.memory_space<semaphore_mem>>
    tpu.enqueue_dma source(%85 : memref<1x128xf32, #tpu.memory_space<any>>) target(%86 : memref<1x128xf32, #tpu.memory_space<vmem>>) target_semaphore(%88 : memref<!tpu.dma_semaphore, #tpu.memory_space<semaphore_mem>>)
    %c1_67 = arith.constant 1 : index
    %89 = arith.index_cast %82 : i32 to index
    %90 = memref.load %arg1[%c1_67, %89] : memref<3x24xi32, #tpu.memory_space<smem>>
    %c0_i32_68 = arith.constant 0 : i32
    %c0_i32_69 = arith.constant 0 : i32
    %91 = tpu.memref_slice %arg3[%90, %c0_i32_69] : memref<8x128xf32, #tpu.memory_space<any>> -> memref<1x128xf32, #tpu.memory_space<any>>
    %c4_i32_70 = arith.constant 4 : i32
    %c0_i32_71 = arith.constant 0 : i32
    %92 = tpu.memref_slice %arg10[%c4_i32_70, %c0_i32_71] : memref<24x128xf32, #tpu.memory_space<vmem>> -> memref<1x128xf32, #tpu.memory_space<vmem>>
    %93 = tpu.memref_slice %arg12[%c0_i32_68] : memref<2x!tpu.dma_semaphore, #tpu.memory_space<semaphore_mem>> -> memref<1x!tpu.dma_semaphore, #tpu.memory_space<semaphore_mem>>
    %94 = tpu.memref_squeeze %93 : memref<1x!tpu.dma_semaphore, #tpu.memory_space<semaphore_mem>> -> memref<!tpu.dma_semaphore, #tpu.memory_space<semaphore_mem>>
    tpu.enqueue_dma source(%91 : memref<1x128xf32, #tpu.memory_space<any>>) target(%92 : memref<1x128xf32, #tpu.memory_space<vmem>>) target_semaphore(%94 : memref<!tpu.dma_semaphore, #tpu.memory_space<semaphore_mem>>)
    %c2_72 = arith.constant 2 : index
    %95 = arith.index_cast %82 : i32 to index
    %96 = memref.load %arg1[%c2_72, %95] : memref<3x24xi32, #tpu.memory_space<smem>>
    %c0_i32_73 = arith.constant 0 : i32
    %c0_i32_74 = arith.constant 0 : i32
    %97 = tpu.memref_slice %arg2[%96, %c0_i32_74] : memref<32x128xf32, #tpu.memory_space<any>> -> memref<1x128xf32, #tpu.memory_space<any>>
    %c4_i32_75 = arith.constant 4 : i32
    %c0_i32_76 = arith.constant 0 : i32
    %98 = tpu.memref_slice %arg11[%c4_i32_75, %c0_i32_76] : memref<24x128xf32, #tpu.memory_space<vmem>> -> memref<1x128xf32, #tpu.memory_space<vmem>>
    %99 = tpu.memref_slice %arg12[%c0_i32_73] : memref<2x!tpu.dma_semaphore, #tpu.memory_space<semaphore_mem>> -> memref<1x!tpu.dma_semaphore, #tpu.memory_space<semaphore_mem>>
    %100 = tpu.memref_squeeze %99 : memref<1x!tpu.dma_semaphore, #tpu.memory_space<semaphore_mem>> -> memref<!tpu.dma_semaphore, #tpu.memory_space<semaphore_mem>>
    tpu.enqueue_dma source(%97 : memref<1x128xf32, #tpu.memory_space<any>>) target(%98 : memref<1x128xf32, #tpu.memory_space<vmem>>) target_semaphore(%100 : memref<!tpu.dma_semaphore, #tpu.memory_space<semaphore_mem>>)
    %c0_i32_77 = arith.constant 0 : i32
    %101 = arith.addi %0, %c0_i32_77 : i32
    %c5_i32 = arith.constant 5 : i32
    %102 = arith.addi %101, %c5_i32 : i32
    %c0_78 = arith.constant 0 : index
    %103 = arith.index_cast %102 : i32 to index
    %104 = memref.load %arg1[%c0_78, %103] : memref<3x24xi32, #tpu.memory_space<smem>>
    %c0_i32_79 = arith.constant 0 : i32
    %c0_i32_80 = arith.constant 0 : i32
    %105 = tpu.memref_slice %arg2[%104, %c0_i32_80] : memref<32x128xf32, #tpu.memory_space<any>> -> memref<1x128xf32, #tpu.memory_space<any>>
    %c5_i32_81 = arith.constant 5 : i32
    %c0_i32_82 = arith.constant 0 : i32
    %106 = tpu.memref_slice %arg9[%c5_i32_81, %c0_i32_82] : memref<24x128xf32, #tpu.memory_space<vmem>> -> memref<1x128xf32, #tpu.memory_space<vmem>>
    %107 = tpu.memref_slice %arg12[%c0_i32_79] : memref<2x!tpu.dma_semaphore, #tpu.memory_space<semaphore_mem>> -> memref<1x!tpu.dma_semaphore, #tpu.memory_space<semaphore_mem>>
    %108 = tpu.memref_squeeze %107 : memref<1x!tpu.dma_semaphore, #tpu.memory_space<semaphore_mem>> -> memref<!tpu.dma_semaphore, #tpu.memory_space<semaphore_mem>>
    tpu.enqueue_dma source(%105 : memref<1x128xf32, #tpu.memory_space<any>>) target(%106 : memref<1x128xf32, #tpu.memory_space<vmem>>) target_semaphore(%108 : memref<!tpu.dma_semaphore, #tpu.memory_space<semaphore_mem>>)
    %c1_83 = arith.constant 1 : index
    %109 = arith.index_cast %102 : i32 to index
    %110 = memref.load %arg1[%c1_83, %109] : memref<3x24xi32, #tpu.memory_space<smem>>
    %c0_i32_84 = arith.constant 0 : i32
    %c0_i32_85 = arith.constant 0 : i32
    %111 = tpu.memref_slice %arg3[%110, %c0_i32_85] : memref<8x128xf32, #tpu.memory_space<any>> -> memref<1x128xf32, #tpu.memory_space<any>>
    %c5_i32_86 = arith.constant 5 : i32
    %c0_i32_87 = arith.constant 0 : i32
    %112 = tpu.memref_slice %arg10[%c5_i32_86, %c0_i32_87] : memref<24x128xf32, #tpu.memory_space<vmem>> -> memref<1x128xf32, #tpu.memory_space<vmem>>
    %113 = tpu.memref_slice %arg12[%c0_i32_84] : memref<2x!tpu.dma_semaphore, #tpu.memory_space<semaphore_mem>> -> memref<1x!tpu.dma_semaphore, #tpu.memory_space<semaphore_mem>>
    %114 = tpu.memref_squeeze %113 : memref<1x!tpu.dma_semaphore, #tpu.memory_space<semaphore_mem>> -> memref<!tpu.dma_semaphore, #tpu.memory_space<semaphore_mem>>
    tpu.enqueue_dma source(%111 : memref<1x128xf32, #tpu.memory_space<any>>) target(%112 : memref<1x128xf32, #tpu.memory_space<vmem>>) target_semaphore(%114 : memref<!tpu.dma_semaphore, #tpu.memory_space<semaphore_mem>>)
    %c2_88 = arith.constant 2 : index
    %115 = arith.index_cast %102 : i32 to index
    %116 = memref.load %arg1[%c2_88, %115] : memref<3x24xi32, #tpu.memory_space<smem>>
    %c0_i32_89 = arith.constant 0 : i32
    %c0_i32_90 = arith.constant 0 : i32
    %117 = tpu.memref_slice %arg2[%116, %c0_i32_90] : memref<32x128xf32, #tpu.memory_space<any>> -> memref<1x128xf32, #tpu.memory_space<any>>
    %c5_i32_91 = arith.constant 5 : i32
    %c0_i32_92 = arith.constant 0 : i32
    %118 = tpu.memref_slice %arg11[%c5_i32_91, %c0_i32_92] : memref<24x128xf32, #tpu.memory_space<vmem>> -> memref<1x128xf32, #tpu.memory_space<vmem>>
    %119 = tpu.memref_slice %arg12[%c0_i32_89] : memref<2x!tpu.dma_semaphore, #tpu.memory_space<semaphore_mem>> -> memref<1x!tpu.dma_semaphore, #tpu.memory_space<semaphore_mem>>
    %120 = tpu.memref_squeeze %119 : memref<1x!tpu.dma_semaphore, #tpu.memory_space<semaphore_mem>> -> memref<!tpu.dma_semaphore, #tpu.memory_space<semaphore_mem>>
    tpu.enqueue_dma source(%117 : memref<1x128xf32, #tpu.memory_space<any>>) target(%118 : memref<1x128xf32, #tpu.memory_space<vmem>>) target_semaphore(%120 : memref<!tpu.dma_semaphore, #tpu.memory_space<semaphore_mem>>)
    %c0_i32_93 = arith.constant 0 : i32
    %121 = arith.addi %0, %c0_i32_93 : i32
    %c6_i32 = arith.constant 6 : i32
    %122 = arith.addi %121, %c6_i32 : i32
    %c0_94 = arith.constant 0 : index
    %123 = arith.index_cast %122 : i32 to index
    %124 = memref.load %arg1[%c0_94, %123] : memref<3x24xi32, #tpu.memory_space<smem>>
    %c0_i32_95 = arith.constant 0 : i32
    %c0_i32_96 = arith.constant 0 : i32
    %125 = tpu.memref_slice %arg2[%124, %c0_i32_96] : memref<32x128xf32, #tpu.memory_space<any>> -> memref<1x128xf32, #tpu.memory_space<any>>
    %c6_i32_97 = arith.constant 6 : i32
    %c0_i32_98 = arith.constant 0 : i32
    %126 = tpu.memref_slice %arg9[%c6_i32_97, %c0_i32_98] : memref<24x128xf32, #tpu.memory_space<vmem>> -> memref<1x128xf32, #tpu.memory_space<vmem>>
    %127 = tpu.memref_slice %arg12[%c0_i32_95] : memref<2x!tpu.dma_semaphore, #tpu.memory_space<semaphore_mem>> -> memref<1x!tpu.dma_semaphore, #tpu.memory_space<semaphore_mem>>
    %128 = tpu.memref_squeeze %127 : memref<1x!tpu.dma_semaphore, #tpu.memory_space<semaphore_mem>> -> memref<!tpu.dma_semaphore, #tpu.memory_space<semaphore_mem>>
    tpu.enqueue_dma source(%125 : memref<1x128xf32, #tpu.memory_space<any>>) target(%126 : memref<1x128xf32, #tpu.memory_space<vmem>>) target_semaphore(%128 : memref<!tpu.dma_semaphore, #tpu.memory_space<semaphore_mem>>)
    %c1_99 = arith.constant 1 : index
    %129 = arith.index_cast %122 : i32 to index
    %130 = memref.load %arg1[%c1_99, %129] : memref<3x24xi32, #tpu.memory_space<smem>>
    %c0_i32_100 = arith.constant 0 : i32
    %c0_i32_101 = arith.constant 0 : i32
    %131 = tpu.memref_slice %arg3[%130, %c0_i32_101] : memref<8x128xf32, #tpu.memory_space<any>> -> memref<1x128xf32, #tpu.memory_space<any>>
    %c6_i32_102 = arith.constant 6 : i32
    %c0_i32_103 = arith.constant 0 : i32
    %132 = tpu.memref_slice %arg10[%c6_i32_102, %c0_i32_103] : memref<24x128xf32, #tpu.memory_space<vmem>> -> memref<1x128xf32, #tpu.memory_space<vmem>>
    %133 = tpu.memref_slice %arg12[%c0_i32_100] : memref<2x!tpu.dma_semaphore, #tpu.memory_space<semaphore_mem>> -> memref<1x!tpu.dma_semaphore, #tpu.memory_space<semaphore_mem>>
    %134 = tpu.memref_squeeze %133 : memref<1x!tpu.dma_semaphore, #tpu.memory_space<semaphore_mem>> -> memref<!tpu.dma_semaphore, #tpu.memory_space<semaphore_mem>>
    tpu.enqueue_dma source(%131 : memref<1x128xf32, #tpu.memory_space<any>>) target(%132 : memref<1x128xf32, #tpu.memory_space<vmem>>) target_semaphore(%134 : memref<!tpu.dma_semaphore, #tpu.memory_space<semaphore_mem>>)
    %c2_104 = arith.constant 2 : index
    %135 = arith.index_cast %122 : i32 to index
    %136 = memref.load %arg1[%c2_104, %135] : memref<3x24xi32, #tpu.memory_space<smem>>
    %c0_i32_105 = arith.constant 0 : i32
    %c0_i32_106 = arith.constant 0 : i32
    %137 = tpu.memref_slice %arg2[%136, %c0_i32_106] : memref<32x128xf32, #tpu.memory_space<any>> -> memref<1x128xf32, #tpu.memory_space<any>>
    %c6_i32_107 = arith.constant 6 : i32
    %c0_i32_108 = arith.constant 0 : i32
    %138 = tpu.memref_slice %arg11[%c6_i32_107, %c0_i32_108] : memref<24x128xf32, #tpu.memory_space<vmem>> -> memref<1x128xf32, #tpu.memory_space<vmem>>
    %139 = tpu.memref_slice %arg12[%c0_i32_105] : memref<2x!tpu.dma_semaphore, #tpu.memory_space<semaphore_mem>> -> memref<1x!tpu.dma_semaphore, #tpu.memory_space<semaphore_mem>>
    %140 = tpu.memref_squeeze %139 : memref<1x!tpu.dma_semaphore, #tpu.memory_space<semaphore_mem>> -> memref<!tpu.dma_semaphore, #tpu.memory_space<semaphore_mem>>
    tpu.enqueue_dma source(%137 : memref<1x128xf32, #tpu.memory_space<any>>) target(%138 : memref<1x128xf32, #tpu.memory_space<vmem>>) target_semaphore(%140 : memref<!tpu.dma_semaphore, #tpu.memory_space<semaphore_mem>>)
    %c0_i32_109 = arith.constant 0 : i32
    %141 = arith.addi %0, %c0_i32_109 : i32
    %c7_i32 = arith.constant 7 : i32
    %142 = arith.addi %141, %c7_i32 : i32
    %c0_110 = arith.constant 0 : index
    %143 = arith.index_cast %142 : i32 to index
    %144 = memref.load %arg1[%c0_110, %143] : memref<3x24xi32, #tpu.memory_space<smem>>
    %c0_i32_111 = arith.constant 0 : i32
    %c0_i32_112 = arith.constant 0 : i32
    %145 = tpu.memref_slice %arg2[%144, %c0_i32_112] : memref<32x128xf32, #tpu.memory_space<any>> -> memref<1x128xf32, #tpu.memory_space<any>>
    %c7_i32_113 = arith.constant 7 : i32
    %c0_i32_114 = arith.constant 0 : i32
    %146 = tpu.memref_slice %arg9[%c7_i32_113, %c0_i32_114] : memref<24x128xf32, #tpu.memory_space<vmem>> -> memref<1x128xf32, #tpu.memory_space<vmem>>
    %147 = tpu.memref_slice %arg12[%c0_i32_111] : memref<2x!tpu.dma_semaphore, #tpu.memory_space<semaphore_mem>> -> memref<1x!tpu.dma_semaphore, #tpu.memory_space<semaphore_mem>>
    %148 = tpu.memref_squeeze %147 : memref<1x!tpu.dma_semaphore, #tpu.memory_space<semaphore_mem>> -> memref<!tpu.dma_semaphore, #tpu.memory_space<semaphore_mem>>
    tpu.enqueue_dma source(%145 : memref<1x128xf32, #tpu.memory_space<any>>) target(%146 : memref<1x128xf32, #tpu.memory_space<vmem>>) target_semaphore(%148 : memref<!tpu.dma_semaphore, #tpu.memory_space<semaphore_mem>>)
    %c1_115 = arith.constant 1 : index
    %149 = arith.index_cast %142 : i32 to index
    %150 = memref.load %arg1[%c1_115, %149] : memref<3x24xi32, #tpu.memory_space<smem>>
    %c0_i32_116 = arith.constant 0 : i32
    %c0_i32_117 = arith.constant 0 : i32
    %151 = tpu.memref_slice %arg3[%150, %c0_i32_117] : memref<8x128xf32, #tpu.memory_space<any>> -> memref<1x128xf32, #tpu.memory_space<any>>
    %c7_i32_118 = arith.constant 7 : i32
    %c0_i32_119 = arith.constant 0 : i32
    %152 = tpu.memref_slice %arg10[%c7_i32_118, %c0_i32_119] : memref<24x128xf32, #tpu.memory_space<vmem>> -> memref<1x128xf32, #tpu.memory_space<vmem>>
    %153 = tpu.memref_slice %arg12[%c0_i32_116] : memref<2x!tpu.dma_semaphore, #tpu.memory_space<semaphore_mem>> -> memref<1x!tpu.dma_semaphore, #tpu.memory_space<semaphore_mem>>
    %154 = tpu.memref_squeeze %153 : memref<1x!tpu.dma_semaphore, #tpu.memory_space<semaphore_mem>> -> memref<!tpu.dma_semaphore, #tpu.memory_space<semaphore_mem>>
    tpu.enqueue_dma source(%151 : memref<1x128xf32, #tpu.memory_space<any>>) target(%152 : memref<1x128xf32, #tpu.memory_space<vmem>>) target_semaphore(%154 : memref<!tpu.dma_semaphore, #tpu.memory_space<semaphore_mem>>)
    %c2_120 = arith.constant 2 : index
    %155 = arith.index_cast %142 : i32 to index
    %156 = memref.load %arg1[%c2_120, %155] : memref<3x24xi32, #tpu.memory_space<smem>>
    %c0_i32_121 = arith.constant 0 : i32
    %c0_i32_122 = arith.constant 0 : i32
    %157 = tpu.memref_slice %arg2[%156, %c0_i32_122] : memref<32x128xf32, #tpu.memory_space<any>> -> memref<1x128xf32, #tpu.memory_space<any>>
    %c7_i32_123 = arith.constant 7 : i32
    %c0_i32_124 = arith.constant 0 : i32
    %158 = tpu.memref_slice %arg11[%c7_i32_123, %c0_i32_124] : memref<24x128xf32, #tpu.memory_space<vmem>> -> memref<1x128xf32, #tpu.memory_space<vmem>>
    %159 = tpu.memref_slice %arg12[%c0_i32_121] : memref<2x!tpu.dma_semaphore, #tpu.memory_space<semaphore_mem>> -> memref<1x!tpu.dma_semaphore, #tpu.memory_space<semaphore_mem>>
    %160 = tpu.memref_squeeze %159 : memref<1x!tpu.dma_semaphore, #tpu.memory_space<semaphore_mem>> -> memref<!tpu.dma_semaphore, #tpu.memory_space<semaphore_mem>>
    tpu.enqueue_dma source(%157 : memref<1x128xf32, #tpu.memory_space<any>>) target(%158 : memref<1x128xf32, #tpu.memory_space<vmem>>) target_semaphore(%160 : memref<!tpu.dma_semaphore, #tpu.memory_space<semaphore_mem>>)
    %c0_i32_125 = arith.constant 0 : i32
    %c3_i32_126 = arith.constant 3 : i32
    %161 = arith.addi %c0_i32_125, %c3_i32_126 : i32
    %c1_i32_127 = arith.constant 1 : i32
    scf.for %arg13 = %c0_i32_125 to %161 step %c1_i32_127  : i32 {
      %c1_i32_129 = arith.constant 1 : i32
      %162 = arith.muli %arg13, %c1_i32_129 : i32
      %c0_i32_130 = arith.constant 0 : i32
      %163 = arith.addi %c0_i32_130, %162 : i32
      %c1_i32_131 = arith.constant 1 : i32
      %164 = arith.addi %163, %c1_i32_131 : i32
      %c3_i32_132 = arith.constant 3 : i32
      %165 = arith.cmpi slt, %164, %c3_i32_132 : i32
      %166 = arith.extui %165 : i1 to i32
      %c0_i32_133 = arith.constant 0 : i32
      %167 = arith.cmpi ne, %166, %c0_i32_133 : i32
      scf.if %167 {
        %c1_i32_317 = arith.constant 1 : i32
        %466 = arith.addi %163, %c1_i32_317 : i32
        %c2_i32_318 = arith.constant 2 : i32
        %c0_i32_319 = arith.constant 0 : i32
        %467 = arith.cmpi eq, %c2_i32_318, %c0_i32_319 : i32
        %c1_i32_320 = arith.constant 1 : i32
        %468 = arith.select %467, %c1_i32_320, %c2_i32_318 : i32
        %469 = arith.remsi %466, %468 : i32
        %c0_i32_321 = arith.constant 0 : i32
        %470 = arith.cmpi ne, %469, %c0_i32_321 : i32
        %c0_i32_322 = arith.constant 0 : i32
        %471 = arith.cmpi slt, %469, %c0_i32_322 : i32
        %c0_i32_323 = arith.constant 0 : i32
        %472 = arith.cmpi slt, %468, %c0_i32_323 : i32
        %473 = arith.xori %471, %472 : i1
        %474 = arith.andi %473, %470 : i1
        %475 = arith.addi %469, %468 : i32
        %476 = arith.select %474, %475, %469 : i32
        %c8_i32_324 = arith.constant 8 : i32
        %477 = arith.muli %466, %c8_i32_324 : i32
        %478 = arith.addi %0, %477 : i32
        %c0_i32_325 = arith.constant 0 : i32
        %479 = arith.addi %478, %c0_i32_325 : i32
        %c8_i32_326 = arith.constant 8 : i32
        %480 = arith.muli %466, %c8_i32_326 : i32
        %c0_i32_327 = arith.constant 0 : i32
        %481 = arith.addi %480, %c0_i32_327 : i32
        %c0_328 = arith.constant 0 : index
        %482 = arith.index_cast %479 : i32 to index
        %483 = memref.load %arg1[%c0_328, %482] : memref<3x24xi32, #tpu.memory_space<smem>>
        %c0_i32_329 = arith.constant 0 : i32
        %484 = tpu.memref_slice %arg2[%483, %c0_i32_329] : memref<32x128xf32, #tpu.memory_space<any>> -> memref<1x128xf32, #tpu.memory_space<any>>
        %c0_i32_330 = arith.constant 0 : i32
        %485 = tpu.memref_slice %arg9[%481, %c0_i32_330] : memref<24x128xf32, #tpu.memory_space<vmem>> -> memref<1x128xf32, #tpu.memory_space<vmem>>
        %486 = tpu.memref_slice %arg12[%476] : memref<2x!tpu.dma_semaphore, #tpu.memory_space<semaphore_mem>> -> memref<1x!tpu.dma_semaphore, #tpu.memory_space<semaphore_mem>>
        %487 = tpu.memref_squeeze %486 : memref<1x!tpu.dma_semaphore, #tpu.memory_space<semaphore_mem>> -> memref<!tpu.dma_semaphore, #tpu.memory_space<semaphore_mem>>
        tpu.enqueue_dma source(%484 : memref<1x128xf32, #tpu.memory_space<any>>) target(%485 : memref<1x128xf32, #tpu.memory_space<vmem>>) target_semaphore(%487 : memref<!tpu.dma_semaphore, #tpu.memory_space<semaphore_mem>>)
        %c1_331 = arith.constant 1 : index
        %488 = arith.index_cast %479 : i32 to index
        %489 = memref.load %arg1[%c1_331, %488] : memref<3x24xi32, #tpu.memory_space<smem>>
        %c0_i32_332 = arith.constant 0 : i32
        %490 = tpu.memref_slice %arg3[%489, %c0_i32_332] : memref<8x128xf32, #tpu.memory_space<any>> -> memref<1x128xf32, #tpu.memory_space<any>>
        %c0_i32_333 = arith.constant 0 : i32
        %491 = tpu.memref_slice %arg10[%481, %c0_i32_333] : memref<24x128xf32, #tpu.memory_space<vmem>> -> memref<1x128xf32, #tpu.memory_space<vmem>>
        %492 = tpu.memref_slice %arg12[%476] : memref<2x!tpu.dma_semaphore, #tpu.memory_space<semaphore_mem>> -> memref<1x!tpu.dma_semaphore, #tpu.memory_space<semaphore_mem>>
        %493 = tpu.memref_squeeze %492 : memref<1x!tpu.dma_semaphore, #tpu.memory_space<semaphore_mem>> -> memref<!tpu.dma_semaphore, #tpu.memory_space<semaphore_mem>>
        tpu.enqueue_dma source(%490 : memref<1x128xf32, #tpu.memory_space<any>>) target(%491 : memref<1x128xf32, #tpu.memory_space<vmem>>) target_semaphore(%493 : memref<!tpu.dma_semaphore, #tpu.memory_space<semaphore_mem>>)
        %c2_334 = arith.constant 2 : index
        %494 = arith.index_cast %479 : i32 to index
        %495 = memref.load %arg1[%c2_334, %494] : memref<3x24xi32, #tpu.memory_space<smem>>
        %c0_i32_335 = arith.constant 0 : i32
        %496 = tpu.memref_slice %arg2[%495, %c0_i32_335] : memref<32x128xf32, #tpu.memory_space<any>> -> memref<1x128xf32, #tpu.memory_space<any>>
        %c0_i32_336 = arith.constant 0 : i32
        %497 = tpu.memref_slice %arg11[%481, %c0_i32_336] : memref<24x128xf32, #tpu.memory_space<vmem>> -> memref<1x128xf32, #tpu.memory_space<vmem>>
        %498 = tpu.memref_slice %arg12[%476] : memref<2x!tpu.dma_semaphore, #tpu.memory_space<semaphore_mem>> -> memref<1x!tpu.dma_semaphore, #tpu.memory_space<semaphore_mem>>
        %499 = tpu.memref_squeeze %498 : memref<1x!tpu.dma_semaphore, #tpu.memory_space<semaphore_mem>> -> memref<!tpu.dma_semaphore, #tpu.memory_space<semaphore_mem>>
        tpu.enqueue_dma source(%496 : memref<1x128xf32, #tpu.memory_space<any>>) target(%497 : memref<1x128xf32, #tpu.memory_space<vmem>>) target_semaphore(%499 : memref<!tpu.dma_semaphore, #tpu.memory_space<semaphore_mem>>)
        %c8_i32_337 = arith.constant 8 : i32
        %500 = arith.muli %466, %c8_i32_337 : i32
        %501 = arith.addi %0, %500 : i32
        %c1_i32_338 = arith.constant 1 : i32
        %502 = arith.addi %501, %c1_i32_338 : i32
        %c8_i32_339 = arith.constant 8 : i32
        %503 = arith.muli %466, %c8_i32_339 : i32
        %c1_i32_340 = arith.constant 1 : i32
        %504 = arith.addi %503, %c1_i32_340 : i32
        %c0_341 = arith.constant 0 : index
        %505 = arith.index_cast %502 : i32 to index
        %506 = memref.load %arg1[%c0_341, %505] : memref<3x24xi32, #tpu.memory_space<smem>>
        %c0_i32_342 = arith.constant 0 : i32
        %507 = tpu.memref_slice %arg2[%506, %c0_i32_342] : memref<32x128xf32, #tpu.memory_space<any>> -> memref<1x128xf32, #tpu.memory_space<any>>
        %c0_i32_343 = arith.constant 0 : i32
        %508 = tpu.memref_slice %arg9[%504, %c0_i32_343] : memref<24x128xf32, #tpu.memory_space<vmem>> -> memref<1x128xf32, #tpu.memory_space<vmem>>
        %509 = tpu.memref_slice %arg12[%476] : memref<2x!tpu.dma_semaphore, #tpu.memory_space<semaphore_mem>> -> memref<1x!tpu.dma_semaphore, #tpu.memory_space<semaphore_mem>>
        %510 = tpu.memref_squeeze %509 : memref<1x!tpu.dma_semaphore, #tpu.memory_space<semaphore_mem>> -> memref<!tpu.dma_semaphore, #tpu.memory_space<semaphore_mem>>
        tpu.enqueue_dma source(%507 : memref<1x128xf32, #tpu.memory_space<any>>) target(%508 : memref<1x128xf32, #tpu.memory_space<vmem>>) target_semaphore(%510 : memref<!tpu.dma_semaphore, #tpu.memory_space<semaphore_mem>>)
        %c1_344 = arith.constant 1 : index
        %511 = arith.index_cast %502 : i32 to index
        %512 = memref.load %arg1[%c1_344, %511] : memref<3x24xi32, #tpu.memory_space<smem>>
        %c0_i32_345 = arith.constant 0 : i32
        %513 = tpu.memref_slice %arg3[%512, %c0_i32_345] : memref<8x128xf32, #tpu.memory_space<any>> -> memref<1x128xf32, #tpu.memory_space<any>>
        %c0_i32_346 = arith.constant 0 : i32
        %514 = tpu.memref_slice %arg10[%504, %c0_i32_346] : memref<24x128xf32, #tpu.memory_space<vmem>> -> memref<1x128xf32, #tpu.memory_space<vmem>>
        %515 = tpu.memref_slice %arg12[%476] : memref<2x!tpu.dma_semaphore, #tpu.memory_space<semaphore_mem>> -> memref<1x!tpu.dma_semaphore, #tpu.memory_space<semaphore_mem>>
        %516 = tpu.memref_squeeze %515 : memref<1x!tpu.dma_semaphore, #tpu.memory_space<semaphore_mem>> -> memref<!tpu.dma_semaphore, #tpu.memory_space<semaphore_mem>>
        tpu.enqueue_dma source(%513 : memref<1x128xf32, #tpu.memory_space<any>>) target(%514 : memref<1x128xf32, #tpu.memory_space<vmem>>) target_semaphore(%516 : memref<!tpu.dma_semaphore, #tpu.memory_space<semaphore_mem>>)
        %c2_347 = arith.constant 2 : index
        %517 = arith.index_cast %502 : i32 to index
        %518 = memref.load %arg1[%c2_347, %517] : memref<3x24xi32, #tpu.memory_space<smem>>
        %c0_i32_348 = arith.constant 0 : i32
        %519 = tpu.memref_slice %arg2[%518, %c0_i32_348] : memref<32x128xf32, #tpu.memory_space<any>> -> memref<1x128xf32, #tpu.memory_space<any>>
        %c0_i32_349 = arith.constant 0 : i32
        %520 = tpu.memref_slice %arg11[%504, %c0_i32_349] : memref<24x128xf32, #tpu.memory_space<vmem>> -> memref<1x128xf32, #tpu.memory_space<vmem>>
        %521 = tpu.memref_slice %arg12[%476] : memref<2x!tpu.dma_semaphore, #tpu.memory_space<semaphore_mem>> -> memref<1x!tpu.dma_semaphore, #tpu.memory_space<semaphore_mem>>
        %522 = tpu.memref_squeeze %521 : memref<1x!tpu.dma_semaphore, #tpu.memory_space<semaphore_mem>> -> memref<!tpu.dma_semaphore, #tpu.memory_space<semaphore_mem>>
        tpu.enqueue_dma source(%519 : memref<1x128xf32, #tpu.memory_space<any>>) target(%520 : memref<1x128xf32, #tpu.memory_space<vmem>>) target_semaphore(%522 : memref<!tpu.dma_semaphore, #tpu.memory_space<semaphore_mem>>)
        %c8_i32_350 = arith.constant 8 : i32
        %523 = arith.muli %466, %c8_i32_350 : i32
        %524 = arith.addi %0, %523 : i32
        %c2_i32_351 = arith.constant 2 : i32
        %525 = arith.addi %524, %c2_i32_351 : i32
        %c8_i32_352 = arith.constant 8 : i32
        %526 = arith.muli %466, %c8_i32_352 : i32
        %c2_i32_353 = arith.constant 2 : i32
        %527 = arith.addi %526, %c2_i32_353 : i32
        %c0_354 = arith.constant 0 : index
        %528 = arith.index_cast %525 : i32 to index
        %529 = memref.load %arg1[%c0_354, %528] : memref<3x24xi32, #tpu.memory_space<smem>>
        %c0_i32_355 = arith.constant 0 : i32
        %530 = tpu.memref_slice %arg2[%529, %c0_i32_355] : memref<32x128xf32, #tpu.memory_space<any>> -> memref<1x128xf32, #tpu.memory_space<any>>
        %c0_i32_356 = arith.constant 0 : i32
        %531 = tpu.memref_slice %arg9[%527, %c0_i32_356] : memref<24x128xf32, #tpu.memory_space<vmem>> -> memref<1x128xf32, #tpu.memory_space<vmem>>
        %532 = tpu.memref_slice %arg12[%476] : memref<2x!tpu.dma_semaphore, #tpu.memory_space<semaphore_mem>> -> memref<1x!tpu.dma_semaphore, #tpu.memory_space<semaphore_mem>>
        %533 = tpu.memref_squeeze %532 : memref<1x!tpu.dma_semaphore, #tpu.memory_space<semaphore_mem>> -> memref<!tpu.dma_semaphore, #tpu.memory_space<semaphore_mem>>
        tpu.enqueue_dma source(%530 : memref<1x128xf32, #tpu.memory_space<any>>) target(%531 : memref<1x128xf32, #tpu.memory_space<vmem>>) target_semaphore(%533 : memref<!tpu.dma_semaphore, #tpu.memory_space<semaphore_mem>>)
        %c1_357 = arith.constant 1 : index
        %534 = arith.index_cast %525 : i32 to index
        %535 = memref.load %arg1[%c1_357, %534] : memref<3x24xi32, #tpu.memory_space<smem>>
        %c0_i32_358 = arith.constant 0 : i32
        %536 = tpu.memref_slice %arg3[%535, %c0_i32_358] : memref<8x128xf32, #tpu.memory_space<any>> -> memref<1x128xf32, #tpu.memory_space<any>>
        %c0_i32_359 = arith.constant 0 : i32
        %537 = tpu.memref_slice %arg10[%527, %c0_i32_359] : memref<24x128xf32, #tpu.memory_space<vmem>> -> memref<1x128xf32, #tpu.memory_space<vmem>>
        %538 = tpu.memref_slice %arg12[%476] : memref<2x!tpu.dma_semaphore, #tpu.memory_space<semaphore_mem>> -> memref<1x!tpu.dma_semaphore, #tpu.memory_space<semaphore_mem>>
        %539 = tpu.memref_squeeze %538 : memref<1x!tpu.dma_semaphore, #tpu.memory_space<semaphore_mem>> -> memref<!tpu.dma_semaphore, #tpu.memory_space<semaphore_mem>>
        tpu.enqueue_dma source(%536 : memref<1x128xf32, #tpu.memory_space<any>>) target(%537 : memref<1x128xf32, #tpu.memory_space<vmem>>) target_semaphore(%539 : memref<!tpu.dma_semaphore, #tpu.memory_space<semaphore_mem>>)
        %c2_360 = arith.constant 2 : index
        %540 = arith.index_cast %525 : i32 to index
        %541 = memref.load %arg1[%c2_360, %540] : memref<3x24xi32, #tpu.memory_space<smem>>
        %c0_i32_361 = arith.constant 0 : i32
        %542 = tpu.memref_slice %arg2[%541, %c0_i32_361] : memref<32x128xf32, #tpu.memory_space<any>> -> memref<1x128xf32, #tpu.memory_space<any>>
        %c0_i32_362 = arith.constant 0 : i32
        %543 = tpu.memref_slice %arg11[%527, %c0_i32_362] : memref<24x128xf32, #tpu.memory_space<vmem>> -> memref<1x128xf32, #tpu.memory_space<vmem>>
        %544 = tpu.memref_slice %arg12[%476] : memref<2x!tpu.dma_semaphore, #tpu.memory_space<semaphore_mem>> -> memref<1x!tpu.dma_semaphore, #tpu.memory_space<semaphore_mem>>
        %545 = tpu.memref_squeeze %544 : memref<1x!tpu.dma_semaphore, #tpu.memory_space<semaphore_mem>> -> memref<!tpu.dma_semaphore, #tpu.memory_space<semaphore_mem>>
        tpu.enqueue_dma source(%542 : memref<1x128xf32, #tpu.memory_space<any>>) target(%543 : memref<1x128xf32, #tpu.memory_space<vmem>>) target_semaphore(%545 : memref<!tpu.dma_semaphore, #tpu.memory_space<semaphore_mem>>)
        %c8_i32_363 = arith.constant 8 : i32
        %546 = arith.muli %466, %c8_i32_363 : i32
        %547 = arith.addi %0, %546 : i32
        %c3_i32_364 = arith.constant 3 : i32
        %548 = arith.addi %547, %c3_i32_364 : i32
        %c8_i32_365 = arith.constant 8 : i32
        %549 = arith.muli %466, %c8_i32_365 : i32
        %c3_i32_366 = arith.constant 3 : i32
        %550 = arith.addi %549, %c3_i32_366 : i32
        %c0_367 = arith.constant 0 : index
        %551 = arith.index_cast %548 : i32 to index
        %552 = memref.load %arg1[%c0_367, %551] : memref<3x24xi32, #tpu.memory_space<smem>>
        %c0_i32_368 = arith.constant 0 : i32
        %553 = tpu.memref_slice %arg2[%552, %c0_i32_368] : memref<32x128xf32, #tpu.memory_space<any>> -> memref<1x128xf32, #tpu.memory_space<any>>
        %c0_i32_369 = arith.constant 0 : i32
        %554 = tpu.memref_slice %arg9[%550, %c0_i32_369] : memref<24x128xf32, #tpu.memory_space<vmem>> -> memref<1x128xf32, #tpu.memory_space<vmem>>
        %555 = tpu.memref_slice %arg12[%476] : memref<2x!tpu.dma_semaphore, #tpu.memory_space<semaphore_mem>> -> memref<1x!tpu.dma_semaphore, #tpu.memory_space<semaphore_mem>>
        %556 = tpu.memref_squeeze %555 : memref<1x!tpu.dma_semaphore, #tpu.memory_space<semaphore_mem>> -> memref<!tpu.dma_semaphore, #tpu.memory_space<semaphore_mem>>
        tpu.enqueue_dma source(%553 : memref<1x128xf32, #tpu.memory_space<any>>) target(%554 : memref<1x128xf32, #tpu.memory_space<vmem>>) target_semaphore(%556 : memref<!tpu.dma_semaphore, #tpu.memory_space<semaphore_mem>>)
        %c1_370 = arith.constant 1 : index
        %557 = arith.index_cast %548 : i32 to index
        %558 = memref.load %arg1[%c1_370, %557] : memref<3x24xi32, #tpu.memory_space<smem>>
        %c0_i32_371 = arith.constant 0 : i32
        %559 = tpu.memref_slice %arg3[%558, %c0_i32_371] : memref<8x128xf32, #tpu.memory_space<any>> -> memref<1x128xf32, #tpu.memory_space<any>>
        %c0_i32_372 = arith.constant 0 : i32
        %560 = tpu.memref_slice %arg10[%550, %c0_i32_372] : memref<24x128xf32, #tpu.memory_space<vmem>> -> memref<1x128xf32, #tpu.memory_space<vmem>>
        %561 = tpu.memref_slice %arg12[%476] : memref<2x!tpu.dma_semaphore, #tpu.memory_space<semaphore_mem>> -> memref<1x!tpu.dma_semaphore, #tpu.memory_space<semaphore_mem>>
        %562 = tpu.memref_squeeze %561 : memref<1x!tpu.dma_semaphore, #tpu.memory_space<semaphore_mem>> -> memref<!tpu.dma_semaphore, #tpu.memory_space<semaphore_mem>>
        tpu.enqueue_dma source(%559 : memref<1x128xf32, #tpu.memory_space<any>>) target(%560 : memref<1x128xf32, #tpu.memory_space<vmem>>) target_semaphore(%562 : memref<!tpu.dma_semaphore, #tpu.memory_space<semaphore_mem>>)
        %c2_373 = arith.constant 2 : index
        %563 = arith.index_cast %548 : i32 to index
        %564 = memref.load %arg1[%c2_373, %563] : memref<3x24xi32, #tpu.memory_space<smem>>
        %c0_i32_374 = arith.constant 0 : i32
        %565 = tpu.memref_slice %arg2[%564, %c0_i32_374] : memref<32x128xf32, #tpu.memory_space<any>> -> memref<1x128xf32, #tpu.memory_space<any>>
        %c0_i32_375 = arith.constant 0 : i32
        %566 = tpu.memref_slice %arg11[%550, %c0_i32_375] : memref<24x128xf32, #tpu.memory_space<vmem>> -> memref<1x128xf32, #tpu.memory_space<vmem>>
        %567 = tpu.memref_slice %arg12[%476] : memref<2x!tpu.dma_semaphore, #tpu.memory_space<semaphore_mem>> -> memref<1x!tpu.dma_semaphore, #tpu.memory_space<semaphore_mem>>
        %568 = tpu.memref_squeeze %567 : memref<1x!tpu.dma_semaphore, #tpu.memory_space<semaphore_mem>> -> memref<!tpu.dma_semaphore, #tpu.memory_space<semaphore_mem>>
        tpu.enqueue_dma source(%565 : memref<1x128xf32, #tpu.memory_space<any>>) target(%566 : memref<1x128xf32, #tpu.memory_space<vmem>>) target_semaphore(%568 : memref<!tpu.dma_semaphore, #tpu.memory_space<semaphore_mem>>)
        %c8_i32_376 = arith.constant 8 : i32
        %569 = arith.muli %466, %c8_i32_376 : i32
        %570 = arith.addi %0, %569 : i32
        %c4_i32_377 = arith.constant 4 : i32
        %571 = arith.addi %570, %c4_i32_377 : i32
        %c8_i32_378 = arith.constant 8 : i32
        %572 = arith.muli %466, %c8_i32_378 : i32
        %c4_i32_379 = arith.constant 4 : i32
        %573 = arith.addi %572, %c4_i32_379 : i32
        %c0_380 = arith.constant 0 : index
        %574 = arith.index_cast %571 : i32 to index
        %575 = memref.load %arg1[%c0_380, %574] : memref<3x24xi32, #tpu.memory_space<smem>>
        %c0_i32_381 = arith.constant 0 : i32
        %576 = tpu.memref_slice %arg2[%575, %c0_i32_381] : memref<32x128xf32, #tpu.memory_space<any>> -> memref<1x128xf32, #tpu.memory_space<any>>
        %c0_i32_382 = arith.constant 0 : i32
        %577 = tpu.memref_slice %arg9[%573, %c0_i32_382] : memref<24x128xf32, #tpu.memory_space<vmem>> -> memref<1x128xf32, #tpu.memory_space<vmem>>
        %578 = tpu.memref_slice %arg12[%476] : memref<2x!tpu.dma_semaphore, #tpu.memory_space<semaphore_mem>> -> memref<1x!tpu.dma_semaphore, #tpu.memory_space<semaphore_mem>>
        %579 = tpu.memref_squeeze %578 : memref<1x!tpu.dma_semaphore, #tpu.memory_space<semaphore_mem>> -> memref<!tpu.dma_semaphore, #tpu.memory_space<semaphore_mem>>
        tpu.enqueue_dma source(%576 : memref<1x128xf32, #tpu.memory_space<any>>) target(%577 : memref<1x128xf32, #tpu.memory_space<vmem>>) target_semaphore(%579 : memref<!tpu.dma_semaphore, #tpu.memory_space<semaphore_mem>>)
        %c1_383 = arith.constant 1 : index
        %580 = arith.index_cast %571 : i32 to index
        %581 = memref.load %arg1[%c1_383, %580] : memref<3x24xi32, #tpu.memory_space<smem>>
        %c0_i32_384 = arith.constant 0 : i32
        %582 = tpu.memref_slice %arg3[%581, %c0_i32_384] : memref<8x128xf32, #tpu.memory_space<any>> -> memref<1x128xf32, #tpu.memory_space<any>>
        %c0_i32_385 = arith.constant 0 : i32
        %583 = tpu.memref_slice %arg10[%573, %c0_i32_385] : memref<24x128xf32, #tpu.memory_space<vmem>> -> memref<1x128xf32, #tpu.memory_space<vmem>>
        %584 = tpu.memref_slice %arg12[%476] : memref<2x!tpu.dma_semaphore, #tpu.memory_space<semaphore_mem>> -> memref<1x!tpu.dma_semaphore, #tpu.memory_space<semaphore_mem>>
        %585 = tpu.memref_squeeze %584 : memref<1x!tpu.dma_semaphore, #tpu.memory_space<semaphore_mem>> -> memref<!tpu.dma_semaphore, #tpu.memory_space<semaphore_mem>>
        tpu.enqueue_dma source(%582 : memref<1x128xf32, #tpu.memory_space<any>>) target(%583 : memref<1x128xf32, #tpu.memory_space<vmem>>) target_semaphore(%585 : memref<!tpu.dma_semaphore, #tpu.memory_space<semaphore_mem>>)
        %c2_386 = arith.constant 2 : index
        %586 = arith.index_cast %571 : i32 to index
        %587 = memref.load %arg1[%c2_386, %586] : memref<3x24xi32, #tpu.memory_space<smem>>
        %c0_i32_387 = arith.constant 0 : i32
        %588 = tpu.memref_slice %arg2[%587, %c0_i32_387] : memref<32x128xf32, #tpu.memory_space<any>> -> memref<1x128xf32, #tpu.memory_space<any>>
        %c0_i32_388 = arith.constant 0 : i32
        %589 = tpu.memref_slice %arg11[%573, %c0_i32_388] : memref<24x128xf32, #tpu.memory_space<vmem>> -> memref<1x128xf32, #tpu.memory_space<vmem>>
        %590 = tpu.memref_slice %arg12[%476] : memref<2x!tpu.dma_semaphore, #tpu.memory_space<semaphore_mem>> -> memref<1x!tpu.dma_semaphore, #tpu.memory_space<semaphore_mem>>
        %591 = tpu.memref_squeeze %590 : memref<1x!tpu.dma_semaphore, #tpu.memory_space<semaphore_mem>> -> memref<!tpu.dma_semaphore, #tpu.memory_space<semaphore_mem>>
        tpu.enqueue_dma source(%588 : memref<1x128xf32, #tpu.memory_space<any>>) target(%589 : memref<1x128xf32, #tpu.memory_space<vmem>>) target_semaphore(%591 : memref<!tpu.dma_semaphore, #tpu.memory_space<semaphore_mem>>)
        %c8_i32_389 = arith.constant 8 : i32
        %592 = arith.muli %466, %c8_i32_389 : i32
        %593 = arith.addi %0, %592 : i32
        %c5_i32_390 = arith.constant 5 : i32
        %594 = arith.addi %593, %c5_i32_390 : i32
        %c8_i32_391 = arith.constant 8 : i32
        %595 = arith.muli %466, %c8_i32_391 : i32
        %c5_i32_392 = arith.constant 5 : i32
        %596 = arith.addi %595, %c5_i32_392 : i32
        %c0_393 = arith.constant 0 : index
        %597 = arith.index_cast %594 : i32 to index
        %598 = memref.load %arg1[%c0_393, %597] : memref<3x24xi32, #tpu.memory_space<smem>>
        %c0_i32_394 = arith.constant 0 : i32
        %599 = tpu.memref_slice %arg2[%598, %c0_i32_394] : memref<32x128xf32, #tpu.memory_space<any>> -> memref<1x128xf32, #tpu.memory_space<any>>
        %c0_i32_395 = arith.constant 0 : i32
        %600 = tpu.memref_slice %arg9[%596, %c0_i32_395] : memref<24x128xf32, #tpu.memory_space<vmem>> -> memref<1x128xf32, #tpu.memory_space<vmem>>
        %601 = tpu.memref_slice %arg12[%476] : memref<2x!tpu.dma_semaphore, #tpu.memory_space<semaphore_mem>> -> memref<1x!tpu.dma_semaphore, #tpu.memory_space<semaphore_mem>>
        %602 = tpu.memref_squeeze %601 : memref<1x!tpu.dma_semaphore, #tpu.memory_space<semaphore_mem>> -> memref<!tpu.dma_semaphore, #tpu.memory_space<semaphore_mem>>
        tpu.enqueue_dma source(%599 : memref<1x128xf32, #tpu.memory_space<any>>) target(%600 : memref<1x128xf32, #tpu.memory_space<vmem>>) target_semaphore(%602 : memref<!tpu.dma_semaphore, #tpu.memory_space<semaphore_mem>>)
        %c1_396 = arith.constant 1 : index
        %603 = arith.index_cast %594 : i32 to index
        %604 = memref.load %arg1[%c1_396, %603] : memref<3x24xi32, #tpu.memory_space<smem>>
        %c0_i32_397 = arith.constant 0 : i32
        %605 = tpu.memref_slice %arg3[%604, %c0_i32_397] : memref<8x128xf32, #tpu.memory_space<any>> -> memref<1x128xf32, #tpu.memory_space<any>>
        %c0_i32_398 = arith.constant 0 : i32
        %606 = tpu.memref_slice %arg10[%596, %c0_i32_398] : memref<24x128xf32, #tpu.memory_space<vmem>> -> memref<1x128xf32, #tpu.memory_space<vmem>>
        %607 = tpu.memref_slice %arg12[%476] : memref<2x!tpu.dma_semaphore, #tpu.memory_space<semaphore_mem>> -> memref<1x!tpu.dma_semaphore, #tpu.memory_space<semaphore_mem>>
        %608 = tpu.memref_squeeze %607 : memref<1x!tpu.dma_semaphore, #tpu.memory_space<semaphore_mem>> -> memref<!tpu.dma_semaphore, #tpu.memory_space<semaphore_mem>>
        tpu.enqueue_dma source(%605 : memref<1x128xf32, #tpu.memory_space<any>>) target(%606 : memref<1x128xf32, #tpu.memory_space<vmem>>) target_semaphore(%608 : memref<!tpu.dma_semaphore, #tpu.memory_space<semaphore_mem>>)
        %c2_399 = arith.constant 2 : index
        %609 = arith.index_cast %594 : i32 to index
        %610 = memref.load %arg1[%c2_399, %609] : memref<3x24xi32, #tpu.memory_space<smem>>
        %c0_i32_400 = arith.constant 0 : i32
        %611 = tpu.memref_slice %arg2[%610, %c0_i32_400] : memref<32x128xf32, #tpu.memory_space<any>> -> memref<1x128xf32, #tpu.memory_space<any>>
        %c0_i32_401 = arith.constant 0 : i32
        %612 = tpu.memref_slice %arg11[%596, %c0_i32_401] : memref<24x128xf32, #tpu.memory_space<vmem>> -> memref<1x128xf32, #tpu.memory_space<vmem>>
        %613 = tpu.memref_slice %arg12[%476] : memref<2x!tpu.dma_semaphore, #tpu.memory_space<semaphore_mem>> -> memref<1x!tpu.dma_semaphore, #tpu.memory_space<semaphore_mem>>
        %614 = tpu.memref_squeeze %613 : memref<1x!tpu.dma_semaphore, #tpu.memory_space<semaphore_mem>> -> memref<!tpu.dma_semaphore, #tpu.memory_space<semaphore_mem>>
        tpu.enqueue_dma source(%611 : memref<1x128xf32, #tpu.memory_space<any>>) target(%612 : memref<1x128xf32, #tpu.memory_space<vmem>>) target_semaphore(%614 : memref<!tpu.dma_semaphore, #tpu.memory_space<semaphore_mem>>)
        %c8_i32_402 = arith.constant 8 : i32
        %615 = arith.muli %466, %c8_i32_402 : i32
        %616 = arith.addi %0, %615 : i32
        %c6_i32_403 = arith.constant 6 : i32
        %617 = arith.addi %616, %c6_i32_403 : i32
        %c8_i32_404 = arith.constant 8 : i32
        %618 = arith.muli %466, %c8_i32_404 : i32
        %c6_i32_405 = arith.constant 6 : i32
        %619 = arith.addi %618, %c6_i32_405 : i32
        %c0_406 = arith.constant 0 : index
        %620 = arith.index_cast %617 : i32 to index
        %621 = memref.load %arg1[%c0_406, %620] : memref<3x24xi32, #tpu.memory_space<smem>>
        %c0_i32_407 = arith.constant 0 : i32
        %622 = tpu.memref_slice %arg2[%621, %c0_i32_407] : memref<32x128xf32, #tpu.memory_space<any>> -> memref<1x128xf32, #tpu.memory_space<any>>
        %c0_i32_408 = arith.constant 0 : i32
        %623 = tpu.memref_slice %arg9[%619, %c0_i32_408] : memref<24x128xf32, #tpu.memory_space<vmem>> -> memref<1x128xf32, #tpu.memory_space<vmem>>
        %624 = tpu.memref_slice %arg12[%476] : memref<2x!tpu.dma_semaphore, #tpu.memory_space<semaphore_mem>> -> memref<1x!tpu.dma_semaphore, #tpu.memory_space<semaphore_mem>>
        %625 = tpu.memref_squeeze %624 : memref<1x!tpu.dma_semaphore, #tpu.memory_space<semaphore_mem>> -> memref<!tpu.dma_semaphore, #tpu.memory_space<semaphore_mem>>
        tpu.enqueue_dma source(%622 : memref<1x128xf32, #tpu.memory_space<any>>) target(%623 : memref<1x128xf32, #tpu.memory_space<vmem>>) target_semaphore(%625 : memref<!tpu.dma_semaphore, #tpu.memory_space<semaphore_mem>>)
        %c1_409 = arith.constant 1 : index
        %626 = arith.index_cast %617 : i32 to index
        %627 = memref.load %arg1[%c1_409, %626] : memref<3x24xi32, #tpu.memory_space<smem>>
        %c0_i32_410 = arith.constant 0 : i32
        %628 = tpu.memref_slice %arg3[%627, %c0_i32_410] : memref<8x128xf32, #tpu.memory_space<any>> -> memref<1x128xf32, #tpu.memory_space<any>>
        %c0_i32_411 = arith.constant 0 : i32
        %629 = tpu.memref_slice %arg10[%619, %c0_i32_411] : memref<24x128xf32, #tpu.memory_space<vmem>> -> memref<1x128xf32, #tpu.memory_space<vmem>>
        %630 = tpu.memref_slice %arg12[%476] : memref<2x!tpu.dma_semaphore, #tpu.memory_space<semaphore_mem>> -> memref<1x!tpu.dma_semaphore, #tpu.memory_space<semaphore_mem>>
        %631 = tpu.memref_squeeze %630 : memref<1x!tpu.dma_semaphore, #tpu.memory_space<semaphore_mem>> -> memref<!tpu.dma_semaphore, #tpu.memory_space<semaphore_mem>>
        tpu.enqueue_dma source(%628 : memref<1x128xf32, #tpu.memory_space<any>>) target(%629 : memref<1x128xf32, #tpu.memory_space<vmem>>) target_semaphore(%631 : memref<!tpu.dma_semaphore, #tpu.memory_space<semaphore_mem>>)
        %c2_412 = arith.constant 2 : index
        %632 = arith.index_cast %617 : i32 to index
        %633 = memref.load %arg1[%c2_412, %632] : memref<3x24xi32, #tpu.memory_space<smem>>
        %c0_i32_413 = arith.constant 0 : i32
        %634 = tpu.memref_slice %arg2[%633, %c0_i32_413] : memref<32x128xf32, #tpu.memory_space<any>> -> memref<1x128xf32, #tpu.memory_space<any>>
        %c0_i32_414 = arith.constant 0 : i32
        %635 = tpu.memref_slice %arg11[%619, %c0_i32_414] : memref<24x128xf32, #tpu.memory_space<vmem>> -> memref<1x128xf32, #tpu.memory_space<vmem>>
        %636 = tpu.memref_slice %arg12[%476] : memref<2x!tpu.dma_semaphore, #tpu.memory_space<semaphore_mem>> -> memref<1x!tpu.dma_semaphore, #tpu.memory_space<semaphore_mem>>
        %637 = tpu.memref_squeeze %636 : memref<1x!tpu.dma_semaphore, #tpu.memory_space<semaphore_mem>> -> memref<!tpu.dma_semaphore, #tpu.memory_space<semaphore_mem>>
        tpu.enqueue_dma source(%634 : memref<1x128xf32, #tpu.memory_space<any>>) target(%635 : memref<1x128xf32, #tpu.memory_space<vmem>>) target_semaphore(%637 : memref<!tpu.dma_semaphore, #tpu.memory_space<semaphore_mem>>)
        %c8_i32_415 = arith.constant 8 : i32
        %638 = arith.muli %466, %c8_i32_415 : i32
        %639 = arith.addi %0, %638 : i32
        %c7_i32_416 = arith.constant 7 : i32
        %640 = arith.addi %639, %c7_i32_416 : i32
        %c8_i32_417 = arith.constant 8 : i32
        %641 = arith.muli %466, %c8_i32_417 : i32
        %c7_i32_418 = arith.constant 7 : i32
        %642 = arith.addi %641, %c7_i32_418 : i32
        %c0_419 = arith.constant 0 : index
        %643 = arith.index_cast %640 : i32 to index
        %644 = memref.load %arg1[%c0_419, %643] : memref<3x24xi32, #tpu.memory_space<smem>>
        %c0_i32_420 = arith.constant 0 : i32
        %645 = tpu.memref_slice %arg2[%644, %c0_i32_420] : memref<32x128xf32, #tpu.memory_space<any>> -> memref<1x128xf32, #tpu.memory_space<any>>
        %c0_i32_421 = arith.constant 0 : i32
        %646 = tpu.memref_slice %arg9[%642, %c0_i32_421] : memref<24x128xf32, #tpu.memory_space<vmem>> -> memref<1x128xf32, #tpu.memory_space<vmem>>
        %647 = tpu.memref_slice %arg12[%476] : memref<2x!tpu.dma_semaphore, #tpu.memory_space<semaphore_mem>> -> memref<1x!tpu.dma_semaphore, #tpu.memory_space<semaphore_mem>>
        %648 = tpu.memref_squeeze %647 : memref<1x!tpu.dma_semaphore, #tpu.memory_space<semaphore_mem>> -> memref<!tpu.dma_semaphore, #tpu.memory_space<semaphore_mem>>
        tpu.enqueue_dma source(%645 : memref<1x128xf32, #tpu.memory_space<any>>) target(%646 : memref<1x128xf32, #tpu.memory_space<vmem>>) target_semaphore(%648 : memref<!tpu.dma_semaphore, #tpu.memory_space<semaphore_mem>>)
        %c1_422 = arith.constant 1 : index
        %649 = arith.index_cast %640 : i32 to index
        %650 = memref.load %arg1[%c1_422, %649] : memref<3x24xi32, #tpu.memory_space<smem>>
        %c0_i32_423 = arith.constant 0 : i32
        %651 = tpu.memref_slice %arg3[%650, %c0_i32_423] : memref<8x128xf32, #tpu.memory_space<any>> -> memref<1x128xf32, #tpu.memory_space<any>>
        %c0_i32_424 = arith.constant 0 : i32
        %652 = tpu.memref_slice %arg10[%642, %c0_i32_424] : memref<24x128xf32, #tpu.memory_space<vmem>> -> memref<1x128xf32, #tpu.memory_space<vmem>>
        %653 = tpu.memref_slice %arg12[%476] : memref<2x!tpu.dma_semaphore, #tpu.memory_space<semaphore_mem>> -> memref<1x!tpu.dma_semaphore, #tpu.memory_space<semaphore_mem>>
        %654 = tpu.memref_squeeze %653 : memref<1x!tpu.dma_semaphore, #tpu.memory_space<semaphore_mem>> -> memref<!tpu.dma_semaphore, #tpu.memory_space<semaphore_mem>>
        tpu.enqueue_dma source(%651 : memref<1x128xf32, #tpu.memory_space<any>>) target(%652 : memref<1x128xf32, #tpu.memory_space<vmem>>) target_semaphore(%654 : memref<!tpu.dma_semaphore, #tpu.memory_space<semaphore_mem>>)
        %c2_425 = arith.constant 2 : index
        %655 = arith.index_cast %640 : i32 to index
        %656 = memref.load %arg1[%c2_425, %655] : memref<3x24xi32, #tpu.memory_space<smem>>
        %c0_i32_426 = arith.constant 0 : i32
        %657 = tpu.memref_slice %arg2[%656, %c0_i32_426] : memref<32x128xf32, #tpu.memory_space<any>> -> memref<1x128xf32, #tpu.memory_space<any>>
        %c0_i32_427 = arith.constant 0 : i32
        %658 = tpu.memref_slice %arg11[%642, %c0_i32_427] : memref<24x128xf32, #tpu.memory_space<vmem>> -> memref<1x128xf32, #tpu.memory_space<vmem>>
        %659 = tpu.memref_slice %arg12[%476] : memref<2x!tpu.dma_semaphore, #tpu.memory_space<semaphore_mem>> -> memref<1x!tpu.dma_semaphore, #tpu.memory_space<semaphore_mem>>
        %660 = tpu.memref_squeeze %659 : memref<1x!tpu.dma_semaphore, #tpu.memory_space<semaphore_mem>> -> memref<!tpu.dma_semaphore, #tpu.memory_space<semaphore_mem>>
        tpu.enqueue_dma source(%657 : memref<1x128xf32, #tpu.memory_space<any>>) target(%658 : memref<1x128xf32, #tpu.memory_space<vmem>>) target_semaphore(%660 : memref<!tpu.dma_semaphore, #tpu.memory_space<semaphore_mem>>)
      } else {
      }
      %c2_i32_134 = arith.constant 2 : i32
      %c0_i32_135 = arith.constant 0 : i32
      %168 = arith.cmpi eq, %c2_i32_134, %c0_i32_135 : i32
      %c1_i32_136 = arith.constant 1 : i32
      %169 = arith.select %168, %c1_i32_136, %c2_i32_134 : i32
      %170 = arith.remsi %163, %169 : i32
      %c0_i32_137 = arith.constant 0 : i32
      %171 = arith.cmpi ne, %170, %c0_i32_137 : i32
      %c0_i32_138 = arith.constant 0 : i32
      %172 = arith.cmpi slt, %170, %c0_i32_138 : i32
      %c0_i32_139 = arith.constant 0 : i32
      %173 = arith.cmpi slt, %169, %c0_i32_139 : i32
      %174 = arith.xori %172, %173 : i1
      %175 = arith.andi %174, %171 : i1
      %176 = arith.addi %170, %169 : i32
      %177 = arith.select %175, %176, %170 : i32
      %c0_i32_140 = arith.constant 0 : i32
      %c0_i32_141 = arith.constant 0 : i32
      %178 = tpu.memref_slice %arg2[%c0_i32_140, %c0_i32_141] : memref<32x128xf32, #tpu.memory_space<any>> -> memref<1x128xf32, #tpu.memory_space<any>>
      %c0_i32_142 = arith.constant 0 : i32
      %c0_i32_143 = arith.constant 0 : i32
      %179 = tpu.memref_slice %arg9[%c0_i32_142, %c0_i32_143] : memref<24x128xf32, #tpu.memory_space<vmem>> -> memref<1x128xf32, #tpu.memory_space<vmem>>
      %180 = tpu.memref_slice %arg12[%177] : memref<2x!tpu.dma_semaphore, #tpu.memory_space<semaphore_mem>> -> memref<1x!tpu.dma_semaphore, #tpu.memory_space<semaphore_mem>>
      %181 = tpu.memref_squeeze %180 : memref<1x!tpu.dma_semaphore, #tpu.memory_space<semaphore_mem>> -> memref<!tpu.dma_semaphore, #tpu.memory_space<semaphore_mem>>
      tpu.wait_dma2 semaphore(%181 : memref<!tpu.dma_semaphore, #tpu.memory_space<semaphore_mem>>) src(%178 : memref<1x128xf32, #tpu.memory_space<any>>) dst(%179 : memref<1x128xf32, #tpu.memory_space<vmem>>)
      %c0_i32_144 = arith.constant 0 : i32
      %c0_i32_145 = arith.constant 0 : i32
      %182 = tpu.memref_slice %arg2[%c0_i32_144, %c0_i32_145] : memref<32x128xf32, #tpu.memory_space<any>> -> memref<1x128xf32, #tpu.memory_space<any>>
      %c0_i32_146 = arith.constant 0 : i32
      %c0_i32_147 = arith.constant 0 : i32
      %183 = tpu.memref_slice %arg9[%c0_i32_146, %c0_i32_147] : memref<24x128xf32, #tpu.memory_space<vmem>> -> memref<1x128xf32, #tpu.memory_space<vmem>>
      %184 = tpu.memref_slice %arg12[%177] : memref<2x!tpu.dma_semaphore, #tpu.memory_space<semaphore_mem>> -> memref<1x!tpu.dma_semaphore, #tpu.memory_space<semaphore_mem>>
      %185 = tpu.memref_squeeze %184 : memref<1x!tpu.dma_semaphore, #tpu.memory_space<semaphore_mem>> -> memref<!tpu.dma_semaphore, #tpu.memory_space<semaphore_mem>>
      tpu.wait_dma2 semaphore(%185 : memref<!tpu.dma_semaphore, #tpu.memory_space<semaphore_mem>>) src(%182 : memref<1x128xf32, #tpu.memory_space<any>>) dst(%183 : memref<1x128xf32, #tpu.memory_space<vmem>>)
      %c0_i32_148 = arith.constant 0 : i32
      %c0_i32_149 = arith.constant 0 : i32
      %186 = tpu.memref_slice %arg2[%c0_i32_148, %c0_i32_149] : memref<32x128xf32, #tpu.memory_space<any>> -> memref<1x128xf32, #tpu.memory_space<any>>
      %c0_i32_150 = arith.constant 0 : i32
      %c0_i32_151 = arith.constant 0 : i32
      %187 = tpu.memref_slice %arg9[%c0_i32_150, %c0_i32_151] : memref<24x128xf32, #tpu.memory_space<vmem>> -> memref<1x128xf32, #tpu.memory_space<vmem>>
      %188 = tpu.memref_slice %arg12[%177] : memref<2x!tpu.dma_semaphore, #tpu.memory_space<semaphore_mem>> -> memref<1x!tpu.dma_semaphore, #tpu.memory_space<semaphore_mem>>
      %189 = tpu.memref_squeeze %188 : memref<1x!tpu.dma_semaphore, #tpu.memory_space<semaphore_mem>> -> memref<!tpu.dma_semaphore, #tpu.memory_space<semaphore_mem>>
      tpu.wait_dma2 semaphore(%189 : memref<!tpu.dma_semaphore, #tpu.memory_space<semaphore_mem>>) src(%186 : memref<1x128xf32, #tpu.memory_space<any>>) dst(%187 : memref<1x128xf32, #tpu.memory_space<vmem>>)
      %c0_i32_152 = arith.constant 0 : i32
      %c0_i32_153 = arith.constant 0 : i32
      %190 = tpu.memref_slice %arg2[%c0_i32_152, %c0_i32_153] : memref<32x128xf32, #tpu.memory_space<any>> -> memref<1x128xf32, #tpu.memory_space<any>>
      %c0_i32_154 = arith.constant 0 : i32
      %c0_i32_155 = arith.constant 0 : i32
      %191 = tpu.memref_slice %arg9[%c0_i32_154, %c0_i32_155] : memref<24x128xf32, #tpu.memory_space<vmem>> -> memref<1x128xf32, #tpu.memory_space<vmem>>
      %192 = tpu.memref_slice %arg12[%177] : memref<2x!tpu.dma_semaphore, #tpu.memory_space<semaphore_mem>> -> memref<1x!tpu.dma_semaphore, #tpu.memory_space<semaphore_mem>>
      %193 = tpu.memref_squeeze %192 : memref<1x!tpu.dma_semaphore, #tpu.memory_space<semaphore_mem>> -> memref<!tpu.dma_semaphore, #tpu.memory_space<semaphore_mem>>
      tpu.wait_dma2 semaphore(%193 : memref<!tpu.dma_semaphore, #tpu.memory_space<semaphore_mem>>) src(%190 : memref<1x128xf32, #tpu.memory_space<any>>) dst(%191 : memref<1x128xf32, #tpu.memory_space<vmem>>)
      %c0_i32_156 = arith.constant 0 : i32
      %c0_i32_157 = arith.constant 0 : i32
      %194 = tpu.memref_slice %arg2[%c0_i32_156, %c0_i32_157] : memref<32x128xf32, #tpu.memory_space<any>> -> memref<1x128xf32, #tpu.memory_space<any>>
      %c0_i32_158 = arith.constant 0 : i32
      %c0_i32_159 = arith.constant 0 : i32
      %195 = tpu.memref_slice %arg9[%c0_i32_158, %c0_i32_159] : memref<24x128xf32, #tpu.memory_space<vmem>> -> memref<1x128xf32, #tpu.memory_space<vmem>>
      %196 = tpu.memref_slice %arg12[%177] : memref<2x!tpu.dma_semaphore, #tpu.memory_space<semaphore_mem>> -> memref<1x!tpu.dma_semaphore, #tpu.memory_space<semaphore_mem>>
      %197 = tpu.memref_squeeze %196 : memref<1x!tpu.dma_semaphore, #tpu.memory_space<semaphore_mem>> -> memref<!tpu.dma_semaphore, #tpu.memory_space<semaphore_mem>>
      tpu.wait_dma2 semaphore(%197 : memref<!tpu.dma_semaphore, #tpu.memory_space<semaphore_mem>>) src(%194 : memref<1x128xf32, #tpu.memory_space<any>>) dst(%195 : memref<1x128xf32, #tpu.memory_space<vmem>>)
      %c0_i32_160 = arith.constant 0 : i32
      %c0_i32_161 = arith.constant 0 : i32
      %198 = tpu.memref_slice %arg2[%c0_i32_160, %c0_i32_161] : memref<32x128xf32, #tpu.memory_space<any>> -> memref<1x128xf32, #tpu.memory_space<any>>
      %c0_i32_162 = arith.constant 0 : i32
      %c0_i32_163 = arith.constant 0 : i32
      %199 = tpu.memref_slice %arg9[%c0_i32_162, %c0_i32_163] : memref<24x128xf32, #tpu.memory_space<vmem>> -> memref<1x128xf32, #tpu.memory_space<vmem>>
      %200 = tpu.memref_slice %arg12[%177] : memref<2x!tpu.dma_semaphore, #tpu.memory_space<semaphore_mem>> -> memref<1x!tpu.dma_semaphore, #tpu.memory_space<semaphore_mem>>
      %201 = tpu.memref_squeeze %200 : memref<1x!tpu.dma_semaphore, #tpu.memory_space<semaphore_mem>> -> memref<!tpu.dma_semaphore, #tpu.memory_space<semaphore_mem>>
      tpu.wait_dma2 semaphore(%201 : memref<!tpu.dma_semaphore, #tpu.memory_space<semaphore_mem>>) src(%198 : memref<1x128xf32, #tpu.memory_space<any>>) dst(%199 : memref<1x128xf32, #tpu.memory_space<vmem>>)
      %c0_i32_164 = arith.constant 0 : i32
      %c0_i32_165 = arith.constant 0 : i32
      %202 = tpu.memref_slice %arg2[%c0_i32_164, %c0_i32_165] : memref<32x128xf32, #tpu.memory_space<any>> -> memref<1x128xf32, #tpu.memory_space<any>>
      %c0_i32_166 = arith.constant 0 : i32
      %c0_i32_167 = arith.constant 0 : i32
      %203 = tpu.memref_slice %arg9[%c0_i32_166, %c0_i32_167] : memref<24x128xf32, #tpu.memory_space<vmem>> -> memref<1x128xf32, #tpu.memory_space<vmem>>
      %204 = tpu.memref_slice %arg12[%177] : memref<2x!tpu.dma_semaphore, #tpu.memory_space<semaphore_mem>> -> memref<1x!tpu.dma_semaphore, #tpu.memory_space<semaphore_mem>>
      %205 = tpu.memref_squeeze %204 : memref<1x!tpu.dma_semaphore, #tpu.memory_space<semaphore_mem>> -> memref<!tpu.dma_semaphore, #tpu.memory_space<semaphore_mem>>
      tpu.wait_dma2 semaphore(%205 : memref<!tpu.dma_semaphore, #tpu.memory_space<semaphore_mem>>) src(%202 : memref<1x128xf32, #tpu.memory_space<any>>) dst(%203 : memref<1x128xf32, #tpu.memory_space<vmem>>)
      %c0_i32_168 = arith.constant 0 : i32
      %c0_i32_169 = arith.constant 0 : i32
      %206 = tpu.memref_slice %arg2[%c0_i32_168, %c0_i32_169] : memref<32x128xf32, #tpu.memory_space<any>> -> memref<1x128xf32, #tpu.memory_space<any>>
      %c0_i32_170 = arith.constant 0 : i32
      %c0_i32_171 = arith.constant 0 : i32
      %207 = tpu.memref_slice %arg9[%c0_i32_170, %c0_i32_171] : memref<24x128xf32, #tpu.memory_space<vmem>> -> memref<1x128xf32, #tpu.memory_space<vmem>>
      %208 = tpu.memref_slice %arg12[%177] : memref<2x!tpu.dma_semaphore, #tpu.memory_space<semaphore_mem>> -> memref<1x!tpu.dma_semaphore, #tpu.memory_space<semaphore_mem>>
      %209 = tpu.memref_squeeze %208 : memref<1x!tpu.dma_semaphore, #tpu.memory_space<semaphore_mem>> -> memref<!tpu.dma_semaphore, #tpu.memory_space<semaphore_mem>>
      tpu.wait_dma2 semaphore(%209 : memref<!tpu.dma_semaphore, #tpu.memory_space<semaphore_mem>>) src(%206 : memref<1x128xf32, #tpu.memory_space<any>>) dst(%207 : memref<1x128xf32, #tpu.memory_space<vmem>>)
      %c0_i32_172 = arith.constant 0 : i32
      %c0_i32_173 = arith.constant 0 : i32
      %210 = tpu.memref_slice %arg2[%c0_i32_172, %c0_i32_173] : memref<32x128xf32, #tpu.memory_space<any>> -> memref<1x128xf32, #tpu.memory_space<any>>
      %c0_i32_174 = arith.constant 0 : i32
      %c0_i32_175 = arith.constant 0 : i32
      %211 = tpu.memref_slice %arg9[%c0_i32_174, %c0_i32_175] : memref<24x128xf32, #tpu.memory_space<vmem>> -> memref<1x128xf32, #tpu.memory_space<vmem>>
      %212 = tpu.memref_slice %arg12[%177] : memref<2x!tpu.dma_semaphore, #tpu.memory_space<semaphore_mem>> -> memref<1x!tpu.dma_semaphore, #tpu.memory_space<semaphore_mem>>
      %213 = tpu.memref_squeeze %212 : memref<1x!tpu.dma_semaphore, #tpu.memory_space<semaphore_mem>> -> memref<!tpu.dma_semaphore, #tpu.memory_space<semaphore_mem>>
      tpu.wait_dma2 semaphore(%213 : memref<!tpu.dma_semaphore, #tpu.memory_space<semaphore_mem>>) src(%210 : memref<1x128xf32, #tpu.memory_space<any>>) dst(%211 : memref<1x128xf32, #tpu.memory_space<vmem>>)
      %c0_i32_176 = arith.constant 0 : i32
      %c0_i32_177 = arith.constant 0 : i32
      %214 = tpu.memref_slice %arg2[%c0_i32_176, %c0_i32_177] : memref<32x128xf32, #tpu.memory_space<any>> -> memref<1x128xf32, #tpu.memory_space<any>>
      %c0_i32_178 = arith.constant 0 : i32
      %c0_i32_179 = arith.constant 0 : i32
      %215 = tpu.memref_slice %arg9[%c0_i32_178, %c0_i32_179] : memref<24x128xf32, #tpu.memory_space<vmem>> -> memref<1x128xf32, #tpu.memory_space<vmem>>
      %216 = tpu.memref_slice %arg12[%177] : memref<2x!tpu.dma_semaphore, #tpu.memory_space<semaphore_mem>> -> memref<1x!tpu.dma_semaphore, #tpu.memory_space<semaphore_mem>>
      %217 = tpu.memref_squeeze %216 : memref<1x!tpu.dma_semaphore, #tpu.memory_space<semaphore_mem>> -> memref<!tpu.dma_semaphore, #tpu.memory_space<semaphore_mem>>
      tpu.wait_dma2 semaphore(%217 : memref<!tpu.dma_semaphore, #tpu.memory_space<semaphore_mem>>) src(%214 : memref<1x128xf32, #tpu.memory_space<any>>) dst(%215 : memref<1x128xf32, #tpu.memory_space<vmem>>)
      %c0_i32_180 = arith.constant 0 : i32
      %c0_i32_181 = arith.constant 0 : i32
      %218 = tpu.memref_slice %arg2[%c0_i32_180, %c0_i32_181] : memref<32x128xf32, #tpu.memory_space<any>> -> memref<1x128xf32, #tpu.memory_space<any>>
      %c0_i32_182 = arith.constant 0 : i32
      %c0_i32_183 = arith.constant 0 : i32
      %219 = tpu.memref_slice %arg9[%c0_i32_182, %c0_i32_183] : memref<24x128xf32, #tpu.memory_space<vmem>> -> memref<1x128xf32, #tpu.memory_space<vmem>>
      %220 = tpu.memref_slice %arg12[%177] : memref<2x!tpu.dma_semaphore, #tpu.memory_space<semaphore_mem>> -> memref<1x!tpu.dma_semaphore, #tpu.memory_space<semaphore_mem>>
      %221 = tpu.memref_squeeze %220 : memref<1x!tpu.dma_semaphore, #tpu.memory_space<semaphore_mem>> -> memref<!tpu.dma_semaphore, #tpu.memory_space<semaphore_mem>>
      tpu.wait_dma2 semaphore(%221 : memref<!tpu.dma_semaphore, #tpu.memory_space<semaphore_mem>>) src(%218 : memref<1x128xf32, #tpu.memory_space<any>>) dst(%219 : memref<1x128xf32, #tpu.memory_space<vmem>>)
      %c0_i32_184 = arith.constant 0 : i32
      %c0_i32_185 = arith.constant 0 : i32
      %222 = tpu.memref_slice %arg2[%c0_i32_184, %c0_i32_185] : memref<32x128xf32, #tpu.memory_space<any>> -> memref<1x128xf32, #tpu.memory_space<any>>
      %c0_i32_186 = arith.constant 0 : i32
      %c0_i32_187 = arith.constant 0 : i32
      %223 = tpu.memref_slice %arg9[%c0_i32_186, %c0_i32_187] : memref<24x128xf32, #tpu.memory_space<vmem>> -> memref<1x128xf32, #tpu.memory_space<vmem>>
      %224 = tpu.memref_slice %arg12[%177] : memref<2x!tpu.dma_semaphore, #tpu.memory_space<semaphore_mem>> -> memref<1x!tpu.dma_semaphore, #tpu.memory_space<semaphore_mem>>
      %225 = tpu.memref_squeeze %224 : memref<1x!tpu.dma_semaphore, #tpu.memory_space<semaphore_mem>> -> memref<!tpu.dma_semaphore, #tpu.memory_space<semaphore_mem>>
      tpu.wait_dma2 semaphore(%225 : memref<!tpu.dma_semaphore, #tpu.memory_space<semaphore_mem>>) src(%222 : memref<1x128xf32, #tpu.memory_space<any>>) dst(%223 : memref<1x128xf32, #tpu.memory_space<vmem>>)
      %c0_i32_188 = arith.constant 0 : i32
      %c0_i32_189 = arith.constant 0 : i32
      %226 = tpu.memref_slice %arg2[%c0_i32_188, %c0_i32_189] : memref<32x128xf32, #tpu.memory_space<any>> -> memref<1x128xf32, #tpu.memory_space<any>>
      %c0_i32_190 = arith.constant 0 : i32
      %c0_i32_191 = arith.constant 0 : i32
      %227 = tpu.memref_slice %arg9[%c0_i32_190, %c0_i32_191] : memref<24x128xf32, #tpu.memory_space<vmem>> -> memref<1x128xf32, #tpu.memory_space<vmem>>
      %228 = tpu.memref_slice %arg12[%177] : memref<2x!tpu.dma_semaphore, #tpu.memory_space<semaphore_mem>> -> memref<1x!tpu.dma_semaphore, #tpu.memory_space<semaphore_mem>>
      %229 = tpu.memref_squeeze %228 : memref<1x!tpu.dma_semaphore, #tpu.memory_space<semaphore_mem>> -> memref<!tpu.dma_semaphore, #tpu.memory_space<semaphore_mem>>
      tpu.wait_dma2 semaphore(%229 : memref<!tpu.dma_semaphore, #tpu.memory_space<semaphore_mem>>) src(%226 : memref<1x128xf32, #tpu.memory_space<any>>) dst(%227 : memref<1x128xf32, #tpu.memory_space<vmem>>)
      %c0_i32_192 = arith.constant 0 : i32
      %c0_i32_193 = arith.constant 0 : i32
      %230 = tpu.memref_slice %arg2[%c0_i32_192, %c0_i32_193] : memref<32x128xf32, #tpu.memory_space<any>> -> memref<1x128xf32, #tpu.memory_space<any>>
      %c0_i32_194 = arith.constant 0 : i32
      %c0_i32_195 = arith.constant 0 : i32
      %231 = tpu.memref_slice %arg9[%c0_i32_194, %c0_i32_195] : memref<24x128xf32, #tpu.memory_space<vmem>> -> memref<1x128xf32, #tpu.memory_space<vmem>>
      %232 = tpu.memref_slice %arg12[%177] : memref<2x!tpu.dma_semaphore, #tpu.memory_space<semaphore_mem>> -> memref<1x!tpu.dma_semaphore, #tpu.memory_space<semaphore_mem>>
      %233 = tpu.memref_squeeze %232 : memref<1x!tpu.dma_semaphore, #tpu.memory_space<semaphore_mem>> -> memref<!tpu.dma_semaphore, #tpu.memory_space<semaphore_mem>>
      tpu.wait_dma2 semaphore(%233 : memref<!tpu.dma_semaphore, #tpu.memory_space<semaphore_mem>>) src(%230 : memref<1x128xf32, #tpu.memory_space<any>>) dst(%231 : memref<1x128xf32, #tpu.memory_space<vmem>>)
      %c0_i32_196 = arith.constant 0 : i32
      %c0_i32_197 = arith.constant 0 : i32
      %234 = tpu.memref_slice %arg2[%c0_i32_196, %c0_i32_197] : memref<32x128xf32, #tpu.memory_space<any>> -> memref<1x128xf32, #tpu.memory_space<any>>
      %c0_i32_198 = arith.constant 0 : i32
      %c0_i32_199 = arith.constant 0 : i32
      %235 = tpu.memref_slice %arg9[%c0_i32_198, %c0_i32_199] : memref<24x128xf32, #tpu.memory_space<vmem>> -> memref<1x128xf32, #tpu.memory_space<vmem>>
      %236 = tpu.memref_slice %arg12[%177] : memref<2x!tpu.dma_semaphore, #tpu.memory_space<semaphore_mem>> -> memref<1x!tpu.dma_semaphore, #tpu.memory_space<semaphore_mem>>
      %237 = tpu.memref_squeeze %236 : memref<1x!tpu.dma_semaphore, #tpu.memory_space<semaphore_mem>> -> memref<!tpu.dma_semaphore, #tpu.memory_space<semaphore_mem>>
      tpu.wait_dma2 semaphore(%237 : memref<!tpu.dma_semaphore, #tpu.memory_space<semaphore_mem>>) src(%234 : memref<1x128xf32, #tpu.memory_space<any>>) dst(%235 : memref<1x128xf32, #tpu.memory_space<vmem>>)
      %c0_i32_200 = arith.constant 0 : i32
      %c0_i32_201 = arith.constant 0 : i32
      %238 = tpu.memref_slice %arg2[%c0_i32_200, %c0_i32_201] : memref<32x128xf32, #tpu.memory_space<any>> -> memref<1x128xf32, #tpu.memory_space<any>>
      %c0_i32_202 = arith.constant 0 : i32
      %c0_i32_203 = arith.constant 0 : i32
      %239 = tpu.memref_slice %arg9[%c0_i32_202, %c0_i32_203] : memref<24x128xf32, #tpu.memory_space<vmem>> -> memref<1x128xf32, #tpu.memory_space<vmem>>
      %240 = tpu.memref_slice %arg12[%177] : memref<2x!tpu.dma_semaphore, #tpu.memory_space<semaphore_mem>> -> memref<1x!tpu.dma_semaphore, #tpu.memory_space<semaphore_mem>>
      %241 = tpu.memref_squeeze %240 : memref<1x!tpu.dma_semaphore, #tpu.memory_space<semaphore_mem>> -> memref<!tpu.dma_semaphore, #tpu.memory_space<semaphore_mem>>
      tpu.wait_dma2 semaphore(%241 : memref<!tpu.dma_semaphore, #tpu.memory_space<semaphore_mem>>) src(%238 : memref<1x128xf32, #tpu.memory_space<any>>) dst(%239 : memref<1x128xf32, #tpu.memory_space<vmem>>)
      %c0_i32_204 = arith.constant 0 : i32
      %c0_i32_205 = arith.constant 0 : i32
      %242 = tpu.memref_slice %arg2[%c0_i32_204, %c0_i32_205] : memref<32x128xf32, #tpu.memory_space<any>> -> memref<1x128xf32, #tpu.memory_space<any>>
      %c0_i32_206 = arith.constant 0 : i32
      %c0_i32_207 = arith.constant 0 : i32
      %243 = tpu.memref_slice %arg9[%c0_i32_206, %c0_i32_207] : memref<24x128xf32, #tpu.memory_space<vmem>> -> memref<1x128xf32, #tpu.memory_space<vmem>>
      %244 = tpu.memref_slice %arg12[%177] : memref<2x!tpu.dma_semaphore, #tpu.memory_space<semaphore_mem>> -> memref<1x!tpu.dma_semaphore, #tpu.memory_space<semaphore_mem>>
      %245 = tpu.memref_squeeze %244 : memref<1x!tpu.dma_semaphore, #tpu.memory_space<semaphore_mem>> -> memref<!tpu.dma_semaphore, #tpu.memory_space<semaphore_mem>>
      tpu.wait_dma2 semaphore(%245 : memref<!tpu.dma_semaphore, #tpu.memory_space<semaphore_mem>>) src(%242 : memref<1x128xf32, #tpu.memory_space<any>>) dst(%243 : memref<1x128xf32, #tpu.memory_space<vmem>>)
      %c0_i32_208 = arith.constant 0 : i32
      %c0_i32_209 = arith.constant 0 : i32
      %246 = tpu.memref_slice %arg2[%c0_i32_208, %c0_i32_209] : memref<32x128xf32, #tpu.memory_space<any>> -> memref<1x128xf32, #tpu.memory_space<any>>
      %c0_i32_210 = arith.constant 0 : i32
      %c0_i32_211 = arith.constant 0 : i32
      %247 = tpu.memref_slice %arg9[%c0_i32_210, %c0_i32_211] : memref<24x128xf32, #tpu.memory_space<vmem>> -> memref<1x128xf32, #tpu.memory_space<vmem>>
      %248 = tpu.memref_slice %arg12[%177] : memref<2x!tpu.dma_semaphore, #tpu.memory_space<semaphore_mem>> -> memref<1x!tpu.dma_semaphore, #tpu.memory_space<semaphore_mem>>
      %249 = tpu.memref_squeeze %248 : memref<1x!tpu.dma_semaphore, #tpu.memory_space<semaphore_mem>> -> memref<!tpu.dma_semaphore, #tpu.memory_space<semaphore_mem>>
      tpu.wait_dma2 semaphore(%249 : memref<!tpu.dma_semaphore, #tpu.memory_space<semaphore_mem>>) src(%246 : memref<1x128xf32, #tpu.memory_space<any>>) dst(%247 : memref<1x128xf32, #tpu.memory_space<vmem>>)
      %c0_i32_212 = arith.constant 0 : i32
      %c0_i32_213 = arith.constant 0 : i32
      %250 = tpu.memref_slice %arg2[%c0_i32_212, %c0_i32_213] : memref<32x128xf32, #tpu.memory_space<any>> -> memref<1x128xf32, #tpu.memory_space<any>>
      %c0_i32_214 = arith.constant 0 : i32
      %c0_i32_215 = arith.constant 0 : i32
      %251 = tpu.memref_slice %arg9[%c0_i32_214, %c0_i32_215] : memref<24x128xf32, #tpu.memory_space<vmem>> -> memref<1x128xf32, #tpu.memory_space<vmem>>
      %252 = tpu.memref_slice %arg12[%177] : memref<2x!tpu.dma_semaphore, #tpu.memory_space<semaphore_mem>> -> memref<1x!tpu.dma_semaphore, #tpu.memory_space<semaphore_mem>>
      %253 = tpu.memref_squeeze %252 : memref<1x!tpu.dma_semaphore, #tpu.memory_space<semaphore_mem>> -> memref<!tpu.dma_semaphore, #tpu.memory_space<semaphore_mem>>
      tpu.wait_dma2 semaphore(%253 : memref<!tpu.dma_semaphore, #tpu.memory_space<semaphore_mem>>) src(%250 : memref<1x128xf32, #tpu.memory_space<any>>) dst(%251 : memref<1x128xf32, #tpu.memory_space<vmem>>)
      %c0_i32_216 = arith.constant 0 : i32
      %c0_i32_217 = arith.constant 0 : i32
      %254 = tpu.memref_slice %arg2[%c0_i32_216, %c0_i32_217] : memref<32x128xf32, #tpu.memory_space<any>> -> memref<1x128xf32, #tpu.memory_space<any>>
      %c0_i32_218 = arith.constant 0 : i32
      %c0_i32_219 = arith.constant 0 : i32
      %255 = tpu.memref_slice %arg9[%c0_i32_218, %c0_i32_219] : memref<24x128xf32, #tpu.memory_space<vmem>> -> memref<1x128xf32, #tpu.memory_space<vmem>>
      %256 = tpu.memref_slice %arg12[%177] : memref<2x!tpu.dma_semaphore, #tpu.memory_space<semaphore_mem>> -> memref<1x!tpu.dma_semaphore, #tpu.memory_space<semaphore_mem>>
      %257 = tpu.memref_squeeze %256 : memref<1x!tpu.dma_semaphore, #tpu.memory_space<semaphore_mem>> -> memref<!tpu.dma_semaphore, #tpu.memory_space<semaphore_mem>>
      tpu.wait_dma2 semaphore(%257 : memref<!tpu.dma_semaphore, #tpu.memory_space<semaphore_mem>>) src(%254 : memref<1x128xf32, #tpu.memory_space<any>>) dst(%255 : memref<1x128xf32, #tpu.memory_space<vmem>>)
      %c0_i32_220 = arith.constant 0 : i32
      %c0_i32_221 = arith.constant 0 : i32
      %258 = tpu.memref_slice %arg2[%c0_i32_220, %c0_i32_221] : memref<32x128xf32, #tpu.memory_space<any>> -> memref<1x128xf32, #tpu.memory_space<any>>
      %c0_i32_222 = arith.constant 0 : i32
      %c0_i32_223 = arith.constant 0 : i32
      %259 = tpu.memref_slice %arg9[%c0_i32_222, %c0_i32_223] : memref<24x128xf32, #tpu.memory_space<vmem>> -> memref<1x128xf32, #tpu.memory_space<vmem>>
      %260 = tpu.memref_slice %arg12[%177] : memref<2x!tpu.dma_semaphore, #tpu.memory_space<semaphore_mem>> -> memref<1x!tpu.dma_semaphore, #tpu.memory_space<semaphore_mem>>
      %261 = tpu.memref_squeeze %260 : memref<1x!tpu.dma_semaphore, #tpu.memory_space<semaphore_mem>> -> memref<!tpu.dma_semaphore, #tpu.memory_space<semaphore_mem>>
      tpu.wait_dma2 semaphore(%261 : memref<!tpu.dma_semaphore, #tpu.memory_space<semaphore_mem>>) src(%258 : memref<1x128xf32, #tpu.memory_space<any>>) dst(%259 : memref<1x128xf32, #tpu.memory_space<vmem>>)
      %c0_i32_224 = arith.constant 0 : i32
      %c0_i32_225 = arith.constant 0 : i32
      %262 = tpu.memref_slice %arg2[%c0_i32_224, %c0_i32_225] : memref<32x128xf32, #tpu.memory_space<any>> -> memref<1x128xf32, #tpu.memory_space<any>>
      %c0_i32_226 = arith.constant 0 : i32
      %c0_i32_227 = arith.constant 0 : i32
      %263 = tpu.memref_slice %arg9[%c0_i32_226, %c0_i32_227] : memref<24x128xf32, #tpu.memory_space<vmem>> -> memref<1x128xf32, #tpu.memory_space<vmem>>
      %264 = tpu.memref_slice %arg12[%177] : memref<2x!tpu.dma_semaphore, #tpu.memory_space<semaphore_mem>> -> memref<1x!tpu.dma_semaphore, #tpu.memory_space<semaphore_mem>>
      %265 = tpu.memref_squeeze %264 : memref<1x!tpu.dma_semaphore, #tpu.memory_space<semaphore_mem>> -> memref<!tpu.dma_semaphore, #tpu.memory_space<semaphore_mem>>
      tpu.wait_dma2 semaphore(%265 : memref<!tpu.dma_semaphore, #tpu.memory_space<semaphore_mem>>) src(%262 : memref<1x128xf32, #tpu.memory_space<any>>) dst(%263 : memref<1x128xf32, #tpu.memory_space<vmem>>)
      %c0_i32_228 = arith.constant 0 : i32
      %c0_i32_229 = arith.constant 0 : i32
      %266 = tpu.memref_slice %arg2[%c0_i32_228, %c0_i32_229] : memref<32x128xf32, #tpu.memory_space<any>> -> memref<1x128xf32, #tpu.memory_space<any>>
      %c0_i32_230 = arith.constant 0 : i32
      %c0_i32_231 = arith.constant 0 : i32
      %267 = tpu.memref_slice %arg9[%c0_i32_230, %c0_i32_231] : memref<24x128xf32, #tpu.memory_space<vmem>> -> memref<1x128xf32, #tpu.memory_space<vmem>>
      %268 = tpu.memref_slice %arg12[%177] : memref<2x!tpu.dma_semaphore, #tpu.memory_space<semaphore_mem>> -> memref<1x!tpu.dma_semaphore, #tpu.memory_space<semaphore_mem>>
      %269 = tpu.memref_squeeze %268 : memref<1x!tpu.dma_semaphore, #tpu.memory_space<semaphore_mem>> -> memref<!tpu.dma_semaphore, #tpu.memory_space<semaphore_mem>>
      tpu.wait_dma2 semaphore(%269 : memref<!tpu.dma_semaphore, #tpu.memory_space<semaphore_mem>>) src(%266 : memref<1x128xf32, #tpu.memory_space<any>>) dst(%267 : memref<1x128xf32, #tpu.memory_space<vmem>>)
      %c0_i32_232 = arith.constant 0 : i32
      %c0_i32_233 = arith.constant 0 : i32
      %270 = tpu.memref_slice %arg2[%c0_i32_232, %c0_i32_233] : memref<32x128xf32, #tpu.memory_space<any>> -> memref<1x128xf32, #tpu.memory_space<any>>
      %c0_i32_234 = arith.constant 0 : i32
      %c0_i32_235 = arith.constant 0 : i32
      %271 = tpu.memref_slice %arg9[%c0_i32_234, %c0_i32_235] : memref<24x128xf32, #tpu.memory_space<vmem>> -> memref<1x128xf32, #tpu.memory_space<vmem>>
      %272 = tpu.memref_slice %arg12[%177] : memref<2x!tpu.dma_semaphore, #tpu.memory_space<semaphore_mem>> -> memref<1x!tpu.dma_semaphore, #tpu.memory_space<semaphore_mem>>
      %273 = tpu.memref_squeeze %272 : memref<1x!tpu.dma_semaphore, #tpu.memory_space<semaphore_mem>> -> memref<!tpu.dma_semaphore, #tpu.memory_space<semaphore_mem>>
      tpu.wait_dma2 semaphore(%273 : memref<!tpu.dma_semaphore, #tpu.memory_space<semaphore_mem>>) src(%270 : memref<1x128xf32, #tpu.memory_space<any>>) dst(%271 : memref<1x128xf32, #tpu.memory_space<vmem>>)
      %c8_i32 = arith.constant 8 : i32
      %274 = arith.muli %163, %c8_i32 : i32
      %275 = tpu.assume_multiple %274, 8 : i32
      %276 = arith.index_cast %275 : i32 to index
      %c0_236 = arith.constant 0 : index
      %277 = vector.load %arg9[%276, %c0_236] : memref<24x128xf32, #tpu.memory_space<vmem>>, vector<8x128xf32>
      %278 = arith.index_cast %275 : i32 to index
      %c0_237 = arith.constant 0 : index
      %279 = vector.load %arg10[%278, %c0_237] : memref<24x128xf32, #tpu.memory_space<vmem>>, vector<8x128xf32>
      %280 = arith.index_cast %275 : i32 to index
      %c0_238 = arith.constant 0 : index
      %281 = vector.load %arg11[%280, %c0_238] : memref<24x128xf32, #tpu.memory_space<vmem>>, vector<8x128xf32>
      %cst = arith.constant 0.000000e+00 : f32
      %282 = vector.broadcast %cst : f32 to vector<8x128xf32>
      %c0_239 = arith.constant 0 : index
      %c0_240 = arith.constant 0 : index
      %283 = memref.load %arg5[%c0_239, %c0_240] : memref<8x3xf32, #tpu.memory_space<smem>>
      %284 = vector.broadcast %283 : f32 to vector<8x128xf32>
      %285 = arith.mulf %284, %277 : vector<8x128xf32>
      %c0_241 = arith.constant 0 : index
      %c1_242 = arith.constant 1 : index
      %286 = memref.load %arg5[%c0_241, %c1_242] : memref<8x3xf32, #tpu.memory_space<smem>>
      %287 = vector.broadcast %286 : f32 to vector<8x128xf32>
      %288 = arith.mulf %287, %279 : vector<8x128xf32>
      %289 = arith.addf %285, %288 : vector<8x128xf32>
      %c0_243 = arith.constant 0 : index
      %c2_244 = arith.constant 2 : index
      %290 = memref.load %arg5[%c0_243, %c2_244] : memref<8x3xf32, #tpu.memory_space<smem>>
      %291 = vector.broadcast %290 : f32 to vector<8x128xf32>
      %292 = arith.mulf %291, %281 : vector<8x128xf32>
      %293 = arith.addf %289, %292 : vector<8x128xf32>
      %c0_245 = arith.constant 0 : index
      %294 = memref.load %arg6[%c0_245] : memref<8xf32, #tpu.memory_space<smem>>
      %295 = vector.broadcast %294 : f32 to vector<8x128xf32>
      %296 = arith.addf %293, %295 : vector<8x128xf32>
      %cst_246 = arith.constant 0.000000e+00 : f32
      %297 = vector.broadcast %cst_246 : f32 to vector<8x128xf32>
      %298 = arith.maximumf %296, %297 : vector<8x128xf32>
      %c0_247 = arith.constant 0 : index
      %c0_248 = arith.constant 0 : index
      %299 = vector.load %arg4[%c0_247, %c0_248] : memref<8x128xf32, #tpu.memory_space<vmem>>, vector<1x128xf32>
      %300 = vector.shape_cast %299 : vector<1x128xf32> to vector<128xf32>
      %301 = vector.shape_cast %300 : vector<128xf32> to vector<1x128xf32>
      %302 = vector.broadcast %301 : vector<1x128xf32> to vector<8x128xf32>
      %303 = arith.mulf %298, %302 : vector<8x128xf32>
      %304 = arith.addf %282, %303 : vector<8x128xf32>
      %c1_249 = arith.constant 1 : index
      %c0_250 = arith.constant 0 : index
      %305 = memref.load %arg5[%c1_249, %c0_250] : memref<8x3xf32, #tpu.memory_space<smem>>
      %306 = vector.broadcast %305 : f32 to vector<8x128xf32>
      %307 = arith.mulf %306, %277 : vector<8x128xf32>
      %c1_251 = arith.constant 1 : index
      %c1_252 = arith.constant 1 : index
      %308 = memref.load %arg5[%c1_251, %c1_252] : memref<8x3xf32, #tpu.memory_space<smem>>
      %309 = vector.broadcast %308 : f32 to vector<8x128xf32>
      %310 = arith.mulf %309, %279 : vector<8x128xf32>
      %311 = arith.addf %307, %310 : vector<8x128xf32>
      %c1_253 = arith.constant 1 : index
      %c2_254 = arith.constant 2 : index
      %312 = memref.load %arg5[%c1_253, %c2_254] : memref<8x3xf32, #tpu.memory_space<smem>>
      %313 = vector.broadcast %312 : f32 to vector<8x128xf32>
      %314 = arith.mulf %313, %281 : vector<8x128xf32>
      %315 = arith.addf %311, %314 : vector<8x128xf32>
      %c1_255 = arith.constant 1 : index
      %316 = memref.load %arg6[%c1_255] : memref<8xf32, #tpu.memory_space<smem>>
      %317 = vector.broadcast %316 : f32 to vector<8x128xf32>
      %318 = arith.addf %315, %317 : vector<8x128xf32>
      %cst_256 = arith.constant 0.000000e+00 : f32
      %319 = vector.broadcast %cst_256 : f32 to vector<8x128xf32>
      %320 = arith.maximumf %318, %319 : vector<8x128xf32>
      %c1_257 = arith.constant 1 : index
      %c0_258 = arith.constant 0 : index
      %321 = vector.load %arg4[%c1_257, %c0_258] : memref<8x128xf32, #tpu.memory_space<vmem>>, vector<1x128xf32>
      %322 = vector.shape_cast %321 : vector<1x128xf32> to vector<128xf32>
      %323 = vector.shape_cast %322 : vector<128xf32> to vector<1x128xf32>
      %324 = vector.broadcast %323 : vector<1x128xf32> to vector<8x128xf32>
      %325 = arith.mulf %320, %324 : vector<8x128xf32>
      %326 = arith.addf %304, %325 : vector<8x128xf32>
      %c2_259 = arith.constant 2 : index
      %c0_260 = arith.constant 0 : index
      %327 = memref.load %arg5[%c2_259, %c0_260] : memref<8x3xf32, #tpu.memory_space<smem>>
      %328 = vector.broadcast %327 : f32 to vector<8x128xf32>
      %329 = arith.mulf %328, %277 : vector<8x128xf32>
      %c2_261 = arith.constant 2 : index
      %c1_262 = arith.constant 1 : index
      %330 = memref.load %arg5[%c2_261, %c1_262] : memref<8x3xf32, #tpu.memory_space<smem>>
      %331 = vector.broadcast %330 : f32 to vector<8x128xf32>
      %332 = arith.mulf %331, %279 : vector<8x128xf32>
      %333 = arith.addf %329, %332 : vector<8x128xf32>
      %c2_263 = arith.constant 2 : index
      %c2_264 = arith.constant 2 : index
      %334 = memref.load %arg5[%c2_263, %c2_264] : memref<8x3xf32, #tpu.memory_space<smem>>
      %335 = vector.broadcast %334 : f32 to vector<8x128xf32>
      %336 = arith.mulf %335, %281 : vector<8x128xf32>
      %337 = arith.addf %333, %336 : vector<8x128xf32>
      %c2_265 = arith.constant 2 : index
      %338 = memref.load %arg6[%c2_265] : memref<8xf32, #tpu.memory_space<smem>>
      %339 = vector.broadcast %338 : f32 to vector<8x128xf32>
      %340 = arith.addf %337, %339 : vector<8x128xf32>
      %cst_266 = arith.constant 0.000000e+00 : f32
      %341 = vector.broadcast %cst_266 : f32 to vector<8x128xf32>
      %342 = arith.maximumf %340, %341 : vector<8x128xf32>
      %c2_267 = arith.constant 2 : index
      %c0_268 = arith.constant 0 : index
      %343 = vector.load %arg4[%c2_267, %c0_268] : memref<8x128xf32, #tpu.memory_space<vmem>>, vector<1x128xf32>
      %344 = vector.shape_cast %343 : vector<1x128xf32> to vector<128xf32>
      %345 = vector.shape_cast %344 : vector<128xf32> to vector<1x128xf32>
      %346 = vector.broadcast %345 : vector<1x128xf32> to vector<8x128xf32>
      %347 = arith.mulf %342, %346 : vector<8x128xf32>
      %348 = arith.addf %326, %347 : vector<8x128xf32>
      %c3 = arith.constant 3 : index
      %c0_269 = arith.constant 0 : index
      %349 = memref.load %arg5[%c3, %c0_269] : memref<8x3xf32, #tpu.memory_space<smem>>
      %350 = vector.broadcast %349 : f32 to vector<8x128xf32>
      %351 = arith.mulf %350, %277 : vector<8x128xf32>
      %c3_270 = arith.constant 3 : index
      %c1_271 = arith.constant 1 : index
      %352 = memref.load %arg5[%c3_270, %c1_271] : memref<8x3xf32, #tpu.memory_space<smem>>
      %353 = vector.broadcast %352 : f32 to vector<8x128xf32>
      %354 = arith.mulf %353, %279 : vector<8x128xf32>
      %355 = arith.addf %351, %354 : vector<8x128xf32>
      %c3_272 = arith.constant 3 : index
      %c2_273 = arith.constant 2 : index
      %356 = memref.load %arg5[%c3_272, %c2_273] : memref<8x3xf32, #tpu.memory_space<smem>>
      %357 = vector.broadcast %356 : f32 to vector<8x128xf32>
      %358 = arith.mulf %357, %281 : vector<8x128xf32>
      %359 = arith.addf %355, %358 : vector<8x128xf32>
      %c3_274 = arith.constant 3 : index
      %360 = memref.load %arg6[%c3_274] : memref<8xf32, #tpu.memory_space<smem>>
      %361 = vector.broadcast %360 : f32 to vector<8x128xf32>
      %362 = arith.addf %359, %361 : vector<8x128xf32>
      %cst_275 = arith.constant 0.000000e+00 : f32
      %363 = vector.broadcast %cst_275 : f32 to vector<8x128xf32>
      %364 = arith.maximumf %362, %363 : vector<8x128xf32>
      %c3_276 = arith.constant 3 : index
      %c0_277 = arith.constant 0 : index
      %365 = vector.load %arg4[%c3_276, %c0_277] : memref<8x128xf32, #tpu.memory_space<vmem>>, vector<1x128xf32>
      %366 = vector.shape_cast %365 : vector<1x128xf32> to vector<128xf32>
      %367 = vector.shape_cast %366 : vector<128xf32> to vector<1x128xf32>
      %368 = vector.broadcast %367 : vector<1x128xf32> to vector<8x128xf32>
      %369 = arith.mulf %364, %368 : vector<8x128xf32>
      %370 = arith.addf %348, %369 : vector<8x128xf32>
      %c4 = arith.constant 4 : index
      %c0_278 = arith.constant 0 : index
      %371 = memref.load %arg5[%c4, %c0_278] : memref<8x3xf32, #tpu.memory_space<smem>>
      %372 = vector.broadcast %371 : f32 to vector<8x128xf32>
      %373 = arith.mulf %372, %277 : vector<8x128xf32>
      %c4_279 = arith.constant 4 : index
      %c1_280 = arith.constant 1 : index
      %374 = memref.load %arg5[%c4_279, %c1_280] : memref<8x3xf32, #tpu.memory_space<smem>>
      %375 = vector.broadcast %374 : f32 to vector<8x128xf32>
      %376 = arith.mulf %375, %279 : vector<8x128xf32>
      %377 = arith.addf %373, %376 : vector<8x128xf32>
      %c4_281 = arith.constant 4 : index
      %c2_282 = arith.constant 2 : index
      %378 = memref.load %arg5[%c4_281, %c2_282] : memref<8x3xf32, #tpu.memory_space<smem>>
      %379 = vector.broadcast %378 : f32 to vector<8x128xf32>
      %380 = arith.mulf %379, %281 : vector<8x128xf32>
      %381 = arith.addf %377, %380 : vector<8x128xf32>
      %c4_283 = arith.constant 4 : index
      %382 = memref.load %arg6[%c4_283] : memref<8xf32, #tpu.memory_space<smem>>
      %383 = vector.broadcast %382 : f32 to vector<8x128xf32>
      %384 = arith.addf %381, %383 : vector<8x128xf32>
      %cst_284 = arith.constant 0.000000e+00 : f32
      %385 = vector.broadcast %cst_284 : f32 to vector<8x128xf32>
      %386 = arith.maximumf %384, %385 : vector<8x128xf32>
      %c4_285 = arith.constant 4 : index
      %c0_286 = arith.constant 0 : index
      %387 = vector.load %arg4[%c4_285, %c0_286] : memref<8x128xf32, #tpu.memory_space<vmem>>, vector<1x128xf32>
      %388 = vector.shape_cast %387 : vector<1x128xf32> to vector<128xf32>
      %389 = vector.shape_cast %388 : vector<128xf32> to vector<1x128xf32>
      %390 = vector.broadcast %389 : vector<1x128xf32> to vector<8x128xf32>
      %391 = arith.mulf %386, %390 : vector<8x128xf32>
      %392 = arith.addf %370, %391 : vector<8x128xf32>
      %c5 = arith.constant 5 : index
      %c0_287 = arith.constant 0 : index
      %393 = memref.load %arg5[%c5, %c0_287] : memref<8x3xf32, #tpu.memory_space<smem>>
      %394 = vector.broadcast %393 : f32 to vector<8x128xf32>
      %395 = arith.mulf %394, %277 : vector<8x128xf32>
      %c5_288 = arith.constant 5 : index
      %c1_289 = arith.constant 1 : index
      %396 = memref.load %arg5[%c5_288, %c1_289] : memref<8x3xf32, #tpu.memory_space<smem>>
      %397 = vector.broadcast %396 : f32 to vector<8x128xf32>
      %398 = arith.mulf %397, %279 : vector<8x128xf32>
      %399 = arith.addf %395, %398 : vector<8x128xf32>
      %c5_290 = arith.constant 5 : index
      %c2_291 = arith.constant 2 : index
      %400 = memref.load %arg5[%c5_290, %c2_291] : memref<8x3xf32, #tpu.memory_space<smem>>
      %401 = vector.broadcast %400 : f32 to vector<8x128xf32>
      %402 = arith.mulf %401, %281 : vector<8x128xf32>
      %403 = arith.addf %399, %402 : vector<8x128xf32>
      %c5_292 = arith.constant 5 : index
      %404 = memref.load %arg6[%c5_292] : memref<8xf32, #tpu.memory_space<smem>>
      %405 = vector.broadcast %404 : f32 to vector<8x128xf32>
      %406 = arith.addf %403, %405 : vector<8x128xf32>
      %cst_293 = arith.constant 0.000000e+00 : f32
      %407 = vector.broadcast %cst_293 : f32 to vector<8x128xf32>
      %408 = arith.maximumf %406, %407 : vector<8x128xf32>
      %c5_294 = arith.constant 5 : index
      %c0_295 = arith.constant 0 : index
      %409 = vector.load %arg4[%c5_294, %c0_295] : memref<8x128xf32, #tpu.memory_space<vmem>>, vector<1x128xf32>
      %410 = vector.shape_cast %409 : vector<1x128xf32> to vector<128xf32>
      %411 = vector.shape_cast %410 : vector<128xf32> to vector<1x128xf32>
      %412 = vector.broadcast %411 : vector<1x128xf32> to vector<8x128xf32>
      %413 = arith.mulf %408, %412 : vector<8x128xf32>
      %414 = arith.addf %392, %413 : vector<8x128xf32>
      %c6 = arith.constant 6 : index
      %c0_296 = arith.constant 0 : index
      %415 = memref.load %arg5[%c6, %c0_296] : memref<8x3xf32, #tpu.memory_space<smem>>
      %416 = vector.broadcast %415 : f32 to vector<8x128xf32>
      %417 = arith.mulf %416, %277 : vector<8x128xf32>
      %c6_297 = arith.constant 6 : index
      %c1_298 = arith.constant 1 : index
      %418 = memref.load %arg5[%c6_297, %c1_298] : memref<8x3xf32, #tpu.memory_space<smem>>
      %419 = vector.broadcast %418 : f32 to vector<8x128xf32>
      %420 = arith.mulf %419, %279 : vector<8x128xf32>
      %421 = arith.addf %417, %420 : vector<8x128xf32>
      %c6_299 = arith.constant 6 : index
      %c2_300 = arith.constant 2 : index
      %422 = memref.load %arg5[%c6_299, %c2_300] : memref<8x3xf32, #tpu.memory_space<smem>>
      %423 = vector.broadcast %422 : f32 to vector<8x128xf32>
      %424 = arith.mulf %423, %281 : vector<8x128xf32>
      %425 = arith.addf %421, %424 : vector<8x128xf32>
      %c6_301 = arith.constant 6 : index
      %426 = memref.load %arg6[%c6_301] : memref<8xf32, #tpu.memory_space<smem>>
      %427 = vector.broadcast %426 : f32 to vector<8x128xf32>
      %428 = arith.addf %425, %427 : vector<8x128xf32>
      %cst_302 = arith.constant 0.000000e+00 : f32
      %429 = vector.broadcast %cst_302 : f32 to vector<8x128xf32>
      %430 = arith.maximumf %428, %429 : vector<8x128xf32>
      %c6_303 = arith.constant 6 : index
      %c0_304 = arith.constant 0 : index
      %431 = vector.load %arg4[%c6_303, %c0_304] : memref<8x128xf32, #tpu.memory_space<vmem>>, vector<1x128xf32>
      %432 = vector.shape_cast %431 : vector<1x128xf32> to vector<128xf32>
      %433 = vector.shape_cast %432 : vector<128xf32> to vector<1x128xf32>
      %434 = vector.broadcast %433 : vector<1x128xf32> to vector<8x128xf32>
      %435 = arith.mulf %430, %434 : vector<8x128xf32>
      %436 = arith.addf %414, %435 : vector<8x128xf32>
      %c7 = arith.constant 7 : index
      %c0_305 = arith.constant 0 : index
      %437 = memref.load %arg5[%c7, %c0_305] : memref<8x3xf32, #tpu.memory_space<smem>>
      %438 = vector.broadcast %437 : f32 to vector<8x128xf32>
      %439 = arith.mulf %438, %277 : vector<8x128xf32>
      %c7_306 = arith.constant 7 : index
      %c1_307 = arith.constant 1 : index
      %440 = memref.load %arg5[%c7_306, %c1_307] : memref<8x3xf32, #tpu.memory_space<smem>>
      %441 = vector.broadcast %440 : f32 to vector<8x128xf32>
      %442 = arith.mulf %441, %279 : vector<8x128xf32>
      %443 = arith.addf %439, %442 : vector<8x128xf32>
      %c7_308 = arith.constant 7 : index
      %c2_309 = arith.constant 2 : index
      %444 = memref.load %arg5[%c7_308, %c2_309] : memref<8x3xf32, #tpu.memory_space<smem>>
      %445 = vector.broadcast %444 : f32 to vector<8x128xf32>
      %446 = arith.mulf %445, %281 : vector<8x128xf32>
      %447 = arith.addf %443, %446 : vector<8x128xf32>
      %c7_310 = arith.constant 7 : index
      %448 = memref.load %arg6[%c7_310] : memref<8xf32, #tpu.memory_space<smem>>
      %449 = vector.broadcast %448 : f32 to vector<8x128xf32>
      %450 = arith.addf %447, %449 : vector<8x128xf32>
      %cst_311 = arith.constant 0.000000e+00 : f32
      %451 = vector.broadcast %cst_311 : f32 to vector<8x128xf32>
      %452 = arith.maximumf %450, %451 : vector<8x128xf32>
      %c7_312 = arith.constant 7 : index
      %c0_313 = arith.constant 0 : index
      %453 = vector.load %arg4[%c7_312, %c0_313] : memref<8x128xf32, #tpu.memory_space<vmem>>, vector<1x128xf32>
      %454 = vector.shape_cast %453 : vector<1x128xf32> to vector<128xf32>
      %455 = vector.shape_cast %454 : vector<128xf32> to vector<1x128xf32>
      %456 = vector.broadcast %455 : vector<1x128xf32> to vector<8x128xf32>
      %457 = arith.mulf %452, %456 : vector<8x128xf32>
      %458 = arith.addf %436, %457 : vector<8x128xf32>
      %cst_314 = arith.constant dense<0.000000e+00> : vector<8xf32>
      %459 = vector.multi_reduction <add>, %458, %cst_314 [1] : vector<8x128xf32> to vector<8xf32>
      %460 = vector.shape_cast %459 : vector<8xf32> to vector<8x1xf32>
      %c0_315 = arith.constant 0 : index
      %461 = memref.load %arg7[%c0_315] : memref<1xf32, #tpu.memory_space<smem>>
      %462 = vector.broadcast %461 : f32 to vector<8x1xf32>
      %463 = arith.addf %460, %462 : vector<8x1xf32>
      %464 = arith.index_cast %275 : i32 to index
      %c0_316 = arith.constant 0 : index
      %465 = vector.load %arg8[%464, %c0_316] : memref<24x1xf32, #tpu.memory_space<vmem>>, vector<8x1xf32>
      tpu.vector_store %arg8[%464, %c0_316], %463 {strides = array<i32>} : memref<24x1xf32, #tpu.memory_space<vmem>>, vector<8x1xf32>,
    }
    %c3_i32_128 = arith.constant 3 : i32
    return
  }
  func.func @transform_2(%arg0: i32, %arg1: memref<3x24xi32, #tpu.memory_space<smem>>) -> (i32, i32) {
    %c0_i32 = arith.constant 0 : i32
    %c0_i32_0 = arith.constant 0 : i32
    %c0_i32_1 = arith.constant 0 : i32
    return %c0_i32, %c0_i32_0 : i32, i32
  }
  func.func @transform_3(%arg0: i32, %arg1: memref<3x24xi32, #tpu.memory_space<smem>>) -> (i32, i32) {
    %c0_i32 = arith.constant 0 : i32
    %c0_i32_0 = arith.constant 0 : i32
    %c0_i32_1 = arith.constant 0 : i32
    return %c0_i32, %c0_i32_0 : i32, i32
  }
  func.func @transform_4(%arg0: i32, %arg1: memref<3x24xi32, #tpu.memory_space<smem>>) -> i32 {
    %c0_i32 = arith.constant 0 : i32
    %c0_i32_0 = arith.constant 0 : i32
    return %c0_i32 : i32
  }
  func.func @transform_5(%arg0: i32, %arg1: memref<3x24xi32, #tpu.memory_space<smem>>) -> i32 {
    %c0_i32 = arith.constant 0 : i32
    %c0_i32_0 = arith.constant 0 : i32
    return %c0_i32 : i32
  }
  func.func @transform_6(%arg0: i32, %arg1: memref<3x24xi32, #tpu.memory_space<smem>>) -> (i32, i32) {
    %c0_i32 = arith.constant 0 : i32
    %c0_i32_0 = arith.constant 0 : i32
    return %arg0, %c0_i32 : i32, i32
  }
}

</mosaic_0001>

<llo_original>
// kernel: tpu_custom_call.1
$region0: #{tpu_custom_call.1}
  #allocation0 [shape = 'u32[]', space=smem, size = 0x4, offset = 0x4, fixed_abs, tag = 'smem constant byte address 0x4 - core index']
  #allocation1 [shape = 'u32[144,128]{1,0:T(1,128)}', space=vmem, size = 0x12000, scoped, tag = 'internal scratch']
  #allocation2 [shape = 'f32[24,128]{1,0:T(8,128)}', space=vmem, size = 0x3000, scoped, tag = 'scratch operand']
  #allocation3 [shape = 'f32[24,128]{1,0:T(8,128)}', space=vmem, size = 0x3000, scoped, tag = 'scratch operand']
  #allocation4 [shape = 'f32[24,128]{1,0:T(8,128)}', space=vmem, size = 0x3000, scoped, tag = 'scratch operand']
  #allocation5 [shape = 's32[2]{0}', space=sflag, size = 0x8, scoped, tag = 'scratch operand']
  #allocation6 [shape = 's32[1]{0}', space=sflag, size = 0x4, scoped, tag = 'scoped memory for tpu_custom_call.1']
  #allocation7 [shape = 'u8[2048]{0}', space=smem, size = 0x800, scoped, tag = 'prefetched SMEM operand 0']
  #allocation8 [shape = 'f32[1]{0:T(128)S(6)}', space=smem, size = 0x200, scoped, tag = 'scoped memory for tpu_custom_call.1']
  #allocation13 [shape = 's32[]', space=sflag, size = 0x4, offset = 0, fixed_abs, tag = 'sflag constant byte address 0x0 - dummy sync flag']
  #allocation14 [shape = 's32[]', space=sflag, size = 0x4, offset = 0, fixed_abs, tag = 'sflag constant byte address 0x0 - dummy sync flag']
  #allocation15 [shape = 'u32[]', space=smem, size = 0x4, offset = 0x44, fixed_abs, tag = 'smem constant byte address 0x44 - assertion arg 0']
  #allocation16 [shape = 'u32[]', space=smem, size = 0x4, offset = 0x48, fixed_abs, tag = 'smem constant byte address 0x48 - assertion arg 1']
  #allocation17 [shape = 's32[]', space=sflag, size = 0x4, offset = 0, fixed_abs, tag = 'sflag constant byte address 0x0 - dummy sync flag']
  #allocation18 [shape = 's32[]', space=sflag, size = 0x4, offset = 0, fixed_abs, tag = 'sflag constant byte address 0x0 - dummy sync flag']
  #allocation19 [shape = 's32[]', space=sflag, size = 0x4, offset = 0, fixed_abs, tag = 'sflag constant byte address 0x0 - dummy sync flag']
  #allocation20 [shape = 's32[]', space=sflag, size = 0x4, offset = 0, fixed_abs, tag = 'sflag constant byte address 0x0 - dummy sync flag']
  #allocation21 [shape = 's32[]', space=sflag, size = 0x4, offset = 0, fixed_abs, tag = 'sflag constant byte address 0x0 - dummy sync flag']
  #allocation22 [shape = 's32[]', space=sflag, size = 0x4, offset = 0, fixed_abs, tag = 'sflag constant byte address 0x0 - dummy sync flag']
  #allocation23 [shape = 's32[]', space=sflag, size = 0x4, offset = 0, fixed_abs, tag = 'sflag constant byte address 0x0 - dummy sync flag']
  #allocation24 [shape = 's32[]', space=sflag, size = 0x4, offset = 0, fixed_abs, tag = 'sflag constant byte address 0x0 - dummy sync flag']
  #allocation25 [shape = 's32[]', space=sflag, size = 0x4, offset = 0, fixed_abs, tag = 'sflag constant byte address 0x0 - dummy sync flag']
  #allocation26 [shape = 's32[]', space=sflag, size = 0x4, offset = 0, fixed_abs, tag = 'sflag constant byte address 0x0 - dummy sync flag']
  #allocation27 [shape = 's32[]', space=sflag, size = 0x4, offset = 0, fixed_abs, tag = 'sflag constant byte address 0x0 - dummy sync flag']
  #allocation28 [shape = 's32[]', space=sflag, size = 0x4, offset = 0, fixed_abs, tag = 'sflag constant byte address 0x0 - dummy sync flag']
  #allocation29 [shape = 's32[]', space=sflag, size = 0x4, offset = 0, fixed_abs, tag = 'sflag constant byte address 0x0 - dummy sync flag']
  #allocation30 [shape = 's32[]', space=sflag, size = 0x4, offset = 0, fixed_abs, tag = 'sflag constant byte address 0x0 - dummy sync flag']
  #allocation31 [shape = 's32[]', space=sflag, size = 0x4, offset = 0, fixed_abs, tag = 'sflag constant byte address 0x0 - dummy sync flag']
  #allocation32 [shape = 's32[]', space=sflag, size = 0x4, offset = 0, fixed_abs, tag = 'sflag constant byte address 0x0 - dummy sync flag']
  #allocation33 [shape = 's32[]', space=sflag, size = 0x4, offset = 0, fixed_abs, tag = 'sflag constant byte address 0x0 - dummy sync flag']
  #allocation34 [shape = 's32[]', space=sflag, size = 0x4, offset = 0, fixed_abs, tag = 'sflag constant byte address 0x0 - dummy sync flag']
  #allocation35 [shape = 's32[]', space=sflag, size = 0x4, offset = 0, fixed_abs, tag = 'sflag constant byte address 0x0 - dummy sync flag']
  #allocation36 [shape = 's32[]', space=sflag, size = 0x4, offset = 0, fixed_abs, tag = 'sflag constant byte address 0x0 - dummy sync flag']
  #allocation37 [shape = 's32[]', space=sflag, size = 0x4, offset = 0, fixed_abs, tag = 'sflag constant byte address 0x0 - dummy sync flag']
  #allocation38 [shape = 's32[]', space=sflag, size = 0x4, offset = 0, fixed_abs, tag = 'sflag constant byte address 0x0 - dummy sync flag']
  #allocation39 [shape = 's32[]', space=sflag, size = 0x4, offset = 0, fixed_abs, tag = 'sflag constant byte address 0x0 - dummy sync flag']
  #allocation40 [shape = 's32[]', space=sflag, size = 0x4, offset = 0, fixed_abs, tag = 'sflag constant byte address 0x0 - dummy sync flag']
  #allocation41 [shape = 's32[]', space=sflag, size = 0x4, offset = 0, fixed_abs, tag = 'sflag constant byte address 0x0 - dummy sync flag']
  #allocation42 [shape = 's32[]', space=sflag, size = 0x4, offset = 0, fixed_abs, tag = 'sflag constant byte address 0x0 - dummy sync flag']
  #allocation43 [shape = 's32[]', space=sflag, size = 0x4, offset = 0, fixed_abs, tag = 'sflag constant byte address 0x0 - dummy sync flag']
  #allocation44 [shape = 's32[]', space=sflag, size = 0x4, offset = 0, fixed_abs, tag = 'sflag constant byte address 0x0 - dummy sync flag']
  #allocation45 [shape = 's32[]', space=sflag, size = 0x4, offset = 0, fixed_abs, tag = 'sflag constant byte address 0x0 - dummy sync flag']
  #allocation46 [shape = 's32[]', space=sflag, size = 0x4, offset = 0, fixed_abs, tag = 'sflag constant byte address 0x0 - dummy sync flag']
  #allocation47 [shape = 's32[]', space=sflag, size = 0x4, offset = 0, fixed_abs, tag = 'sflag constant byte address 0x0 - dummy sync flag']
  #allocation48 [shape = 's32[]', space=sflag, size = 0x4, offset = 0, fixed_abs, tag = 'sflag constant byte address 0x0 - dummy sync flag']
  #allocation49 [shape = 's32[]', space=sflag, size = 0x4, offset = 0, fixed_abs, tag = 'sflag constant byte address 0x0 - dummy sync flag']
  #allocation50 [shape = 's32[]', space=sflag, size = 0x4, offset = 0, fixed_abs, tag = 'sflag constant byte address 0x0 - dummy sync flag']
  #allocation51 [shape = 's32[]', space=sflag, size = 0x4, offset = 0, fixed_abs, tag = 'sflag constant byte address 0x0 - dummy sync flag']
  #allocation52 [shape = 's32[]', space=sflag, size = 0x4, offset = 0, fixed_abs, tag = 'sflag constant byte address 0x0 - dummy sync flag']
  #allocation53 [shape = 's32[]', space=sflag, size = 0x4, offset = 0, fixed_abs, tag = 'sflag constant byte address 0x0 - dummy sync flag']
  #allocation54 [shape = 's32[]', space=sflag, size = 0x4, offset = 0, fixed_abs, tag = 'sflag constant byte address 0x0 - dummy sync flag']
  #allocation55 [shape = 's32[]', space=sflag, size = 0x4, offset = 0, fixed_abs, tag = 'sflag constant byte address 0x0 - dummy sync flag']
  #allocation56 [shape = 's32[]', space=sflag, size = 0x4, offset = 0, fixed_abs, tag = 'sflag constant byte address 0x0 - dummy sync flag']
  #allocation57 [shape = 's32[]', space=sflag, size = 0x4, offset = 0, fixed_abs, tag = 'sflag constant byte address 0x0 - dummy sync flag']
  #allocation58 [shape = 's32[]', space=sflag, size = 0x4, offset = 0, fixed_abs, tag = 'sflag constant byte address 0x0 - dummy sync flag']
  #allocation59 [shape = 's32[]', space=sflag, size = 0x4, offset = 0, fixed_abs, tag = 'sflag constant byte address 0x0 - dummy sync flag']
  #allocation60 [shape = 's32[]', space=sflag, size = 0x4, offset = 0, fixed_abs, tag = 'sflag constant byte address 0x0 - dummy sync flag']
  #allocation61 [shape = 's32[]', space=sflag, size = 0x4, offset = 0, fixed_abs, tag = 'sflag constant byte address 0x0 - dummy sync flag']
  #allocation62 [shape = 's32[]', space=sflag, size = 0x4, offset = 0, fixed_abs, tag = 'sflag constant byte address 0x0 - dummy sync flag']
  #allocation63 [shape = 's32[]', space=sflag, size = 0x4, offset = 0, fixed_abs, tag = 'sflag constant byte address 0x0 - dummy sync flag']
  #allocation64 [shape = 's32[]', space=sflag, size = 0x4, offset = 0, fixed_abs, tag = 'sflag constant byte address 0x0 - dummy sync flag']
  #allocation65 [shape = 's32[]', space=sflag, size = 0x4, offset = 0, fixed_abs, tag = 'sflag constant byte address 0x0 - dummy sync flag']
  #allocation66 [shape = 's32[]', space=sflag, size = 0x4, offset = 0, fixed_abs, tag = 'sflag constant byte address 0x0 - dummy sync flag']
  #allocation67 [shape = 's32[]', space=sflag, size = 0x4, offset = 0, fixed_abs, tag = 'sflag constant byte address 0x0 - dummy sync flag']
  #allocation68 [shape = 's32[]', space=sflag, size = 0x4, offset = 0, fixed_abs, tag = 'sflag constant byte address 0x0 - dummy sync flag']
  #allocation69 [shape = 's32[]', space=sflag, size = 0x4, offset = 0, fixed_abs, tag = 'sflag constant byte address 0x0 - dummy sync flag']
  #allocation70 [shape = 's32[]', space=sflag, size = 0x4, offset = 0, fixed_abs, tag = 'sflag constant byte address 0x0 - dummy sync flag']
  #allocation71 [shape = 's32[]', space=sflag, size = 0x4, offset = 0, fixed_abs, tag = 'sflag constant byte address 0x0 - dummy sync flag']
  #allocation72 [shape = 's32[]', space=sflag, size = 0x4, offset = 0, fixed_abs, tag = 'sflag constant byte address 0x0 - dummy sync flag']
  #allocation73 [shape = 's32[]', space=sflag, size = 0x4, offset = 0, fixed_abs, tag = 'sflag constant byte address 0x0 - dummy sync flag']
  #allocation74 [shape = 's32[]', space=sflag, size = 0x4, offset = 0, fixed_abs, tag = 'sflag constant byte address 0x0 - dummy sync flag']
  #allocation75 [shape = 's32[]', space=sflag, size = 0x4, offset = 0, fixed_abs, tag = 'sflag constant byte address 0x0 - dummy sync flag']
  #allocation76 [shape = 's32[]', space=sflag, size = 0x4, offset = 0, fixed_abs, tag = 'sflag constant byte address 0x0 - dummy sync flag']
  #allocation77 [shape = 's32[]', space=sflag, size = 0x4, offset = 0, fixed_abs, tag = 'sflag constant byte address 0x0 - dummy sync flag']
  #allocation78 [shape = 's32[]', space=sflag, size = 0x4, offset = 0, fixed_abs, tag = 'sflag constant byte address 0x0 - dummy sync flag']
  #allocation79 [shape = 's32[]', space=sflag, size = 0x4, offset = 0, fixed_abs, tag = 'sflag constant byte address 0x0 - dummy sync flag']
  #allocation80 [shape = 's32[]', space=sflag, size = 0x4, offset = 0, fixed_abs, tag = 'sflag constant byte address 0x0 - dummy sync flag']
  #allocation81 [shape = 's32[]', space=sflag, size = 0x4, offset = 0, fixed_abs, tag = 'sflag constant byte address 0x0 - dummy sync flag']
  #allocation82 [shape = 's32[]', space=sflag, size = 0x4, offset = 0, fixed_abs, tag = 'sflag constant byte address 0x0 - dummy sync flag']
  #allocation83 [shape = 's32[]', space=sflag, size = 0x4, offset = 0, fixed_abs, tag = 'sflag constant byte address 0x0 - dummy sync flag']
  #allocation84 [shape = 's32[]', space=sflag, size = 0x4, offset = 0, fixed_abs, tag = 'sflag constant byte address 0x0 - dummy sync flag']
  #allocation85 [shape = 's32[]', space=sflag, size = 0x4, offset = 0, fixed_abs, tag = 'sflag constant byte address 0x0 - dummy sync flag']
  #allocation86 [shape = 's32[]', space=sflag, size = 0x4, offset = 0, fixed_abs, tag = 'sflag constant byte address 0x0 - dummy sync flag']
  #allocation87 [shape = 's32[]', space=sflag, size = 0x4, offset = 0, fixed_abs, tag = 'sflag constant byte address 0x0 - dummy sync flag']
  #allocation88 [shape = 's32[]', space=sflag, size = 0x4, offset = 0, fixed_abs, tag = 'sflag constant byte address 0x0 - dummy sync flag']
  #allocation89 [shape = 's32[]', space=sflag, size = 0x4, offset = 0, fixed_abs, tag = 'sflag constant byte address 0x0 - dummy sync flag']
  #allocation90 [shape = 's32[]', space=sflag, size = 0x4, offset = 0, fixed_abs, tag = 'sflag constant byte address 0x0 - dummy sync flag']
  #allocation91 [shape = 's32[]', space=sflag, size = 0x4, offset = 0, fixed_abs, tag = 'sflag constant byte address 0x0 - dummy sync flag']
  #allocation92 [shape = 's32[]', space=sflag, size = 0x4, offset = 0, fixed_abs, tag = 'sflag constant byte address 0x0 - dummy sync flag']
  #allocation93 [shape = 's32[]', space=sflag, size = 0x4, offset = 0, fixed_abs, tag = 'sflag constant byte address 0x0 - dummy sync flag']
  #allocation94 [shape = 's32[]', space=sflag, size = 0x4, offset = 0, fixed_abs, tag = 'sflag constant byte address 0x0 - dummy sync flag']
  %s0 = inlined_call_operand.hbm [shape: s32[3,24], index: 0, kind: input, shape index: {}]
  %s1 = inlined_call_operand.hbm [shape: f32[32,128], index: 1, kind: input, shape index: {}]
  %s2 = inlined_call_operand.vmem [shape: f32[8,128], index: 2, kind: input, shape index: {}]
  %s3 = inlined_call_operand.vmem [shape: f32[8,128], index: 3, kind: input, shape index: {}]
  %s4 = inlined_call_operand.vmem [shape: f32[8,3], index: 4, kind: input, shape index: {}]
  %s5 = inlined_call_operand.vmem [shape: f32[8], index: 5, kind: input, shape index: {}]
  %s6 = inlined_call_operand.<no memory space> [shape: f32[1], index: 6, kind: input, shape index: {}]
  %s7 = inlined_call_operand.vmem [shape: f32[24,1], index: 7, kind: output, shape index: {}]
  %s8 = sld [smem:[#allocation0]]
  $region653: #{tpu_custom_call.1} parent=0
    _
  %s10 = ssub.s32 1, %s8
  %s11 = scalar_select 0, %s10, %s8
  %13 = dma.hbm_to_smem %s0, 64, [#allocation7], [#allocation6]
  %14 = sst [smem:[#allocation8]] %s6
  %15 = dma.done [#allocation6], 64
  %16 = sfence
  $region1: #{tpu_custom_call.1} parent=0
    #allocation9 [shape = 'u8[4096]{0}', space=smem, size = 0x1000, scoped, tag = 'input window, operand 4, single buffered']
    #allocation10 [shape = 's32[1]{0}', space=sflag, size = 0x4, scoped, tag = 'scoped memory for tpu_custom_call.1']
    #allocation11 [shape = 'u8[512]{0}', space=smem, size = 0x200, scoped, tag = 'input window, operand 5, single buffered']
    #allocation12 [shape = 's32[1]{0}', space=sflag, size = 0x4, scoped, tag = 'scoped memory for tpu_custom_call.1']
    %17 = vsyncpa [#allocation10], 0
    %18 = vsyncpa [#allocation12], 0
    // Predicated region
    $region2: #{tpu_custom_call.1} parent=1 // pred_check
      _
    $region3: #{tpu_custom_call.1} parent=1 // pred_check_branch
      %20 = sbr.rel (0) target = $region5
    $region4: #{tpu_custom_call.1} parent=1 // pred_region
      _
    $region5: #{tpu_custom_call.1} parent=1 // pred_fallthru
      _
    // Predicated region
    $region6: #{tpu_custom_call.1} parent=1 // pred_check
      _
    $region7: #{tpu_custom_call.1} parent=1 // pred_check_branch
      %22 = sbr.rel (0) target = $region9
    $region8: #{tpu_custom_call.1} parent=1 // pred_region
      %s24 = ssub.s32 128, 128
      %25 = vsyncadd [#allocation10], %s24
      %s27 = sshll.u32 %s4, 4
      %s28 = int_to_ptr.vmem [resolvable:$true] %s27
      %30 = dma.vmem_to_smem %s28, 128, [#allocation9], [#allocation10]
    $region9: #{tpu_custom_call.1} parent=1 // pred_fallthru
      _
    // Predicated region
    $region10: #{tpu_custom_call.1} parent=1 // pred_check
      _
    $region11: #{tpu_custom_call.1} parent=1 // pred_check_branch
      %32 = sbr.rel (0) target = $region13
    $region12: #{tpu_custom_call.1} parent=1 // pred_region
      %s34 = ssub.s32 16, 16
      %35 = vsyncadd [#allocation12], %s34
      %s37 = sshll.u32 %s5, 4
      %s38 = int_to_ptr.vmem [resolvable:$true] %s37
      %40 = dma.vmem_to_smem %s38, 16, [#allocation11], [#allocation12]
    $region13: #{tpu_custom_call.1} parent=1 // pred_fallthru
      _
    // Predicated region
    $region14: #{tpu_custom_call.1} parent=1 // pred_check
      _
    $region15: #{tpu_custom_call.1} parent=1 // pred_check_branch
      %42 = sbr.rel (0) target = $region17
    $region16: #{tpu_custom_call.1} parent=1 // pred_region
      _
    $region17: #{tpu_custom_call.1} parent=1 // pred_fallthru
      _
    // Predicated region
    $region18: #{tpu_custom_call.1} parent=1 // pred_check
      _
    $region19: #{tpu_custom_call.1} parent=1 // pred_check_branch
      %44 = sbr.rel (0) target = $region21
    $region20: #{tpu_custom_call.1} parent=1 // pred_region
      %45 = dma.done [#allocation10], 128
    $region21: #{tpu_custom_call.1} parent=1 // pred_fallthru
      _
    // Predicated region
    $region22: #{tpu_custom_call.1} parent=1 // pred_check
      _
    $region23: #{tpu_custom_call.1} parent=1 // pred_check_branch
      %47 = sbr.rel (0) target = $region25
    $region24: #{tpu_custom_call.1} parent=1 // pred_region
      %48 = dma.done [#allocation12], 16
    $region25: #{tpu_custom_call.1} parent=1 // pred_fallthru
      _
    %49 = sfence
    %s50 = smul.u32 0, 24
    %s51 = sld [smem:[#allocation7 + %s50]]
    %s52 = smul.addr %s51, 16
    %s53 = scalar_lea.hbm %s1, %s52
    // Predicated region
    $region26: #{tpu_custom_call.1} parent=1 // pred_check
      _
    $region27: #{tpu_custom_call.1} parent=1 // pred_check_branch
      %55 = sbr.rel target = $region29
    $region28: #{tpu_custom_call.1} parent=1 // pred_region
      %56 = sst [smem:[#allocation15]] [#allocation14]
      %57 = sst [smem:[#allocation16]] [#allocation13]
    $region29: #{tpu_custom_call.1} parent=1 // pred_fallthru
      _
    %59 = shalt.err (0)
    %s61 = sshll.u32 [#allocation2], 4
    %s62 = int_to_ptr.vmem [resolvable:$true] %s61
    %64 = dma.hbm_to_vmem [thread:$0]  %s53, 16, %s62, [#allocation5]
    %s65 = sshra.s32 %s50, 7
    %s66 = sand.u32 %s50, 127
    %s67 = sadd.s32 %s65, 1
    %s68 = smul.u32 %s67, 128
    %s69 = sshra.s32 %s50, 7
    %s70 = sand.u32 %s50, 127
    %s71 = sadd.s32 %s68, %s70
    %s72 = sld [smem:[#allocation7 + %s71]]
    %s73 = scalar_lea.vmem %s2, %s72
    %p75 = scmp.lt.u32.totalorder 1, 8
    %p76 = pneg %p75
    // Predicated region
    $region30: #{tpu_custom_call.1} parent=1 // pred_check
      _
    $region31: #{tpu_custom_call.1} parent=1 // pred_check_branch
      %78 = sbr.rel (%p75) target = $region33
    $region32: #{tpu_custom_call.1} parent=1 // pred_region
      %s93 = sand.u32 1, 7
      %p94 = scmp.eq.s32.totalorder %s93, 0
      %p95 = pneg %p94
      // Predicated region
      $region45: #{tpu_custom_call.1} parent=32 // pred_check
        _
      $region46: #{tpu_custom_call.1} parent=32 // pred_check_branch
        %97 = sbr.rel (%p94) target = $region48
      $region47: #{tpu_custom_call.1} parent=32 // pred_region
        %s98 = sand.u32 1, 7
        %s99 = ssub.s32 1, %s98
        %s100 = scalar_lea.vmem %s73, %s99
        %s101 = ssub.s32 1, %s98
        %s102 = scalar_lea.vmem [#allocation3], %s101
        %s103 = sshllo.u32 0, %s98
        loop: start=0, step=1, limit=1
        $region49: #{tpu_custom_call.1} parent=47 // loop_pre_header
          _
        $region50: #{tpu_custom_call.1} parent=47 // loop_header
          %s105 = sphi 0, %s109
          %p106 = scmp.ge.s32.totalorder %s105, 1
          %s110 = sphi %s100, %s100
          %s111 = sphi %s102, %s102
        $region51: #{tpu_custom_call.1} parent=47 // loop_header_branch
          %108 = sbr.rel (%p106) target = $region55
        $region52: #{tpu_custom_call.1} parent=47 // loop_body
          %v112 = vld [vmem:[%s110] sm:%s103]
          %113 = vst [vmem:[%s111] sm:%s103] %v112
        $region53: #{tpu_custom_call.1} parent=47 // loop_footer
          %s109 = sadd.s32 1, %s105
        $region54: #{tpu_custom_call.1} parent=47 // loop_footer_branch
          %104 = sbr.rel target = $region50
        $region55: #{tpu_custom_call.1} parent=47 // loop_exit
          _
      $region48: #{tpu_custom_call.1} parent=32 // pred_fallthru
        _
    $region33: #{tpu_custom_call.1} parent=1 // pred_fallthru
      _
    // Predicated region
    $region34: #{tpu_custom_call.1} parent=1 // pred_check
      %p79 = pneg %p75
    $region35: #{tpu_custom_call.1} parent=1 // pred_check_branch
      %81 = sbr.rel (%p79) target = $region37
    $region36: #{tpu_custom_call.1} parent=1 // pred_region
      %s82 = sshllo.u32 0, 1
      loop: start=0, step=1, limit=1
      $region38: #{tpu_custom_call.1} parent=36 // loop_pre_header
        _
      $region39: #{tpu_custom_call.1} parent=36 // loop_header
        %s84 = sphi 0, %s88
        %p85 = scmp.ge.s32.totalorder %s84, 1
        %s89 = sphi %s73, %s73
        %s90 = sphi [#allocation3], [#allocation3]
      $region40: #{tpu_custom_call.1} parent=36 // loop_header_branch
        %87 = sbr.rel (%p85) target = $region44
      $region41: #{tpu_custom_call.1} parent=36 // loop_body
        %v91 = vld [vmem:[%s89] sm:%s82]
        %92 = vst [vmem:[%s90] sm:%s82] %v91
      $region42: #{tpu_custom_call.1} parent=36 // loop_footer
        %s88 = sadd.s32 1, %s84
      $region43: #{tpu_custom_call.1} parent=36 // loop_footer_branch
        %83 = sbr.rel target = $region39
      $region44: #{tpu_custom_call.1} parent=36 // loop_exit
        _
    $region37: #{tpu_custom_call.1} parent=1 // pred_fallthru
      _
    // Predicated region
    $region56: #{tpu_custom_call.1} parent=1 // pred_check
      _
    $region57: #{tpu_custom_call.1} parent=1 // pred_check_branch
      %116 = sbr.rel (0) target = $region59
    $region58: #{tpu_custom_call.1} parent=1 // pred_region
      %117 = vsyncadd [#allocation5], 16
    $region59: #{tpu_custom_call.1} parent=1 // pred_fallthru
      _
    %s118 = sadd.s32 %s65, 2
    %s119 = smul.u32 %s118, 128
    %s120 = sadd.s32 %s119, %s70
    %s121 = sld [smem:[#allocation7 + %s120]]
    %s122 = smul.addr %s121, 16
    %s123 = scalar_lea.hbm %s1, %s122
    // Predicated region
    $region60: #{tpu_custom_call.1} parent=1 // pred_check
      _
    $region61: #{tpu_custom_call.1} parent=1 // pred_check_branch
      %125 = sbr.rel target = $region63
    $region62: #{tpu_custom_call.1} parent=1 // pred_region
      %126 = sst [smem:[#allocation15]] [#allocation19]
      %127 = sst [smem:[#allocation16]] [#allocation18]
    $region63: #{tpu_custom_call.1} parent=1 // pred_fallthru
      _
    %129 = shalt.err (0)
    %s131 = sshll.u32 [#allocation4], 4
    %s132 = int_to_ptr.vmem [resolvable:$true] %s131
    %134 = dma.hbm_to_vmem [thread:$0]  %s123, 16, %s132, [#allocation5]
    %s135 = sadd.s32 %s50, 1
    %s136 = sld [smem:[#allocation7 + %s135]]
    %s137 = smul.addr %s136, 16
    %s138 = scalar_lea.hbm %s1, %s137
    %s139 = scalar_lea.vmem [#allocation2], 1
    // Predicated region
    $region64: #{tpu_custom_call.1} parent=1 // pred_check
      _
    $region65: #{tpu_custom_call.1} parent=1 // pred_check_branch
      %141 = sbr.rel target = $region67
    $region66: #{tpu_custom_call.1} parent=1 // pred_region
      %142 = sst [smem:[#allocation15]] [#allocation21]
      %143 = sst [smem:[#allocation16]] [#allocation20]
    $region67: #{tpu_custom_call.1} parent=1 // pred_fallthru
      _
    %145 = shalt.err (0)
    %s147 = sshll.u32 %s139, 4
    %s148 = int_to_ptr.vmem [resolvable:$true] %s147
    %150 = dma.hbm_to_vmem [thread:$0]  %s138, 16, %s148, [#allocation5]
    %s151 = sshra.s32 %s135, 7
    %s152 = sand.u32 %s135, 127
    %s153 = sadd.s32 %s151, 1
    %s154 = smul.u32 %s153, 128
    %s155 = sshra.s32 %s135, 7
    %s156 = sand.u32 %s135, 127
    %s157 = sadd.s32 %s154, %s156
    %s158 = sld [smem:[#allocation7 + %s157]]
    %s159 = scalar_lea.vmem %s2, %s158
    %s160 = scalar_lea.vmem [#allocation3], 1
    %p162 = scmp.lt.u32.totalorder 1, 8
    %p163 = pneg %p162
    // Predicated region
    $region68: #{tpu_custom_call.1} parent=1 // pred_check
      _
    $region69: #{tpu_custom_call.1} parent=1 // pred_check_branch
      %165 = sbr.rel (%p162) target = $region71
    $region70: #{tpu_custom_call.1} parent=1 // pred_region
      %s180 = sand.u32 1, 7
      %p181 = scmp.eq.s32.totalorder %s180, 0
      %p182 = pneg %p181
      // Predicated region
      $region83: #{tpu_custom_call.1} parent=70 // pred_check
        _
      $region84: #{tpu_custom_call.1} parent=70 // pred_check_branch
        %184 = sbr.rel (%p181) target = $region86
      $region85: #{tpu_custom_call.1} parent=70 // pred_region
        %s185 = sand.u32 1, 7
        %s186 = ssub.s32 1, %s185
        %s187 = scalar_lea.vmem %s159, %s186
        %s188 = ssub.s32 1, %s185
        %s189 = scalar_lea.vmem %s160, %s188 [#allocation3]
        %s190 = sshllo.u32 0, %s185
        loop: start=0, step=1, limit=1
        $region87: #{tpu_custom_call.1} parent=85 // loop_pre_header
          _
        $region88: #{tpu_custom_call.1} parent=85 // loop_header
          %s192 = sphi 0, %s196
          %p193 = scmp.ge.s32.totalorder %s192, 1
          %s197 = sphi %s187, %s187
          %s198 = sphi %s189, %s189
        $region89: #{tpu_custom_call.1} parent=85 // loop_header_branch
          %195 = sbr.rel (%p193) target = $region93
        $region90: #{tpu_custom_call.1} parent=85 // loop_body
          %v199 = vld [vmem:[%s197] sm:%s190]
          %200 = vst [vmem:[%s198] sm:%s190] %v199
        $region91: #{tpu_custom_call.1} parent=85 // loop_footer
          %s196 = sadd.s32 1, %s192
        $region92: #{tpu_custom_call.1} parent=85 // loop_footer_branch
          %191 = sbr.rel target = $region88
        $region93: #{tpu_custom_call.1} parent=85 // loop_exit
          _
      $region86: #{tpu_custom_call.1} parent=70 // pred_fallthru
        _
    $region71: #{tpu_custom_call.1} parent=1 // pred_fallthru
      _
    // Predicated region
    $region72: #{tpu_custom_call.1} parent=1 // pred_check
      %p166 = pneg %p162
    $region73: #{tpu_custom_call.1} parent=1 // pred_check_branch
      %168 = sbr.rel (%p166) target = $region75
    $region74: #{tpu_custom_call.1} parent=1 // pred_region
      %s169 = sshllo.u32 0, 1
      loop: start=0, step=1, limit=1
      $region76: #{tpu_custom_call.1} parent=74 // loop_pre_header
        _
      $region77: #{tpu_custom_call.1} parent=74 // loop_header
        %s171 = sphi 0, %s175
        %p172 = scmp.ge.s32.totalorder %s171, 1
        %s176 = sphi %s159, %s159
        %s177 = sphi %s160, %s160
      $region78: #{tpu_custom_call.1} parent=74 // loop_header_branch
        %174 = sbr.rel (%p172) target = $region82
      $region79: #{tpu_custom_call.1} parent=74 // loop_body
        %v178 = vld [vmem:[%s176] sm:%s169]
        %179 = vst [vmem:[%s177] sm:%s169] %v178
      $region80: #{tpu_custom_call.1} parent=74 // loop_footer
        %s175 = sadd.s32 1, %s171
      $region81: #{tpu_custom_call.1} parent=74 // loop_footer_branch
        %170 = sbr.rel target = $region77
      $region82: #{tpu_custom_call.1} parent=74 // loop_exit
        _
    $region75: #{tpu_custom_call.1} parent=1 // pred_fallthru
      _
    // Predicated region
    $region94: #{tpu_custom_call.1} parent=1 // pred_check
      _
    $region95: #{tpu_custom_call.1} parent=1 // pred_check_branch
      %203 = sbr.rel (0) target = $region97
    $region96: #{tpu_custom_call.1} parent=1 // pred_region
      %204 = vsyncadd [#allocation5], 16
    $region97: #{tpu_custom_call.1} parent=1 // pred_fallthru
      _
    %s205 = sadd.s32 %s151, 2
    %s206 = smul.u32 %s205, 128
    %s207 = sadd.s32 %s206, %s156
    %s208 = sld [smem:[#allocation7 + %s207]]
    %s209 = smul.addr %s208, 16
    %s210 = scalar_lea.hbm %s1, %s209
    %s211 = scalar_lea.vmem [#allocation4], 1
    // Predicated region
    $region98: #{tpu_custom_call.1} parent=1 // pred_check
      _
    $region99: #{tpu_custom_call.1} parent=1 // pred_check_branch
      %213 = sbr.rel target = $region101
    $region100: #{tpu_custom_call.1} parent=1 // pred_region
      %214 = sst [smem:[#allocation15]] [#allocation24]
      %215 = sst [smem:[#allocation16]] [#allocation23]
    $region101: #{tpu_custom_call.1} parent=1 // pred_fallthru
      _
    %217 = shalt.err (0)
    %s219 = sshll.u32 %s211, 4
    %s220 = int_to_ptr.vmem [resolvable:$true] %s219
    %222 = dma.hbm_to_vmem [thread:$0]  %s210, 16, %s220, [#allocation5]
    %s223 = sadd.s32 %s50, 2
    %s224 = sld [smem:[#allocation7 + %s223]]
    %s225 = smul.addr %s224, 16
    %s226 = scalar_lea.hbm %s1, %s225
    %s227 = scalar_lea.vmem [#allocation2], 2
    // Predicated region
    $region102: #{tpu_custom_call.1} parent=1 // pred_check
      _
    $region103: #{tpu_custom_call.1} parent=1 // pred_check_branch
      %229 = sbr.rel target = $region105
    $region104: #{tpu_custom_call.1} parent=1 // pred_region
      %230 = sst [smem:[#allocation15]] [#allocation26]
      %231 = sst [smem:[#allocation16]] [#allocation25]
    $region105: #{tpu_custom_call.1} parent=1 // pred_fallthru
      _
    %233 = shalt.err (0)
    %s235 = sshll.u32 %s227, 4
    %s236 = int_to_ptr.vmem [resolvable:$true] %s235
    %238 = dma.hbm_to_vmem [thread:$0]  %s226, 16, %s236, [#allocation5]
    %s239 = sshra.s32 %s223, 7
    %s240 = sand.u32 %s223, 127
    %s241 = sadd.s32 %s239, 1
    %s242 = smul.u32 %s241, 128
    %s243 = sshra.s32 %s223, 7
    %s244 = sand.u32 %s223, 127
    %s245 = sadd.s32 %s242, %s244
    %s246 = sld [smem:[#allocation7 + %s245]]
    %s247 = scalar_lea.vmem %s2, %s246
    %s248 = scalar_lea.vmem [#allocation3], 2
    %p250 = scmp.lt.u32.totalorder 1, 8
    %p251 = pneg %p250
    // Predicated region
    $region106: #{tpu_custom_call.1} parent=1 // pred_check
      _
    $region107: #{tpu_custom_call.1} parent=1 // pred_check_branch
      %253 = sbr.rel (%p250) target = $region109
    $region108: #{tpu_custom_call.1} parent=1 // pred_region
      %s268 = sand.u32 1, 7
      %p269 = scmp.eq.s32.totalorder %s268, 0
      %p270 = pneg %p269
      // Predicated region
      $region121: #{tpu_custom_call.1} parent=108 // pred_check
        _
      $region122: #{tpu_custom_call.1} parent=108 // pred_check_branch
        %272 = sbr.rel (%p269) target = $region124
      $region123: #{tpu_custom_call.1} parent=108 // pred_region
        %s273 = sand.u32 1, 7
        %s274 = ssub.s32 1, %s273
        %s275 = scalar_lea.vmem %s247, %s274
        %s276 = ssub.s32 1, %s273
        %s277 = scalar_lea.vmem %s248, %s276 [#allocation3]
        %s278 = sshllo.u32 0, %s273
        loop: start=0, step=1, limit=1
        $region125: #{tpu_custom_call.1} parent=123 // loop_pre_header
          _
        $region126: #{tpu_custom_call.1} parent=123 // loop_header
          %s280 = sphi 0, %s284
          %p281 = scmp.ge.s32.totalorder %s280, 1
          %s285 = sphi %s275, %s275
          %s286 = sphi %s277, %s277
        $region127: #{tpu_custom_call.1} parent=123 // loop_header_branch
          %283 = sbr.rel (%p281) target = $region131
        $region128: #{tpu_custom_call.1} parent=123 // loop_body
          %v287 = vld [vmem:[%s285] sm:%s278]
          %288 = vst [vmem:[%s286] sm:%s278] %v287
        $region129: #{tpu_custom_call.1} parent=123 // loop_footer
          %s284 = sadd.s32 1, %s280
        $region130: #{tpu_custom_call.1} parent=123 // loop_footer_branch
          %279 = sbr.rel target = $region126
        $region131: #{tpu_custom_call.1} parent=123 // loop_exit
          _
      $region124: #{tpu_custom_call.1} parent=108 // pred_fallthru
        _
    $region109: #{tpu_custom_call.1} parent=1 // pred_fallthru
      _
    // Predicated region
    $region110: #{tpu_custom_call.1} parent=1 // pred_check
      %p254 = pneg %p250
    $region111: #{tpu_custom_call.1} parent=1 // pred_check_branch
      %256 = sbr.rel (%p254) target = $region113
    $region112: #{tpu_custom_call.1} parent=1 // pred_region
      %s257 = sshllo.u32 0, 1
      loop: start=0, step=1, limit=1
      $region114: #{tpu_custom_call.1} parent=112 // loop_pre_header
        _
      $region115: #{tpu_custom_call.1} parent=112 // loop_header
        %s259 = sphi 0, %s263
        %p260 = scmp.ge.s32.totalorder %s259, 1
        %s264 = sphi %s247, %s247
        %s265 = sphi %s248, %s248
      $region116: #{tpu_custom_call.1} parent=112 // loop_header_branch
        %262 = sbr.rel (%p260) target = $region120
      $region117: #{tpu_custom_call.1} parent=112 // loop_body
        %v266 = vld [vmem:[%s264] sm:%s257]
        %267 = vst [vmem:[%s265] sm:%s257] %v266
      $region118: #{tpu_custom_call.1} parent=112 // loop_footer
        %s263 = sadd.s32 1, %s259
      $region119: #{tpu_custom_call.1} parent=112 // loop_footer_branch
        %258 = sbr.rel target = $region115
      $region120: #{tpu_custom_call.1} parent=112 // loop_exit
        _
    $region113: #{tpu_custom_call.1} parent=1 // pred_fallthru
      _
    // Predicated region
    $region132: #{tpu_custom_call.1} parent=1 // pred_check
      _
    $region133: #{tpu_custom_call.1} parent=1 // pred_check_branch
      %291 = sbr.rel (0) target = $region135
    $region134: #{tpu_custom_call.1} parent=1 // pred_region
      %292 = vsyncadd [#allocation5], 16
    $region135: #{tpu_custom_call.1} parent=1 // pred_fallthru
      _
    %s293 = sadd.s32 %s239, 2
    %s294 = smul.u32 %s293, 128
    %s295 = sadd.s32 %s294, %s244
    %s296 = sld [smem:[#allocation7 + %s295]]
    %s297 = smul.addr %s296, 16
    %s298 = scalar_lea.hbm %s1, %s297
    %s299 = scalar_lea.vmem [#allocation4], 2
    // Predicated region
    $region136: #{tpu_custom_call.1} parent=1 // pred_check
      _
    $region137: #{tpu_custom_call.1} parent=1 // pred_check_branch
      %301 = sbr.rel target = $region139
    $region138: #{tpu_custom_call.1} parent=1 // pred_region
      %302 = sst [smem:[#allocation15]] [#allocation29]
      %303 = sst [smem:[#allocation16]] [#allocation28]
    $region139: #{tpu_custom_call.1} parent=1 // pred_fallthru
      _
    %305 = shalt.err (0)
    %s307 = sshll.u32 %s299, 4
    %s308 = int_to_ptr.vmem [resolvable:$true] %s307
    %310 = dma.hbm_to_vmem [thread:$0]  %s298, 16, %s308, [#allocation5]
    %s311 = sadd.s32 %s50, 3
    %s312 = sld [smem:[#allocation7 + %s311]]
    %s313 = smul.addr %s312, 16
    %s314 = scalar_lea.hbm %s1, %s313
    %s315 = scalar_lea.vmem [#allocation2], 3
    // Predicated region
    $region140: #{tpu_custom_call.1} parent=1 // pred_check
      _
    $region141: #{tpu_custom_call.1} parent=1 // pred_check_branch
      %317 = sbr.rel target = $region143
    $region142: #{tpu_custom_call.1} parent=1 // pred_region
      %318 = sst [smem:[#allocation15]] [#allocation31]
      %319 = sst [smem:[#allocation16]] [#allocation30]
    $region143: #{tpu_custom_call.1} parent=1 // pred_fallthru
      _
    %321 = shalt.err (0)
    %s323 = sshll.u32 %s315, 4
    %s324 = int_to_ptr.vmem [resolvable:$true] %s323
    %326 = dma.hbm_to_vmem [thread:$0]  %s314, 16, %s324, [#allocation5]
    %s327 = sshra.s32 %s311, 7
    %s328 = sand.u32 %s311, 127
    %s329 = sadd.s32 %s327, 1
    %s330 = smul.u32 %s329, 128
    %s331 = sshra.s32 %s311, 7
    %s332 = sand.u32 %s311, 127
    %s333 = sadd.s32 %s330, %s332
    %s334 = sld [smem:[#allocation7 + %s333]]
    %s335 = scalar_lea.vmem %s2, %s334
    %s336 = scalar_lea.vmem [#allocation3], 3
    %p338 = scmp.lt.u32.totalorder 1, 8
    %p339 = pneg %p338
    // Predicated region
    $region144: #{tpu_custom_call.1} parent=1 // pred_check
      _
    $region145: #{tpu_custom_call.1} parent=1 // pred_check_branch
      %341 = sbr.rel (%p338) target = $region147
    $region146: #{tpu_custom_call.1} parent=1 // pred_region
      %s356 = sand.u32 1, 7
      %p357 = scmp.eq.s32.totalorder %s356, 0
      %p358 = pneg %p357
      // Predicated region
      $region159: #{tpu_custom_call.1} parent=146 // pred_check
        _
      $region160: #{tpu_custom_call.1} parent=146 // pred_check_branch
        %360 = sbr.rel (%p357) target = $region162
      $region161: #{tpu_custom_call.1} parent=146 // pred_region
        %s361 = sand.u32 1, 7
        %s362 = ssub.s32 1, %s361
        %s363 = scalar_lea.vmem %s335, %s362
        %s364 = ssub.s32 1, %s361
        %s365 = scalar_lea.vmem %s336, %s364 [#allocation3]
        %s366 = sshllo.u32 0, %s361
        loop: start=0, step=1, limit=1
        $region163: #{tpu_custom_call.1} parent=161 // loop_pre_header
          _
        $region164: #{tpu_custom_call.1} parent=161 // loop_header
          %s368 = sphi 0, %s372
          %p369 = scmp.ge.s32.totalorder %s368, 1
          %s373 = sphi %s363, %s363
          %s374 = sphi %s365, %s365
        $region165: #{tpu_custom_call.1} parent=161 // loop_header_branch
          %371 = sbr.rel (%p369) target = $region169
        $region166: #{tpu_custom_call.1} parent=161 // loop_body
          %v375 = vld [vmem:[%s373] sm:%s366]
          %376 = vst [vmem:[%s374] sm:%s366] %v375
        $region167: #{tpu_custom_call.1} parent=161 // loop_footer
          %s372 = sadd.s32 1, %s368
        $region168: #{tpu_custom_call.1} parent=161 // loop_footer_branch
          %367 = sbr.rel target = $region164
        $region169: #{tpu_custom_call.1} parent=161 // loop_exit
          _
      $region162: #{tpu_custom_call.1} parent=146 // pred_fallthru
        _
    $region147: #{tpu_custom_call.1} parent=1 // pred_fallthru
      _
    // Predicated region
    $region148: #{tpu_custom_call.1} parent=1 // pred_check
      %p342 = pneg %p338
    $region149: #{tpu_custom_call.1} parent=1 // pred_check_branch
      %344 = sbr.rel (%p342) target = $region151
    $region150: #{tpu_custom_call.1} parent=1 // pred_region
      %s345 = sshllo.u32 0, 1
      loop: start=0, step=1, limit=1
      $region152: #{tpu_custom_call.1} parent=150 // loop_pre_header
        _
      $region153: #{tpu_custom_call.1} parent=150 // loop_header
        %s347 = sphi 0, %s351
        %p348 = scmp.ge.s32.totalorder %s347, 1
        %s352 = sphi %s335, %s335
        %s353 = sphi %s336, %s336
      $region154: #{tpu_custom_call.1} parent=150 // loop_header_branch
        %350 = sbr.rel (%p348) target = $region158
      $region155: #{tpu_custom_call.1} parent=150 // loop_body
        %v354 = vld [vmem:[%s352] sm:%s345]
        %355 = vst [vmem:[%s353] sm:%s345] %v354
      $region156: #{tpu_custom_call.1} parent=150 // loop_footer
        %s351 = sadd.s32 1, %s347
      $region157: #{tpu_custom_call.1} parent=150 // loop_footer_branch
        %346 = sbr.rel target = $region153
      $region158: #{tpu_custom_call.1} parent=150 // loop_exit
        _
    $region151: #{tpu_custom_call.1} parent=1 // pred_fallthru
      _
    // Predicated region
    $region170: #{tpu_custom_call.1} parent=1 // pred_check
      _
    $region171: #{tpu_custom_call.1} parent=1 // pred_check_branch
      %379 = sbr.rel (0) target = $region173
    $region172: #{tpu_custom_call.1} parent=1 // pred_region
      %380 = vsyncadd [#allocation5], 16
    $region173: #{tpu_custom_call.1} parent=1 // pred_fallthru
      _
    %s381 = sadd.s32 %s327, 2
    %s382 = smul.u32 %s381, 128
    %s383 = sadd.s32 %s382, %s332
    %s384 = sld [smem:[#allocation7 + %s383]]
    %s385 = smul.addr %s384, 16
    %s386 = scalar_lea.hbm %s1, %s385
    %s387 = scalar_lea.vmem [#allocation4], 3
    // Predicated region
    $region174: #{tpu_custom_call.1} parent=1 // pred_check
      _
    $region175: #{tpu_custom_call.1} parent=1 // pred_check_branch
      %389 = sbr.rel target = $region177
    $region176: #{tpu_custom_call.1} parent=1 // pred_region
      %390 = sst [smem:[#allocation15]] [#allocation34]
      %391 = sst [smem:[#allocation16]] [#allocation33]
    $region177: #{tpu_custom_call.1} parent=1 // pred_fallthru
      _
    %393 = shalt.err (0)
    %s395 = sshll.u32 %s387, 4
    %s396 = int_to_ptr.vmem [resolvable:$true] %s395
    %398 = dma.hbm_to_vmem [thread:$0]  %s386, 16, %s396, [#allocation5]
    %s399 = sadd.s32 %s50, 4
    %s400 = sld [smem:[#allocation7 + %s399]]
    %s401 = smul.addr %s400, 16
    %s402 = scalar_lea.hbm %s1, %s401
    %s403 = scalar_lea.vmem [#allocation2], 4
    // Predicated region
    $region178: #{tpu_custom_call.1} parent=1 // pred_check
      _
    $region179: #{tpu_custom_call.1} parent=1 // pred_check_branch
      %405 = sbr.rel target = $region181
    $region180: #{tpu_custom_call.1} parent=1 // pred_region
      %406 = sst [smem:[#allocation15]] [#allocation36]
      %407 = sst [smem:[#allocation16]] [#allocation35]
    $region181: #{tpu_custom_call.1} parent=1 // pred_fallthru
      _
    %409 = shalt.err (0)
    %s411 = sshll.u32 %s403, 4
    %s412 = int_to_ptr.vmem [resolvable:$true] %s411
    %414 = dma.hbm_to_vmem [thread:$0]  %s402, 16, %s412, [#allocation5]
    %s415 = sshra.s32 %s399, 7
    %s416 = sand.u32 %s399, 127
    %s417 = sadd.s32 %s415, 1
    %s418 = smul.u32 %s417, 128
    %s419 = sshra.s32 %s399, 7
    %s420 = sand.u32 %s399, 127
    %s421 = sadd.s32 %s418, %s420
    %s422 = sld [smem:[#allocation7 + %s421]]
    %s423 = scalar_lea.vmem %s2, %s422
    %s424 = scalar_lea.vmem [#allocation3], 4
    %p426 = scmp.lt.u32.totalorder 1, 8
    %p427 = pneg %p426
    // Predicated region
    $region182: #{tpu_custom_call.1} parent=1 // pred_check
      _
    $region183: #{tpu_custom_call.1} parent=1 // pred_check_branch
      %429 = sbr.rel (%p426) target = $region185
    $region184: #{tpu_custom_call.1} parent=1 // pred_region
      %s444 = sand.u32 1, 7
      %p445 = scmp.eq.s32.totalorder %s444, 0
      %p446 = pneg %p445
      // Predicated region
      $region197: #{tpu_custom_call.1} parent=184 // pred_check
        _
      $region198: #{tpu_custom_call.1} parent=184 // pred_check_branch
        %448 = sbr.rel (%p445) target = $region200
      $region199: #{tpu_custom_call.1} parent=184 // pred_region
        %s449 = sand.u32 1, 7
        %s450 = ssub.s32 1, %s449
        %s451 = scalar_lea.vmem %s423, %s450
        %s452 = ssub.s32 1, %s449
        %s453 = scalar_lea.vmem %s424, %s452 [#allocation3]
        %s454 = sshllo.u32 0, %s449
        loop: start=0, step=1, limit=1
        $region201: #{tpu_custom_call.1} parent=199 // loop_pre_header
          _
        $region202: #{tpu_custom_call.1} parent=199 // loop_header
          %s456 = sphi 0, %s460
          %p457 = scmp.ge.s32.totalorder %s456, 1
          %s461 = sphi %s451, %s451
          %s462 = sphi %s453, %s453
        $region203: #{tpu_custom_call.1} parent=199 // loop_header_branch
          %459 = sbr.rel (%p457) target = $region207
        $region204: #{tpu_custom_call.1} parent=199 // loop_body
          %v463 = vld [vmem:[%s461] sm:%s454]
          %464 = vst [vmem:[%s462] sm:%s454] %v463
        $region205: #{tpu_custom_call.1} parent=199 // loop_footer
          %s460 = sadd.s32 1, %s456
        $region206: #{tpu_custom_call.1} parent=199 // loop_footer_branch
          %455 = sbr.rel target = $region202
        $region207: #{tpu_custom_call.1} parent=199 // loop_exit
          _
      $region200: #{tpu_custom_call.1} parent=184 // pred_fallthru
        _
    $region185: #{tpu_custom_call.1} parent=1 // pred_fallthru
      _
    // Predicated region
    $region186: #{tpu_custom_call.1} parent=1 // pred_check
      %p430 = pneg %p426
    $region187: #{tpu_custom_call.1} parent=1 // pred_check_branch
      %432 = sbr.rel (%p430) target = $region189
    $region188: #{tpu_custom_call.1} parent=1 // pred_region
      %s433 = sshllo.u32 0, 1
      loop: start=0, step=1, limit=1
      $region190: #{tpu_custom_call.1} parent=188 // loop_pre_header
        _
      $region191: #{tpu_custom_call.1} parent=188 // loop_header
        %s435 = sphi 0, %s439
        %p436 = scmp.ge.s32.totalorder %s435, 1
        %s440 = sphi %s423, %s423
        %s441 = sphi %s424, %s424
      $region192: #{tpu_custom_call.1} parent=188 // loop_header_branch
        %438 = sbr.rel (%p436) target = $region196
      $region193: #{tpu_custom_call.1} parent=188 // loop_body
        %v442 = vld [vmem:[%s440] sm:%s433]
        %443 = vst [vmem:[%s441] sm:%s433] %v442
      $region194: #{tpu_custom_call.1} parent=188 // loop_footer
        %s439 = sadd.s32 1, %s435
      $region195: #{tpu_custom_call.1} parent=188 // loop_footer_branch
        %434 = sbr.rel target = $region191
      $region196: #{tpu_custom_call.1} parent=188 // loop_exit
        _
    $region189: #{tpu_custom_call.1} parent=1 // pred_fallthru
      _
    // Predicated region
    $region208: #{tpu_custom_call.1} parent=1 // pred_check
      _
    $region209: #{tpu_custom_call.1} parent=1 // pred_check_branch
      %467 = sbr.rel (0) target = $region211
    $region210: #{tpu_custom_call.1} parent=1 // pred_region
      %468 = vsyncadd [#allocation5], 16
    $region211: #{tpu_custom_call.1} parent=1 // pred_fallthru
      _
    %s469 = sadd.s32 %s415, 2
    %s470 = smul.u32 %s469, 128
    %s471 = sadd.s32 %s470, %s420
    %s472 = sld [smem:[#allocation7 + %s471]]
    %s473 = smul.addr %s472, 16
    %s474 = scalar_lea.hbm %s1, %s473
    %s475 = scalar_lea.vmem [#allocation4], 4
    // Predicated region
    $region212: #{tpu_custom_call.1} parent=1 // pred_check
      _
    $region213: #{tpu_custom_call.1} parent=1 // pred_check_branch
      %477 = sbr.rel target = $region215
    $region214: #{tpu_custom_call.1} parent=1 // pred_region
      %478 = sst [smem:[#allocation15]] [#allocation39]
      %479 = sst [smem:[#allocation16]] [#allocation38]
    $region215: #{tpu_custom_call.1} parent=1 // pred_fallthru
      _
    %481 = shalt.err (0)
    %s483 = sshll.u32 %s475, 4
    %s484 = int_to_ptr.vmem [resolvable:$true] %s483
    %486 = dma.hbm_to_vmem [thread:$0]  %s474, 16, %s484, [#allocation5]
    %s487 = sadd.s32 %s50, 5
    %s488 = sld [smem:[#allocation7 + %s487]]
    %s489 = smul.addr %s488, 16
    %s490 = scalar_lea.hbm %s1, %s489
    %s491 = scalar_lea.vmem [#allocation2], 5
    // Predicated region
    $region216: #{tpu_custom_call.1} parent=1 // pred_check
      _
    $region217: #{tpu_custom_call.1} parent=1 // pred_check_branch
      %493 = sbr.rel target = $region219
    $region218: #{tpu_custom_call.1} parent=1 // pred_region
      %494 = sst [smem:[#allocation15]] [#allocation41]
      %495 = sst [smem:[#allocation16]] [#allocation40]
    $region219: #{tpu_custom_call.1} parent=1 // pred_fallthru
      _
    %497 = shalt.err (0)
    %s499 = sshll.u32 %s491, 4
    %s500 = int_to_ptr.vmem [resolvable:$true] %s499
    %502 = dma.hbm_to_vmem [thread:$0]  %s490, 16, %s500, [#allocation5]
    %s503 = sshra.s32 %s487, 7
    %s504 = sand.u32 %s487, 127
    %s505 = sadd.s32 %s503, 1
    %s506 = smul.u32 %s505, 128
    %s507 = sshra.s32 %s487, 7
    %s508 = sand.u32 %s487, 127
    %s509 = sadd.s32 %s506, %s508
    %s510 = sld [smem:[#allocation7 + %s509]]
    %s511 = scalar_lea.vmem %s2, %s510
    %s512 = scalar_lea.vmem [#allocation3], 5
    %p514 = scmp.lt.u32.totalorder 1, 8
    %p515 = pneg %p514
    // Predicated region
    $region220: #{tpu_custom_call.1} parent=1 // pred_check
      _
    $region221: #{tpu_custom_call.1} parent=1 // pred_check_branch
      %517 = sbr.rel (%p514) target = $region223
    $region222: #{tpu_custom_call.1} parent=1 // pred_region
      %s532 = sand.u32 1, 7
      %p533 = scmp.eq.s32.totalorder %s532, 0
      %p534 = pneg %p533
      // Predicated region
      $region235: #{tpu_custom_call.1} parent=222 // pred_check
        _
      $region236: #{tpu_custom_call.1} parent=222 // pred_check_branch
        %536 = sbr.rel (%p533) target = $region238
      $region237: #{tpu_custom_call.1} parent=222 // pred_region
        %s537 = sand.u32 1, 7
        %s538 = ssub.s32 1, %s537
        %s539 = scalar_lea.vmem %s511, %s538
        %s540 = ssub.s32 1, %s537
        %s541 = scalar_lea.vmem %s512, %s540 [#allocation3]
        %s542 = sshllo.u32 0, %s537
        loop: start=0, step=1, limit=1
        $region239: #{tpu_custom_call.1} parent=237 // loop_pre_header
          _
        $region240: #{tpu_custom_call.1} parent=237 // loop_header
          %s544 = sphi 0, %s548
          %p545 = scmp.ge.s32.totalorder %s544, 1
          %s549 = sphi %s539, %s539
          %s550 = sphi %s541, %s541
        $region241: #{tpu_custom_call.1} parent=237 // loop_header_branch
          %547 = sbr.rel (%p545) target = $region245
        $region242: #{tpu_custom_call.1} parent=237 // loop_body
          %v551 = vld [vmem:[%s549] sm:%s542]
          %552 = vst [vmem:[%s550] sm:%s542] %v551
        $region243: #{tpu_custom_call.1} parent=237 // loop_footer
          %s548 = sadd.s32 1, %s544
        $region244: #{tpu_custom_call.1} parent=237 // loop_footer_branch
          %543 = sbr.rel target = $region240
        $region245: #{tpu_custom_call.1} parent=237 // loop_exit
          _
      $region238: #{tpu_custom_call.1} parent=222 // pred_fallthru
        _
    $region223: #{tpu_custom_call.1} parent=1 // pred_fallthru
      _
    // Predicated region
    $region224: #{tpu_custom_call.1} parent=1 // pred_check
      %p518 = pneg %p514
    $region225: #{tpu_custom_call.1} parent=1 // pred_check_branch
      %520 = sbr.rel (%p518) target = $region227
    $region226: #{tpu_custom_call.1} parent=1 // pred_region
      %s521 = sshllo.u32 0, 1
      loop: start=0, step=1, limit=1
      $region228: #{tpu_custom_call.1} parent=226 // loop_pre_header
        _
      $region229: #{tpu_custom_call.1} parent=226 // loop_header
        %s523 = sphi 0, %s527
        %p524 = scmp.ge.s32.totalorder %s523, 1
        %s528 = sphi %s511, %s511
        %s529 = sphi %s512, %s512
      $region230: #{tpu_custom_call.1} parent=226 // loop_header_branch
        %526 = sbr.rel (%p524) target = $region234
      $region231: #{tpu_custom_call.1} parent=226 // loop_body
        %v530 = vld [vmem:[%s528] sm:%s521]
        %531 = vst [vmem:[%s529] sm:%s521] %v530
      $region232: #{tpu_custom_call.1} parent=226 // loop_footer
        %s527 = sadd.s32 1, %s523
      $region233: #{tpu_custom_call.1} parent=226 // loop_footer_branch
        %522 = sbr.rel target = $region229
      $region234: #{tpu_custom_call.1} parent=226 // loop_exit
        _
    $region227: #{tpu_custom_call.1} parent=1 // pred_fallthru
      _
    // Predicated region
    $region246: #{tpu_custom_call.1} parent=1 // pred_check
      _
    $region247: #{tpu_custom_call.1} parent=1 // pred_check_branch
      %555 = sbr.rel (0) target = $region249
    $region248: #{tpu_custom_call.1} parent=1 // pred_region
      %556 = vsyncadd [#allocation5], 16
    $region249: #{tpu_custom_call.1} parent=1 // pred_fallthru
      _
    %s557 = sadd.s32 %s503, 2
    %s558 = smul.u32 %s557, 128
    %s559 = sadd.s32 %s558, %s508
    %s560 = sld [smem:[#allocation7 + %s559]]
    %s561 = smul.addr %s560, 16
    %s562 = scalar_lea.hbm %s1, %s561
    %s563 = scalar_lea.vmem [#allocation4], 5
    // Predicated region
    $region250: #{tpu_custom_call.1} parent=1 // pred_check
      _
    $region251: #{tpu_custom_call.1} parent=1 // pred_check_branch
      %565 = sbr.rel target = $region253
    $region252: #{tpu_custom_call.1} parent=1 // pred_region
      %566 = sst [smem:[#allocation15]] [#allocation44]
      %567 = sst [smem:[#allocation16]] [#allocation43]
    $region253: #{tpu_custom_call.1} parent=1 // pred_fallthru
      _
    %569 = shalt.err (0)
    %s571 = sshll.u32 %s563, 4
    %s572 = int_to_ptr.vmem [resolvable:$true] %s571
    %574 = dma.hbm_to_vmem [thread:$0]  %s562, 16, %s572, [#allocation5]
    %s575 = sadd.s32 %s50, 6
    %s576 = sld [smem:[#allocation7 + %s575]]
    %s577 = smul.addr %s576, 16
    %s578 = scalar_lea.hbm %s1, %s577
    %s579 = scalar_lea.vmem [#allocation2], 6
    // Predicated region
    $region254: #{tpu_custom_call.1} parent=1 // pred_check
      _
    $region255: #{tpu_custom_call.1} parent=1 // pred_check_branch
      %581 = sbr.rel target = $region257
    $region256: #{tpu_custom_call.1} parent=1 // pred_region
      %582 = sst [smem:[#allocation15]] [#allocation46]
      %583 = sst [smem:[#allocation16]] [#allocation45]
    $region257: #{tpu_custom_call.1} parent=1 // pred_fallthru
      _
    %585 = shalt.err (0)
    %s587 = sshll.u32 %s579, 4
    %s588 = int_to_ptr.vmem [resolvable:$true] %s587
    %590 = dma.hbm_to_vmem [thread:$0]  %s578, 16, %s588, [#allocation5]
    %s591 = sshra.s32 %s575, 7
    %s592 = sand.u32 %s575, 127
    %s593 = sadd.s32 %s591, 1
    %s594 = smul.u32 %s593, 128
    %s595 = sshra.s32 %s575, 7
    %s596 = sand.u32 %s575, 127
    %s597 = sadd.s32 %s594, %s596
    %s598 = sld [smem:[#allocation7 + %s597]]
    %s599 = scalar_lea.vmem %s2, %s598
    %s600 = scalar_lea.vmem [#allocation3], 6
    %p602 = scmp.lt.u32.totalorder 1, 8
    %p603 = pneg %p602
    // Predicated region
    $region258: #{tpu_custom_call.1} parent=1 // pred_check
      _
    $region259: #{tpu_custom_call.1} parent=1 // pred_check_branch
      %605 = sbr.rel (%p602) target = $region261
    $region260: #{tpu_custom_call.1} parent=1 // pred_region
      %s620 = sand.u32 1, 7
      %p621 = scmp.eq.s32.totalorder %s620, 0
      %p622 = pneg %p621
      // Predicated region
      $region273: #{tpu_custom_call.1} parent=260 // pred_check
        _
      $region274: #{tpu_custom_call.1} parent=260 // pred_check_branch
        %624 = sbr.rel (%p621) target = $region276
      $region275: #{tpu_custom_call.1} parent=260 // pred_region
        %s625 = sand.u32 1, 7
        %s626 = ssub.s32 1, %s625
        %s627 = scalar_lea.vmem %s599, %s626
        %s628 = ssub.s32 1, %s625
        %s629 = scalar_lea.vmem %s600, %s628 [#allocation3]
        %s630 = sshllo.u32 0, %s625
        loop: start=0, step=1, limit=1
        $region277: #{tpu_custom_call.1} parent=275 // loop_pre_header
          _
        $region278: #{tpu_custom_call.1} parent=275 // loop_header
          %s632 = sphi 0, %s636
          %p633 = scmp.ge.s32.totalorder %s632, 1
          %s637 = sphi %s627, %s627
          %s638 = sphi %s629, %s629
        $region279: #{tpu_custom_call.1} parent=275 // loop_header_branch
          %635 = sbr.rel (%p633) target = $region283
        $region280: #{tpu_custom_call.1} parent=275 // loop_body
          %v639 = vld [vmem:[%s637] sm:%s630]
          %640 = vst [vmem:[%s638] sm:%s630] %v639
        $region281: #{tpu_custom_call.1} parent=275 // loop_footer
          %s636 = sadd.s32 1, %s632
        $region282: #{tpu_custom_call.1} parent=275 // loop_footer_branch
          %631 = sbr.rel target = $region278
        $region283: #{tpu_custom_call.1} parent=275 // loop_exit
          _
      $region276: #{tpu_custom_call.1} parent=260 // pred_fallthru
        _
    $region261: #{tpu_custom_call.1} parent=1 // pred_fallthru
      _
    // Predicated region
    $region262: #{tpu_custom_call.1} parent=1 // pred_check
      %p606 = pneg %p602
    $region263: #{tpu_custom_call.1} parent=1 // pred_check_branch
      %608 = sbr.rel (%p606) target = $region265
    $region264: #{tpu_custom_call.1} parent=1 // pred_region
      %s609 = sshllo.u32 0, 1
      loop: start=0, step=1, limit=1
      $region266: #{tpu_custom_call.1} parent=264 // loop_pre_header
        _
      $region267: #{tpu_custom_call.1} parent=264 // loop_header
        %s611 = sphi 0, %s615
        %p612 = scmp.ge.s32.totalorder %s611, 1
        %s616 = sphi %s599, %s599
        %s617 = sphi %s600, %s600
      $region268: #{tpu_custom_call.1} parent=264 // loop_header_branch
        %614 = sbr.rel (%p612) target = $region272
      $region269: #{tpu_custom_call.1} parent=264 // loop_body
        %v618 = vld [vmem:[%s616] sm:%s609]
        %619 = vst [vmem:[%s617] sm:%s609] %v618
      $region270: #{tpu_custom_call.1} parent=264 // loop_footer
        %s615 = sadd.s32 1, %s611
      $region271: #{tpu_custom_call.1} parent=264 // loop_footer_branch
        %610 = sbr.rel target = $region267
      $region272: #{tpu_custom_call.1} parent=264 // loop_exit
        _
    $region265: #{tpu_custom_call.1} parent=1 // pred_fallthru
      _
    // Predicated region
    $region284: #{tpu_custom_call.1} parent=1 // pred_check
      _
    $region285: #{tpu_custom_call.1} parent=1 // pred_check_branch
      %643 = sbr.rel (0) target = $region287
    $region286: #{tpu_custom_call.1} parent=1 // pred_region
      %644 = vsyncadd [#allocation5], 16
    $region287: #{tpu_custom_call.1} parent=1 // pred_fallthru
      _
    %s645 = sadd.s32 %s591, 2
    %s646 = smul.u32 %s645, 128
    %s647 = sadd.s32 %s646, %s596
    %s648 = sld [smem:[#allocation7 + %s647]]
    %s649 = smul.addr %s648, 16
    %s650 = scalar_lea.hbm %s1, %s649
    %s651 = scalar_lea.vmem [#allocation4], 6
    // Predicated region
    $region288: #{tpu_custom_call.1} parent=1 // pred_check
      _
    $region289: #{tpu_custom_call.1} parent=1 // pred_check_branch
      %653 = sbr.rel target = $region291
    $region290: #{tpu_custom_call.1} parent=1 // pred_region
      %654 = sst [smem:[#allocation15]] [#allocation49]
      %655 = sst [smem:[#allocation16]] [#allocation48]
    $region291: #{tpu_custom_call.1} parent=1 // pred_fallthru
      _
    %657 = shalt.err (0)
    %s659 = sshll.u32 %s651, 4
    %s660 = int_to_ptr.vmem [resolvable:$true] %s659
    %662 = dma.hbm_to_vmem [thread:$0]  %s650, 16, %s660, [#allocation5]
    %s663 = sadd.s32 %s50, 7
    %s664 = sld [smem:[#allocation7 + %s663]]
    %s665 = smul.addr %s664, 16
    %s666 = scalar_lea.hbm %s1, %s665
    %s667 = scalar_lea.vmem [#allocation2], 7
    // Predicated region
    $region292: #{tpu_custom_call.1} parent=1 // pred_check
      _
    $region293: #{tpu_custom_call.1} parent=1 // pred_check_branch
      %669 = sbr.rel target = $region295
    $region294: #{tpu_custom_call.1} parent=1 // pred_region
      %670 = sst [smem:[#allocation15]] [#allocation51]
      %671 = sst [smem:[#allocation16]] [#allocation50]
    $region295: #{tpu_custom_call.1} parent=1 // pred_fallthru
      _
    %673 = shalt.err (0)
    %s675 = sshll.u32 %s667, 4
    %s676 = int_to_ptr.vmem [resolvable:$true] %s675
    %678 = dma.hbm_to_vmem [thread:$0]  %s666, 16, %s676, [#allocation5]
    %s679 = sshra.s32 %s663, 7
    %s680 = sand.u32 %s663, 127
    %s681 = sadd.s32 %s679, 1
    %s682 = smul.u32 %s681, 128
    %s683 = sshra.s32 %s663, 7
    %s684 = sand.u32 %s663, 127
    %s685 = sadd.s32 %s682, %s684
    %s686 = sld [smem:[#allocation7 + %s685]]
    %s687 = scalar_lea.vmem %s2, %s686
    %s688 = scalar_lea.vmem [#allocation3], 7
    %p690 = scmp.lt.u32.totalorder 1, 8
    %p691 = pneg %p690
    // Predicated region
    $region296: #{tpu_custom_call.1} parent=1 // pred_check
      _
    $region297: #{tpu_custom_call.1} parent=1 // pred_check_branch
      %693 = sbr.rel (%p690) target = $region299
    $region298: #{tpu_custom_call.1} parent=1 // pred_region
      %s708 = sand.u32 1, 7
      %p709 = scmp.eq.s32.totalorder %s708, 0
      %p710 = pneg %p709
      // Predicated region
      $region311: #{tpu_custom_call.1} parent=298 // pred_check
        _
      $region312: #{tpu_custom_call.1} parent=298 // pred_check_branch
        %712 = sbr.rel (%p709) target = $region314
      $region313: #{tpu_custom_call.1} parent=298 // pred_region
        %s713 = sand.u32 1, 7
        %s714 = ssub.s32 1, %s713
        %s715 = scalar_lea.vmem %s687, %s714
        %s716 = ssub.s32 1, %s713
        %s717 = scalar_lea.vmem %s688, %s716 [#allocation3]
        %s718 = sshllo.u32 0, %s713
        loop: start=0, step=1, limit=1
        $region315: #{tpu_custom_call.1} parent=313 // loop_pre_header
          _
        $region316: #{tpu_custom_call.1} parent=313 // loop_header
          %s720 = sphi 0, %s724
          %p721 = scmp.ge.s32.totalorder %s720, 1
          %s725 = sphi %s715, %s715
          %s726 = sphi %s717, %s717
        $region317: #{tpu_custom_call.1} parent=313 // loop_header_branch
          %723 = sbr.rel (%p721) target = $region321
        $region318: #{tpu_custom_call.1} parent=313 // loop_body
          %v727 = vld [vmem:[%s725] sm:%s718]
          %728 = vst [vmem:[%s726] sm:%s718] %v727
        $region319: #{tpu_custom_call.1} parent=313 // loop_footer
          %s724 = sadd.s32 1, %s720
        $region320: #{tpu_custom_call.1} parent=313 // loop_footer_branch
          %719 = sbr.rel target = $region316
        $region321: #{tpu_custom_call.1} parent=313 // loop_exit
          _
      $region314: #{tpu_custom_call.1} parent=298 // pred_fallthru
        _
    $region299: #{tpu_custom_call.1} parent=1 // pred_fallthru
      _
    // Predicated region
    $region300: #{tpu_custom_call.1} parent=1 // pred_check
      %p694 = pneg %p690
    $region301: #{tpu_custom_call.1} parent=1 // pred_check_branch
      %696 = sbr.rel (%p694) target = $region303
    $region302: #{tpu_custom_call.1} parent=1 // pred_region
      %s697 = sshllo.u32 0, 1
      loop: start=0, step=1, limit=1
      $region304: #{tpu_custom_call.1} parent=302 // loop_pre_header
        _
      $region305: #{tpu_custom_call.1} parent=302 // loop_header
        %s699 = sphi 0, %s703
        %p700 = scmp.ge.s32.totalorder %s699, 1
        %s704 = sphi %s687, %s687
        %s705 = sphi %s688, %s688
      $region306: #{tpu_custom_call.1} parent=302 // loop_header_branch
        %702 = sbr.rel (%p700) target = $region310
      $region307: #{tpu_custom_call.1} parent=302 // loop_body
        %v706 = vld [vmem:[%s704] sm:%s697]
        %707 = vst [vmem:[%s705] sm:%s697] %v706
      $region308: #{tpu_custom_call.1} parent=302 // loop_footer
        %s703 = sadd.s32 1, %s699
      $region309: #{tpu_custom_call.1} parent=302 // loop_footer_branch
        %698 = sbr.rel target = $region305
      $region310: #{tpu_custom_call.1} parent=302 // loop_exit
        _
    $region303: #{tpu_custom_call.1} parent=1 // pred_fallthru
      _
    // Predicated region
    $region322: #{tpu_custom_call.1} parent=1 // pred_check
      _
    $region323: #{tpu_custom_call.1} parent=1 // pred_check_branch
      %731 = sbr.rel (0) target = $region325
    $region324: #{tpu_custom_call.1} parent=1 // pred_region
      %732 = vsyncadd [#allocation5], 16
    $region325: #{tpu_custom_call.1} parent=1 // pred_fallthru
      _
    %s733 = sadd.s32 %s679, 2
    %s734 = smul.u32 %s733, 128
    %s735 = sadd.s32 %s734, %s684
    %s736 = sld [smem:[#allocation7 + %s735]]
    %s737 = smul.addr %s736, 16
    %s738 = scalar_lea.hbm %s1, %s737
    %s739 = scalar_lea.vmem [#allocation4], 7
    // Predicated region
    $region326: #{tpu_custom_call.1} parent=1 // pred_check
      _
    $region327: #{tpu_custom_call.1} parent=1 // pred_check_branch
      %741 = sbr.rel target = $region329
    $region328: #{tpu_custom_call.1} parent=1 // pred_region
      %742 = sst [smem:[#allocation15]] [#allocation54]
      %743 = sst [smem:[#allocation16]] [#allocation53]
    $region329: #{tpu_custom_call.1} parent=1 // pred_fallthru
      _
    %745 = shalt.err (0)
    %s747 = sshll.u32 %s739, 4
    %s748 = int_to_ptr.vmem [resolvable:$true] %s747
    %750 = dma.hbm_to_vmem [thread:$0]  %s738, 16, %s748, [#allocation5]
    loop: start=0, step=1, limit=3
    $region330: #{tpu_custom_call.1} parent=1 // loop_pre_header
      _
    $region331: #{tpu_custom_call.1} parent=1 // loop_header
      %s752 = sphi 0, %s756
      %p753 = scmp.ge.s32.totalorder %s752, 3
    $region332: #{tpu_custom_call.1} parent=1 // loop_header_branch
      %755 = sbr.rel (%p753) target = $region336
    $region333: #{tpu_custom_call.1} parent=1 // loop_body
      %s757 = sadd.s32 %s752, 1
      %p758 = scmp.lt.s32.totalorder %s757, 3
      // Predicated region
      $region337: #{tpu_custom_call.1} parent=333 // pred_check
        %p759 = pneg %p758
      $region338: #{tpu_custom_call.1} parent=333 // pred_check_branch
        %761 = sbr.rel (%p759) target = $region340
      $region339: #{tpu_custom_call.1} parent=333 // pred_region
        %p762 = scmp.lt.s32.totalorder %s757, 0
        %s763 = ssub.s32 0, %s757
        %s764 = scalar_select %p762, %s763, %s757
        %s765 = sand.u32 %s764, 1
        %s766 = ssub.s32 0, %s765
        %s767 = scalar_select %p762, %s766, %s765
        %p768 = scmp.ne.s32.totalorder %s767, 0
        %p769 = scmp.lt.s32.totalorder %s767, 0
        %p770 = pnand %p769, %p768
        %p771 = pneg %p770
        %s772 = sadd.s32 %s767, 2
        %s773 = scalar_select %p771, %s772, %s767
        %s774 = smul.u32 %s757, 8
        %s775 = sadd.s32 %s50, %s774
        %s776 = sld [smem:[#allocation7 + %s775]]
        %s777 = smul.addr %s776, 16
        %s778 = scalar_lea.hbm %s1, %s777
        %s779 = scalar_lea.vmem [#allocation2], %s774
        %s780 = scalar_lea.sflag [#allocation5], %s773
        // Predicated region
        $region341: #{tpu_custom_call.1} parent=339 // pred_check
          _
        $region342: #{tpu_custom_call.1} parent=339 // pred_check_branch
          %782 = sbr.rel target = $region344
        $region343: #{tpu_custom_call.1} parent=339 // pred_region
          %783 = sst [smem:[#allocation15]] [#allocation56]
          %784 = sst [smem:[#allocation16]] [#allocation55]
        $region344: #{tpu_custom_call.1} parent=339 // pred_fallthru
          _
        %786 = shalt.err (0)
        %s788 = sshll.u32 %s779, 4
        %s789 = int_to_ptr.vmem [resolvable:$true] %s788
        %791 = dma.hbm_to_vmem [thread:$0]  %s778, 16, %s789, %s780
        %s792 = sshra.s32 %s775, 7
        %s793 = sand.u32 %s775, 127
        %s794 = sadd.s32 %s792, 1
        %s795 = smul.u32 %s794, 128
        %s796 = sshra.s32 %s775, 7
        %s797 = sand.u32 %s775, 127
        %s798 = sadd.s32 %s795, %s797
        %s799 = sld [smem:[#allocation7 + %s798]]
        %s800 = scalar_lea.vmem %s2, %s799
        %s801 = scalar_lea.vmem [#allocation3], %s774
        %p803 = scmp.lt.u32.totalorder 1, 8
        %p804 = pneg %p803
        // Predicated region
        $region345: #{tpu_custom_call.1} parent=339 // pred_check
          _
        $region346: #{tpu_custom_call.1} parent=339 // pred_check_branch
          %806 = sbr.rel (%p803) target = $region348
        $region347: #{tpu_custom_call.1} parent=339 // pred_region
          %s821 = sand.u32 1, 7
          %p822 = scmp.eq.s32.totalorder %s821, 0
          %p823 = pneg %p822
          // Predicated region
          $region360: #{tpu_custom_call.1} parent=347 // pred_check
            _
          $region361: #{tpu_custom_call.1} parent=347 // pred_check_branch
            %825 = sbr.rel (%p822) target = $region363
          $region362: #{tpu_custom_call.1} parent=347 // pred_region
            %s826 = sand.u32 1, 7
            %s827 = ssub.s32 1, %s826
            %s828 = scalar_lea.vmem %s800, %s827
            %s829 = ssub.s32 1, %s826
            %s830 = scalar_lea.vmem %s801, %s829 [#allocation3]
            %s831 = sshllo.u32 0, %s826
            loop: start=0, step=1, limit=1
            $region364: #{tpu_custom_call.1} parent=362 // loop_pre_header
              _
            $region365: #{tpu_custom_call.1} parent=362 // loop_header
              %s833 = sphi 0, %s837
              %p834 = scmp.ge.s32.totalorder %s833, 1
              %s838 = sphi %s828, %s828
              %s839 = sphi %s830, %s830
            $region366: #{tpu_custom_call.1} parent=362 // loop_header_branch
              %836 = sbr.rel (%p834) target = $region370
            $region367: #{tpu_custom_call.1} parent=362 // loop_body
              %v840 = vld [vmem:[%s838] sm:%s831]
              %841 = vst [vmem:[%s839] sm:%s831] %v840
            $region368: #{tpu_custom_call.1} parent=362 // loop_footer
              %s837 = sadd.s32 1, %s833
            $region369: #{tpu_custom_call.1} parent=362 // loop_footer_branch
              %832 = sbr.rel target = $region365
            $region370: #{tpu_custom_call.1} parent=362 // loop_exit
              _
          $region363: #{tpu_custom_call.1} parent=347 // pred_fallthru
            _
        $region348: #{tpu_custom_call.1} parent=339 // pred_fallthru
          _
        // Predicated region
        $region349: #{tpu_custom_call.1} parent=339 // pred_check
          %p807 = pneg %p803
        $region350: #{tpu_custom_call.1} parent=339 // pred_check_branch
          %809 = sbr.rel (%p807) target = $region352
        $region351: #{tpu_custom_call.1} parent=339 // pred_region
          %s810 = sshllo.u32 0, 1
          loop: start=0, step=1, limit=1
          $region353: #{tpu_custom_call.1} parent=351 // loop_pre_header
            _
          $region354: #{tpu_custom_call.1} parent=351 // loop_header
            %s812 = sphi 0, %s816
            %p813 = scmp.ge.s32.totalorder %s812, 1
            %s817 = sphi %s800, %s800
            %s818 = sphi %s801, %s801
          $region355: #{tpu_custom_call.1} parent=351 // loop_header_branch
            %815 = sbr.rel (%p813) target = $region359
          $region356: #{tpu_custom_call.1} parent=351 // loop_body
            %v819 = vld [vmem:[%s817] sm:%s810]
            %820 = vst [vmem:[%s818] sm:%s810] %v819
          $region357: #{tpu_custom_call.1} parent=351 // loop_footer
            %s816 = sadd.s32 1, %s812
          $region358: #{tpu_custom_call.1} parent=351 // loop_footer_branch
            %811 = sbr.rel target = $region354
          $region359: #{tpu_custom_call.1} parent=351 // loop_exit
            _
        $region352: #{tpu_custom_call.1} parent=339 // pred_fallthru
          _
        // Predicated region
        $region371: #{tpu_custom_call.1} parent=339 // pred_check
          _
        $region372: #{tpu_custom_call.1} parent=339 // pred_check_branch
          %844 = sbr.rel (0) target = $region374
        $region373: #{tpu_custom_call.1} parent=339 // pred_region
          %845 = vsyncadd %s780, 16
        $region374: #{tpu_custom_call.1} parent=339 // pred_fallthru
          _
        %s846 = sadd.s32 %s792, 2
        %s847 = smul.u32 %s846, 128
        %s848 = sadd.s32 %s847, %s797
        %s849 = sld [smem:[#allocation7 + %s848]]
        %s850 = smul.addr %s849, 16
        %s851 = scalar_lea.hbm %s1, %s850
        %s852 = scalar_lea.vmem [#allocation4], %s774
        // Predicated region
        $region375: #{tpu_custom_call.1} parent=339 // pred_check
          _
        $region376: #{tpu_custom_call.1} parent=339 // pred_check_branch
          %854 = sbr.rel target = $region378
        $region377: #{tpu_custom_call.1} parent=339 // pred_region
          %855 = sst [smem:[#allocation15]] [#allocation59]
          %856 = sst [smem:[#allocation16]] [#allocation58]
        $region378: #{tpu_custom_call.1} parent=339 // pred_fallthru
          _
        %858 = shalt.err (0)
        %s860 = sshll.u32 %s852, 4
        %s861 = int_to_ptr.vmem [resolvable:$true] %s860
        %863 = dma.hbm_to_vmem [thread:$0]  %s851, 16, %s861, %s780
        %s864 = sadd.s32 %s775, 1
        %s865 = sadd.s32 %s774, 1
        %s866 = sld [smem:[#allocation7 + %s864]]
        %s867 = smul.addr %s866, 16
        %s868 = scalar_lea.hbm %s1, %s867
        %s869 = scalar_lea.vmem [#allocation2], %s865
        // Predicated region
        $region379: #{tpu_custom_call.1} parent=339 // pred_check
          _
        $region380: #{tpu_custom_call.1} parent=339 // pred_check_branch
          %871 = sbr.rel target = $region382
        $region381: #{tpu_custom_call.1} parent=339 // pred_region
          %872 = sst [smem:[#allocation15]] [#allocation61]
          %873 = sst [smem:[#allocation16]] [#allocation60]
        $region382: #{tpu_custom_call.1} parent=339 // pred_fallthru
          _
        %875 = shalt.err (0)
        %s877 = sshll.u32 %s869, 4
        %s878 = int_to_ptr.vmem [resolvable:$true] %s877
        %880 = dma.hbm_to_vmem [thread:$0]  %s868, 16, %s878, %s780
        %s881 = sshra.s32 %s864, 7
        %s882 = sand.u32 %s864, 127
        %s883 = sadd.s32 %s881, 1
        %s884 = smul.u32 %s883, 128
        %s885 = sshra.s32 %s864, 7
        %s886 = sand.u32 %s864, 127
        %s887 = sadd.s32 %s884, %s886
        %s888 = sld [smem:[#allocation7 + %s887]]
        %s889 = scalar_lea.vmem %s2, %s888
        %s890 = scalar_lea.vmem [#allocation3], %s865
        %p892 = scmp.lt.u32.totalorder 1, 8
        %p893 = pneg %p892
        // Predicated region
        $region383: #{tpu_custom_call.1} parent=339 // pred_check
          _
        $region384: #{tpu_custom_call.1} parent=339 // pred_check_branch
          %895 = sbr.rel (%p892) target = $region386
        $region385: #{tpu_custom_call.1} parent=339 // pred_region
          %s910 = sand.u32 1, 7
          %p911 = scmp.eq.s32.totalorder %s910, 0
          %p912 = pneg %p911
          // Predicated region
          $region398: #{tpu_custom_call.1} parent=385 // pred_check
            _
          $region399: #{tpu_custom_call.1} parent=385 // pred_check_branch
            %914 = sbr.rel (%p911) target = $region401
          $region400: #{tpu_custom_call.1} parent=385 // pred_region
            %s915 = sand.u32 1, 7
            %s916 = ssub.s32 1, %s915
            %s917 = scalar_lea.vmem %s889, %s916
            %s918 = ssub.s32 1, %s915
            %s919 = scalar_lea.vmem %s890, %s918 [#allocation3]
            %s920 = sshllo.u32 0, %s915
            loop: start=0, step=1, limit=1
            $region402: #{tpu_custom_call.1} parent=400 // loop_pre_header
              _
            $region403: #{tpu_custom_call.1} parent=400 // loop_header
              %s922 = sphi 0, %s926
              %p923 = scmp.ge.s32.totalorder %s922, 1
              %s927 = sphi %s917, %s917
              %s928 = sphi %s919, %s919
            $region404: #{tpu_custom_call.1} parent=400 // loop_header_branch
              %925 = sbr.rel (%p923) target = $region408
            $region405: #{tpu_custom_call.1} parent=400 // loop_body
              %v929 = vld [vmem:[%s927] sm:%s920]
              %930 = vst [vmem:[%s928] sm:%s920] %v929
            $region406: #{tpu_custom_call.1} parent=400 // loop_footer
              %s926 = sadd.s32 1, %s922
            $region407: #{tpu_custom_call.1} parent=400 // loop_footer_branch
              %921 = sbr.rel target = $region403
            $region408: #{tpu_custom_call.1} parent=400 // loop_exit
              _
          $region401: #{tpu_custom_call.1} parent=385 // pred_fallthru
            _
        $region386: #{tpu_custom_call.1} parent=339 // pred_fallthru
          _
        // Predicated region
        $region387: #{tpu_custom_call.1} parent=339 // pred_check
          %p896 = pneg %p892
        $region388: #{tpu_custom_call.1} parent=339 // pred_check_branch
          %898 = sbr.rel (%p896) target = $region390
        $region389: #{tpu_custom_call.1} parent=339 // pred_region
          %s899 = sshllo.u32 0, 1
          loop: start=0, step=1, limit=1
          $region391: #{tpu_custom_call.1} parent=389 // loop_pre_header
            _
          $region392: #{tpu_custom_call.1} parent=389 // loop_header
            %s901 = sphi 0, %s905
            %p902 = scmp.ge.s32.totalorder %s901, 1
            %s906 = sphi %s889, %s889
            %s907 = sphi %s890, %s890
          $region393: #{tpu_custom_call.1} parent=389 // loop_header_branch
            %904 = sbr.rel (%p902) target = $region397
          $region394: #{tpu_custom_call.1} parent=389 // loop_body
            %v908 = vld [vmem:[%s906] sm:%s899]
            %909 = vst [vmem:[%s907] sm:%s899] %v908
          $region395: #{tpu_custom_call.1} parent=389 // loop_footer
            %s905 = sadd.s32 1, %s901
          $region396: #{tpu_custom_call.1} parent=389 // loop_footer_branch
            %900 = sbr.rel target = $region392
          $region397: #{tpu_custom_call.1} parent=389 // loop_exit
            _
        $region390: #{tpu_custom_call.1} parent=339 // pred_fallthru
          _
        // Predicated region
        $region409: #{tpu_custom_call.1} parent=339 // pred_check
          _
        $region410: #{tpu_custom_call.1} parent=339 // pred_check_branch
          %933 = sbr.rel (0) target = $region412
        $region411: #{tpu_custom_call.1} parent=339 // pred_region
          %934 = vsyncadd %s780, 16
        $region412: #{tpu_custom_call.1} parent=339 // pred_fallthru
          _
        %s935 = sadd.s32 %s881, 2
        %s936 = smul.u32 %s935, 128
        %s937 = sadd.s32 %s936, %s886
        %s938 = sld [smem:[#allocation7 + %s937]]
        %s939 = smul.addr %s938, 16
        %s940 = scalar_lea.hbm %s1, %s939
        %s941 = scalar_lea.vmem [#allocation4], %s865
        // Predicated region
        $region413: #{tpu_custom_call.1} parent=339 // pred_check
          _
        $region414: #{tpu_custom_call.1} parent=339 // pred_check_branch
          %943 = sbr.rel target = $region416
        $region415: #{tpu_custom_call.1} parent=339 // pred_region
          %944 = sst [smem:[#allocation15]] [#allocation64]
          %945 = sst [smem:[#allocation16]] [#allocation63]
        $region416: #{tpu_custom_call.1} parent=339 // pred_fallthru
          _
        %947 = shalt.err (0)
        %s949 = sshll.u32 %s941, 4
        %s950 = int_to_ptr.vmem [resolvable:$true] %s949
        %952 = dma.hbm_to_vmem [thread:$0]  %s940, 16, %s950, %s780
        %s953 = sadd.s32 %s775, 2
        %s954 = sadd.s32 %s774, 2
        %s955 = sld [smem:[#allocation7 + %s953]]
        %s956 = smul.addr %s955, 16
        %s957 = scalar_lea.hbm %s1, %s956
        %s958 = scalar_lea.vmem [#allocation2], %s954
        // Predicated region
        $region417: #{tpu_custom_call.1} parent=339 // pred_check
          _
        $region418: #{tpu_custom_call.1} parent=339 // pred_check_branch
          %960 = sbr.rel target = $region420
        $region419: #{tpu_custom_call.1} parent=339 // pred_region
          %961 = sst [smem:[#allocation15]] [#allocation66]
          %962 = sst [smem:[#allocation16]] [#allocation65]
        $region420: #{tpu_custom_call.1} parent=339 // pred_fallthru
          _
        %964 = shalt.err (0)
        %s966 = sshll.u32 %s958, 4
        %s967 = int_to_ptr.vmem [resolvable:$true] %s966
        %969 = dma.hbm_to_vmem [thread:$0]  %s957, 16, %s967, %s780
        %s970 = sshra.s32 %s953, 7
        %s971 = sand.u32 %s953, 127
        %s972 = sadd.s32 %s970, 1
        %s973 = smul.u32 %s972, 128
        %s974 = sshra.s32 %s953, 7
        %s975 = sand.u32 %s953, 127
        %s976 = sadd.s32 %s973, %s975
        %s977 = sld [smem:[#allocation7 + %s976]]
        %s978 = scalar_lea.vmem %s2, %s977
        %s979 = scalar_lea.vmem [#allocation3], %s954
        %p981 = scmp.lt.u32.totalorder 1, 8
        %p982 = pneg %p981
        // Predicated region
        $region421: #{tpu_custom_call.1} parent=339 // pred_check
          _
        $region422: #{tpu_custom_call.1} parent=339 // pred_check_branch
          %984 = sbr.rel (%p981) target = $region424
        $region423: #{tpu_custom_call.1} parent=339 // pred_region
          %s999 = sand.u32 1, 7
          %p1000 = scmp.eq.s32.totalorder %s999, 0
          %p1001 = pneg %p1000
          // Predicated region
          $region436: #{tpu_custom_call.1} parent=423 // pred_check
            _
          $region437: #{tpu_custom_call.1} parent=423 // pred_check_branch
            %1003 = sbr.rel (%p1000) target = $region439
          $region438: #{tpu_custom_call.1} parent=423 // pred_region
            %s1004 = sand.u32 1, 7
            %s1005 = ssub.s32 1, %s1004
            %s1006 = scalar_lea.vmem %s978, %s1005
            %s1007 = ssub.s32 1, %s1004
            %s1008 = scalar_lea.vmem %s979, %s1007 [#allocation3]
            %s1009 = sshllo.u32 0, %s1004
            loop: start=0, step=1, limit=1
            $region440: #{tpu_custom_call.1} parent=438 // loop_pre_header
              _
            $region441: #{tpu_custom_call.1} parent=438 // loop_header
              %s1011 = sphi 0, %s1015
              %p1012 = scmp.ge.s32.totalorder %s1011, 1
              %s1016 = sphi %s1006, %s1006
              %s1017 = sphi %s1008, %s1008
            $region442: #{tpu_custom_call.1} parent=438 // loop_header_branch
              %1014 = sbr.rel (%p1012) target = $region446
            $region443: #{tpu_custom_call.1} parent=438 // loop_body
              %v1018 = vld [vmem:[%s1016] sm:%s1009]
              %1019 = vst [vmem:[%s1017] sm:%s1009] %v1018
            $region444: #{tpu_custom_call.1} parent=438 // loop_footer
              %s1015 = sadd.s32 1, %s1011
            $region445: #{tpu_custom_call.1} parent=438 // loop_footer_branch
              %1010 = sbr.rel target = $region441
            $region446: #{tpu_custom_call.1} parent=438 // loop_exit
              _
          $region439: #{tpu_custom_call.1} parent=423 // pred_fallthru
            _
        $region424: #{tpu_custom_call.1} parent=339 // pred_fallthru
          _
        // Predicated region
        $region425: #{tpu_custom_call.1} parent=339 // pred_check
          %p985 = pneg %p981
        $region426: #{tpu_custom_call.1} parent=339 // pred_check_branch
          %987 = sbr.rel (%p985) target = $region428
        $region427: #{tpu_custom_call.1} parent=339 // pred_region
          %s988 = sshllo.u32 0, 1
          loop: start=0, step=1, limit=1
          $region429: #{tpu_custom_call.1} parent=427 // loop_pre_header
            _
          $region430: #{tpu_custom_call.1} parent=427 // loop_header
            %s990 = sphi 0, %s994
            %p991 = scmp.ge.s32.totalorder %s990, 1
            %s995 = sphi %s978, %s978
            %s996 = sphi %s979, %s979
          $region431: #{tpu_custom_call.1} parent=427 // loop_header_branch
            %993 = sbr.rel (%p991) target = $region435
          $region432: #{tpu_custom_call.1} parent=427 // loop_body
            %v997 = vld [vmem:[%s995] sm:%s988]
            %998 = vst [vmem:[%s996] sm:%s988] %v997
          $region433: #{tpu_custom_call.1} parent=427 // loop_footer
            %s994 = sadd.s32 1, %s990
          $region434: #{tpu_custom_call.1} parent=427 // loop_footer_branch
            %989 = sbr.rel target = $region430
          $region435: #{tpu_custom_call.1} parent=427 // loop_exit
            _
        $region428: #{tpu_custom_call.1} parent=339 // pred_fallthru
          _
        // Predicated region
        $region447: #{tpu_custom_call.1} parent=339 // pred_check
          _
        $region448: #{tpu_custom_call.1} parent=339 // pred_check_branch
          %1022 = sbr.rel (0) target = $region450
        $region449: #{tpu_custom_call.1} parent=339 // pred_region
          %1023 = vsyncadd %s780, 16
        $region450: #{tpu_custom_call.1} parent=339 // pred_fallthru
          _
        %s1024 = sadd.s32 %s970, 2
        %s1025 = smul.u32 %s1024, 128
        %s1026 = sadd.s32 %s1025, %s975
        %s1027 = sld [smem:[#allocation7 + %s1026]]
        %s1028 = smul.addr %s1027, 16
        %s1029 = scalar_lea.hbm %s1, %s1028
        %s1030 = scalar_lea.vmem [#allocation4], %s954
        // Predicated region
        $region451: #{tpu_custom_call.1} parent=339 // pred_check
          _
        $region452: #{tpu_custom_call.1} parent=339 // pred_check_branch
          %1032 = sbr.rel target = $region454
        $region453: #{tpu_custom_call.1} parent=339 // pred_region
          %1033 = sst [smem:[#allocation15]] [#allocation69]
          %1034 = sst [smem:[#allocation16]] [#allocation68]
        $region454: #{tpu_custom_call.1} parent=339 // pred_fallthru
          _
        %1036 = shalt.err (0)
        %s1038 = sshll.u32 %s1030, 4
        %s1039 = int_to_ptr.vmem [resolvable:$true] %s1038
        %1041 = dma.hbm_to_vmem [thread:$0]  %s1029, 16, %s1039, %s780
        %s1042 = sadd.s32 %s775, 3
        %s1043 = sadd.s32 %s774, 3
        %s1044 = sld [smem:[#allocation7 + %s1042]]
        %s1045 = smul.addr %s1044, 16
        %s1046 = scalar_lea.hbm %s1, %s1045
        %s1047 = scalar_lea.vmem [#allocation2], %s1043
        // Predicated region
        $region455: #{tpu_custom_call.1} parent=339 // pred_check
          _
        $region456: #{tpu_custom_call.1} parent=339 // pred_check_branch
          %1049 = sbr.rel target = $region458
        $region457: #{tpu_custom_call.1} parent=339 // pred_region
          %1050 = sst [smem:[#allocation15]] [#allocation71]
          %1051 = sst [smem:[#allocation16]] [#allocation70]
        $region458: #{tpu_custom_call.1} parent=339 // pred_fallthru
          _
        %1053 = shalt.err (0)
        %s1055 = sshll.u32 %s1047, 4
        %s1056 = int_to_ptr.vmem [resolvable:$true] %s1055
        %1058 = dma.hbm_to_vmem [thread:$0]  %s1046, 16, %s1056, %s780
        %s1059 = sshra.s32 %s1042, 7
        %s1060 = sand.u32 %s1042, 127
        %s1061 = sadd.s32 %s1059, 1
        %s1062 = smul.u32 %s1061, 128
        %s1063 = sshra.s32 %s1042, 7
        %s1064 = sand.u32 %s1042, 127
        %s1065 = sadd.s32 %s1062, %s1064
        %s1066 = sld [smem:[#allocation7 + %s1065]]
        %s1067 = scalar_lea.vmem %s2, %s1066
        %s1068 = scalar_lea.vmem [#allocation3], %s1043
        %p1070 = scmp.lt.u32.totalorder 1, 8
        %p1071 = pneg %p1070
        // Predicated region
        $region459: #{tpu_custom_call.1} parent=339 // pred_check
          _
        $region460: #{tpu_custom_call.1} parent=339 // pred_check_branch
          %1073 = sbr.rel (%p1070) target = $region462
        $region461: #{tpu_custom_call.1} parent=339 // pred_region
          %s1088 = sand.u32 1, 7
          %p1089 = scmp.eq.s32.totalorder %s1088, 0
          %p1090 = pneg %p1089
          // Predicated region
          $region474: #{tpu_custom_call.1} parent=461 // pred_check
            _
          $region475: #{tpu_custom_call.1} parent=461 // pred_check_branch
            %1092 = sbr.rel (%p1089) target = $region477
          $region476: #{tpu_custom_call.1} parent=461 // pred_region
            %s1093 = sand.u32 1, 7
            %s1094 = ssub.s32 1, %s1093
            %s1095 = scalar_lea.vmem %s1067, %s1094
            %s1096 = ssub.s32 1, %s1093
            %s1097 = scalar_lea.vmem %s1068, %s1096 [#allocation3]
            %s1098 = sshllo.u32 0, %s1093
            loop: start=0, step=1, limit=1
            $region478: #{tpu_custom_call.1} parent=476 // loop_pre_header
              _
            $region479: #{tpu_custom_call.1} parent=476 // loop_header
              %s1100 = sphi 0, %s1104
              %p1101 = scmp.ge.s32.totalorder %s1100, 1
              %s1105 = sphi %s1095, %s1095
              %s1106 = sphi %s1097, %s1097
            $region480: #{tpu_custom_call.1} parent=476 // loop_header_branch
              %1103 = sbr.rel (%p1101) target = $region484
            $region481: #{tpu_custom_call.1} parent=476 // loop_body
              %v1107 = vld [vmem:[%s1105] sm:%s1098]
              %1108 = vst [vmem:[%s1106] sm:%s1098] %v1107
            $region482: #{tpu_custom_call.1} parent=476 // loop_footer
              %s1104 = sadd.s32 1, %s1100
            $region483: #{tpu_custom_call.1} parent=476 // loop_footer_branch
              %1099 = sbr.rel target = $region479
            $region484: #{tpu_custom_call.1} parent=476 // loop_exit
              _
          $region477: #{tpu_custom_call.1} parent=461 // pred_fallthru
            _
        $region462: #{tpu_custom_call.1} parent=339 // pred_fallthru
          _
        // Predicated region
        $region463: #{tpu_custom_call.1} parent=339 // pred_check
          %p1074 = pneg %p1070
        $region464: #{tpu_custom_call.1} parent=339 // pred_check_branch
          %1076 = sbr.rel (%p1074) target = $region466
        $region465: #{tpu_custom_call.1} parent=339 // pred_region
          %s1077 = sshllo.u32 0, 1
          loop: start=0, step=1, limit=1
          $region467: #{tpu_custom_call.1} parent=465 // loop_pre_header
            _
          $region468: #{tpu_custom_call.1} parent=465 // loop_header
            %s1079 = sphi 0, %s1083
            %p1080 = scmp.ge.s32.totalorder %s1079, 1
            %s1084 = sphi %s1067, %s1067
            %s1085 = sphi %s1068, %s1068
          $region469: #{tpu_custom_call.1} parent=465 // loop_header_branch
            %1082 = sbr.rel (%p1080) target = $region473
          $region470: #{tpu_custom_call.1} parent=465 // loop_body
            %v1086 = vld [vmem:[%s1084] sm:%s1077]
            %1087 = vst [vmem:[%s1085] sm:%s1077] %v1086
          $region471: #{tpu_custom_call.1} parent=465 // loop_footer
            %s1083 = sadd.s32 1, %s1079
          $region472: #{tpu_custom_call.1} parent=465 // loop_footer_branch
            %1078 = sbr.rel target = $region468
          $region473: #{tpu_custom_call.1} parent=465 // loop_exit
            _
        $region466: #{tpu_custom_call.1} parent=339 // pred_fallthru
          _
        // Predicated region
        $region485: #{tpu_custom_call.1} parent=339 // pred_check
          _
        $region486: #{tpu_custom_call.1} parent=339 // pred_check_branch
          %1111 = sbr.rel (0) target = $region488
        $region487: #{tpu_custom_call.1} parent=339 // pred_region
          %1112 = vsyncadd %s780, 16
        $region488: #{tpu_custom_call.1} parent=339 // pred_fallthru
          _
        %s1113 = sadd.s32 %s1059, 2
        %s1114 = smul.u32 %s1113, 128
        %s1115 = sadd.s32 %s1114, %s1064
        %s1116 = sld [smem:[#allocation7 + %s1115]]
        %s1117 = smul.addr %s1116, 16
        %s1118 = scalar_lea.hbm %s1, %s1117
        %s1119 = scalar_lea.vmem [#allocation4], %s1043
        // Predicated region
        $region489: #{tpu_custom_call.1} parent=339 // pred_check
          _
        $region490: #{tpu_custom_call.1} parent=339 // pred_check_branch
          %1121 = sbr.rel target = $region492
        $region491: #{tpu_custom_call.1} parent=339 // pred_region
          %1122 = sst [smem:[#allocation15]] [#allocation74]
          %1123 = sst [smem:[#allocation16]] [#allocation73]
        $region492: #{tpu_custom_call.1} parent=339 // pred_fallthru
          _
        %1125 = shalt.err (0)
        %s1127 = sshll.u32 %s1119, 4
        %s1128 = int_to_ptr.vmem [resolvable:$true] %s1127
        %1130 = dma.hbm_to_vmem [thread:$0]  %s1118, 16, %s1128, %s780
        %s1131 = sadd.s32 %s775, 4
        %s1132 = sadd.s32 %s774, 4
        %s1133 = sld [smem:[#allocation7 + %s1131]]
        %s1134 = smul.addr %s1133, 16
        %s1135 = scalar_lea.hbm %s1, %s1134
        %s1136 = scalar_lea.vmem [#allocation2], %s1132
        // Predicated region
        $region493: #{tpu_custom_call.1} parent=339 // pred_check
          _
        $region494: #{tpu_custom_call.1} parent=339 // pred_check_branch
          %1138 = sbr.rel target = $region496
        $region495: #{tpu_custom_call.1} parent=339 // pred_region
          %1139 = sst [smem:[#allocation15]] [#allocation76]
          %1140 = sst [smem:[#allocation16]] [#allocation75]
        $region496: #{tpu_custom_call.1} parent=339 // pred_fallthru
          _
        %1142 = shalt.err (0)
        %s1144 = sshll.u32 %s1136, 4
        %s1145 = int_to_ptr.vmem [resolvable:$true] %s1144
        %1147 = dma.hbm_to_vmem [thread:$0]  %s1135, 16, %s1145, %s780
        %s1148 = sshra.s32 %s1131, 7
        %s1149 = sand.u32 %s1131, 127
        %s1150 = sadd.s32 %s1148, 1
        %s1151 = smul.u32 %s1150, 128
        %s1152 = sshra.s32 %s1131, 7
        %s1153 = sand.u32 %s1131, 127
        %s1154 = sadd.s32 %s1151, %s1153
        %s1155 = sld [smem:[#allocation7 + %s1154]]
        %s1156 = scalar_lea.vmem %s2, %s1155
        %s1157 = scalar_lea.vmem [#allocation3], %s1132
        %p1159 = scmp.lt.u32.totalorder 1, 8
        %p1160 = pneg %p1159
        // Predicated region
        $region497: #{tpu_custom_call.1} parent=339 // pred_check
          _
        $region498: #{tpu_custom_call.1} parent=339 // pred_check_branch
          %1162 = sbr.rel (%p1159) target = $region500
        $region499: #{tpu_custom_call.1} parent=339 // pred_region
          %s1177 = sand.u32 1, 7
          %p1178 = scmp.eq.s32.totalorder %s1177, 0
          %p1179 = pneg %p1178
          // Predicated region
          $region512: #{tpu_custom_call.1} parent=499 // pred_check
            _
          $region513: #{tpu_custom_call.1} parent=499 // pred_check_branch
            %1181 = sbr.rel (%p1178) target = $region515
          $region514: #{tpu_custom_call.1} parent=499 // pred_region
            %s1182 = sand.u32 1, 7
            %s1183 = ssub.s32 1, %s1182
            %s1184 = scalar_lea.vmem %s1156, %s1183
            %s1185 = ssub.s32 1, %s1182
            %s1186 = scalar_lea.vmem %s1157, %s1185 [#allocation3]
            %s1187 = sshllo.u32 0, %s1182
            loop: start=0, step=1, limit=1
            $region516: #{tpu_custom_call.1} parent=514 // loop_pre_header
              _
            $region517: #{tpu_custom_call.1} parent=514 // loop_header
              %s1189 = sphi 0, %s1193
              %p1190 = scmp.ge.s32.totalorder %s1189, 1
              %s1194 = sphi %s1184, %s1184
              %s1195 = sphi %s1186, %s1186
            $region518: #{tpu_custom_call.1} parent=514 // loop_header_branch
              %1192 = sbr.rel (%p1190) target = $region522
            $region519: #{tpu_custom_call.1} parent=514 // loop_body
              %v1196 = vld [vmem:[%s1194] sm:%s1187]
              %1197 = vst [vmem:[%s1195] sm:%s1187] %v1196
            $region520: #{tpu_custom_call.1} parent=514 // loop_footer
              %s1193 = sadd.s32 1, %s1189
            $region521: #{tpu_custom_call.1} parent=514 // loop_footer_branch
              %1188 = sbr.rel target = $region517
            $region522: #{tpu_custom_call.1} parent=514 // loop_exit
              _
          $region515: #{tpu_custom_call.1} parent=499 // pred_fallthru
            _
        $region500: #{tpu_custom_call.1} parent=339 // pred_fallthru
          _
        // Predicated region
        $region501: #{tpu_custom_call.1} parent=339 // pred_check
          %p1163 = pneg %p1159
        $region502: #{tpu_custom_call.1} parent=339 // pred_check_branch
          %1165 = sbr.rel (%p1163) target = $region504
        $region503: #{tpu_custom_call.1} parent=339 // pred_region
          %s1166 = sshllo.u32 0, 1
          loop: start=0, step=1, limit=1
          $region505: #{tpu_custom_call.1} parent=503 // loop_pre_header
            _
          $region506: #{tpu_custom_call.1} parent=503 // loop_header
            %s1168 = sphi 0, %s1172
            %p1169 = scmp.ge.s32.totalorder %s1168, 1
            %s1173 = sphi %s1156, %s1156
            %s1174 = sphi %s1157, %s1157
          $region507: #{tpu_custom_call.1} parent=503 // loop_header_branch
            %1171 = sbr.rel (%p1169) target = $region511
          $region508: #{tpu_custom_call.1} parent=503 // loop_body
            %v1175 = vld [vmem:[%s1173] sm:%s1166]
            %1176 = vst [vmem:[%s1174] sm:%s1166] %v1175
          $region509: #{tpu_custom_call.1} parent=503 // loop_footer
            %s1172 = sadd.s32 1, %s1168
          $region510: #{tpu_custom_call.1} parent=503 // loop_footer_branch
            %1167 = sbr.rel target = $region506
          $region511: #{tpu_custom_call.1} parent=503 // loop_exit
            _
        $region504: #{tpu_custom_call.1} parent=339 // pred_fallthru
          _
        // Predicated region
        $region523: #{tpu_custom_call.1} parent=339 // pred_check
          _
        $region524: #{tpu_custom_call.1} parent=339 // pred_check_branch
          %1200 = sbr.rel (0) target = $region526
        $region525: #{tpu_custom_call.1} parent=339 // pred_region
          %1201 = vsyncadd %s780, 16
        $region526: #{tpu_custom_call.1} parent=339 // pred_fallthru
          _
        %s1202 = sadd.s32 %s1148, 2
        %s1203 = smul.u32 %s1202, 128
        %s1204 = sadd.s32 %s1203, %s1153
        %s1205 = sld [smem:[#allocation7 + %s1204]]
        %s1206 = smul.addr %s1205, 16
        %s1207 = scalar_lea.hbm %s1, %s1206
        %s1208 = scalar_lea.vmem [#allocation4], %s1132
        // Predicated region
        $region527: #{tpu_custom_call.1} parent=339 // pred_check
          _
        $region528: #{tpu_custom_call.1} parent=339 // pred_check_branch
          %1210 = sbr.rel target = $region530
        $region529: #{tpu_custom_call.1} parent=339 // pred_region
          %1211 = sst [smem:[#allocation15]] [#allocation79]
          %1212 = sst [smem:[#allocation16]] [#allocation78]
        $region530: #{tpu_custom_call.1} parent=339 // pred_fallthru
          _
        %1214 = shalt.err (0)
        %s1216 = sshll.u32 %s1208, 4
        %s1217 = int_to_ptr.vmem [resolvable:$true] %s1216
        %1219 = dma.hbm_to_vmem [thread:$0]  %s1207, 16, %s1217, %s780
        %s1220 = sadd.s32 %s775, 5
        %s1221 = sadd.s32 %s774, 5
        %s1222 = sld [smem:[#allocation7 + %s1220]]
        %s1223 = smul.addr %s1222, 16
        %s1224 = scalar_lea.hbm %s1, %s1223
        %s1225 = scalar_lea.vmem [#allocation2], %s1221
        // Predicated region
        $region531: #{tpu_custom_call.1} parent=339 // pred_check
          _
        $region532: #{tpu_custom_call.1} parent=339 // pred_check_branch
          %1227 = sbr.rel target = $region534
        $region533: #{tpu_custom_call.1} parent=339 // pred_region
          %1228 = sst [smem:[#allocation15]] [#allocation81]
          %1229 = sst [smem:[#allocation16]] [#allocation80]
        $region534: #{tpu_custom_call.1} parent=339 // pred_fallthru
          _
        %1231 = shalt.err (0)
        %s1233 = sshll.u32 %s1225, 4
        %s1234 = int_to_ptr.vmem [resolvable:$true] %s1233
        %1236 = dma.hbm_to_vmem [thread:$0]  %s1224, 16, %s1234, %s780
        %s1237 = sshra.s32 %s1220, 7
        %s1238 = sand.u32 %s1220, 127
        %s1239 = sadd.s32 %s1237, 1
        %s1240 = smul.u32 %s1239, 128
        %s1241 = sshra.s32 %s1220, 7
        %s1242 = sand.u32 %s1220, 127
        %s1243 = sadd.s32 %s1240, %s1242
        %s1244 = sld [smem:[#allocation7 + %s1243]]
        %s1245 = scalar_lea.vmem %s2, %s1244
        %s1246 = scalar_lea.vmem [#allocation3], %s1221
        %p1248 = scmp.lt.u32.totalorder 1, 8
        %p1249 = pneg %p1248
        // Predicated region
        $region535: #{tpu_custom_call.1} parent=339 // pred_check
          _
        $region536: #{tpu_custom_call.1} parent=339 // pred_check_branch
          %1251 = sbr.rel (%p1248) target = $region538
        $region537: #{tpu_custom_call.1} parent=339 // pred_region
          %s1266 = sand.u32 1, 7
          %p1267 = scmp.eq.s32.totalorder %s1266, 0
          %p1268 = pneg %p1267
          // Predicated region
          $region550: #{tpu_custom_call.1} parent=537 // pred_check
            _
          $region551: #{tpu_custom_call.1} parent=537 // pred_check_branch
            %1270 = sbr.rel (%p1267) target = $region553
          $region552: #{tpu_custom_call.1} parent=537 // pred_region
            %s1271 = sand.u32 1, 7
            %s1272 = ssub.s32 1, %s1271
            %s1273 = scalar_lea.vmem %s1245, %s1272
            %s1274 = ssub.s32 1, %s1271
            %s1275 = scalar_lea.vmem %s1246, %s1274 [#allocation3]
            %s1276 = sshllo.u32 0, %s1271
            loop: start=0, step=1, limit=1
            $region554: #{tpu_custom_call.1} parent=552 // loop_pre_header
              _
            $region555: #{tpu_custom_call.1} parent=552 // loop_header
              %s1278 = sphi 0, %s1282
              %p1279 = scmp.ge.s32.totalorder %s1278, 1
              %s1283 = sphi %s1273, %s1273
              %s1284 = sphi %s1275, %s1275
            $region556: #{tpu_custom_call.1} parent=552 // loop_header_branch
              %1281 = sbr.rel (%p1279) target = $region560
            $region557: #{tpu_custom_call.1} parent=552 // loop_body
              %v1285 = vld [vmem:[%s1283] sm:%s1276]
              %1286 = vst [vmem:[%s1284] sm:%s1276] %v1285
            $region558: #{tpu_custom_call.1} parent=552 // loop_footer
              %s1282 = sadd.s32 1, %s1278
            $region559: #{tpu_custom_call.1} parent=552 // loop_footer_branch
              %1277 = sbr.rel target = $region555
            $region560: #{tpu_custom_call.1} parent=552 // loop_exit
              _
          $region553: #{tpu_custom_call.1} parent=537 // pred_fallthru
            _
        $region538: #{tpu_custom_call.1} parent=339 // pred_fallthru
          _
        // Predicated region
        $region539: #{tpu_custom_call.1} parent=339 // pred_check
          %p1252 = pneg %p1248
        $region540: #{tpu_custom_call.1} parent=339 // pred_check_branch
          %1254 = sbr.rel (%p1252) target = $region542
        $region541: #{tpu_custom_call.1} parent=339 // pred_region
          %s1255 = sshllo.u32 0, 1
          loop: start=0, step=1, limit=1
          $region543: #{tpu_custom_call.1} parent=541 // loop_pre_header
            _
          $region544: #{tpu_custom_call.1} parent=541 // loop_header
            %s1257 = sphi 0, %s1261
            %p1258 = scmp.ge.s32.totalorder %s1257, 1
            %s1262 = sphi %s1245, %s1245
            %s1263 = sphi %s1246, %s1246
          $region545: #{tpu_custom_call.1} parent=541 // loop_header_branch
            %1260 = sbr.rel (%p1258) target = $region549
          $region546: #{tpu_custom_call.1} parent=541 // loop_body
            %v1264 = vld [vmem:[%s1262] sm:%s1255]
            %1265 = vst [vmem:[%s1263] sm:%s1255] %v1264
          $region547: #{tpu_custom_call.1} parent=541 // loop_footer
            %s1261 = sadd.s32 1, %s1257
          $region548: #{tpu_custom_call.1} parent=541 // loop_footer_branch
            %1256 = sbr.rel target = $region544
          $region549: #{tpu_custom_call.1} parent=541 // loop_exit
            _
        $region542: #{tpu_custom_call.1} parent=339 // pred_fallthru
          _
        // Predicated region
        $region561: #{tpu_custom_call.1} parent=339 // pred_check
          _
        $region562: #{tpu_custom_call.1} parent=339 // pred_check_branch
          %1289 = sbr.rel (0) target = $region564
        $region563: #{tpu_custom_call.1} parent=339 // pred_region
          %1290 = vsyncadd %s780, 16
        $region564: #{tpu_custom_call.1} parent=339 // pred_fallthru
          _
        %s1291 = sadd.s32 %s1237, 2
        %s1292 = smul.u32 %s1291, 128
        %s1293 = sadd.s32 %s1292, %s1242
        %s1294 = sld [smem:[#allocation7 + %s1293]]
        %s1295 = smul.addr %s1294, 16
        %s1296 = scalar_lea.hbm %s1, %s1295
        %s1297 = scalar_lea.vmem [#allocation4], %s1221
        // Predicated region
        $region565: #{tpu_custom_call.1} parent=339 // pred_check
          _
        $region566: #{tpu_custom_call.1} parent=339 // pred_check_branch
          %1299 = sbr.rel target = $region568
        $region567: #{tpu_custom_call.1} parent=339 // pred_region
          %1300 = sst [smem:[#allocation15]] [#allocation84]
          %1301 = sst [smem:[#allocation16]] [#allocation83]
        $region568: #{tpu_custom_call.1} parent=339 // pred_fallthru
          _
        %1303 = shalt.err (0)
        %s1305 = sshll.u32 %s1297, 4
        %s1306 = int_to_ptr.vmem [resolvable:$true] %s1305
        %1308 = dma.hbm_to_vmem [thread:$0]  %s1296, 16, %s1306, %s780
        %s1309 = sadd.s32 %s775, 6
        %s1310 = sadd.s32 %s774, 6
        %s1311 = sld [smem:[#allocation7 + %s1309]]
        %s1312 = smul.addr %s1311, 16
        %s1313 = scalar_lea.hbm %s1, %s1312
        %s1314 = scalar_lea.vmem [#allocation2], %s1310
        // Predicated region
        $region569: #{tpu_custom_call.1} parent=339 // pred_check
          _
        $region570: #{tpu_custom_call.1} parent=339 // pred_check_branch
          %1316 = sbr.rel target = $region572
        $region571: #{tpu_custom_call.1} parent=339 // pred_region
          %1317 = sst [smem:[#allocation15]] [#allocation86]
          %1318 = sst [smem:[#allocation16]] [#allocation85]
        $region572: #{tpu_custom_call.1} parent=339 // pred_fallthru
          _
        %1320 = shalt.err (0)
        %s1322 = sshll.u32 %s1314, 4
        %s1323 = int_to_ptr.vmem [resolvable:$true] %s1322
        %1325 = dma.hbm_to_vmem [thread:$0]  %s1313, 16, %s1323, %s780
        %s1326 = sshra.s32 %s1309, 7
        %s1327 = sand.u32 %s1309, 127
        %s1328 = sadd.s32 %s1326, 1
        %s1329 = smul.u32 %s1328, 128
        %s1330 = sshra.s32 %s1309, 7
        %s1331 = sand.u32 %s1309, 127
        %s1332 = sadd.s32 %s1329, %s1331
        %s1333 = sld [smem:[#allocation7 + %s1332]]
        %s1334 = scalar_lea.vmem %s2, %s1333
        %s1335 = scalar_lea.vmem [#allocation3], %s1310
        %p1337 = scmp.lt.u32.totalorder 1, 8
        %p1338 = pneg %p1337
        // Predicated region
        $region573: #{tpu_custom_call.1} parent=339 // pred_check
          _
        $region574: #{tpu_custom_call.1} parent=339 // pred_check_branch
          %1340 = sbr.rel (%p1337) target = $region576
        $region575: #{tpu_custom_call.1} parent=339 // pred_region
          %s1355 = sand.u32 1, 7
          %p1356 = scmp.eq.s32.totalorder %s1355, 0
          %p1357 = pneg %p1356
          // Predicated region
          $region588: #{tpu_custom_call.1} parent=575 // pred_check
            _
          $region589: #{tpu_custom_call.1} parent=575 // pred_check_branch
            %1359 = sbr.rel (%p1356) target = $region591
          $region590: #{tpu_custom_call.1} parent=575 // pred_region
            %s1360 = sand.u32 1, 7
            %s1361 = ssub.s32 1, %s1360
            %s1362 = scalar_lea.vmem %s1334, %s1361
            %s1363 = ssub.s32 1, %s1360
            %s1364 = scalar_lea.vmem %s1335, %s1363 [#allocation3]
            %s1365 = sshllo.u32 0, %s1360
            loop: start=0, step=1, limit=1
            $region592: #{tpu_custom_call.1} parent=590 // loop_pre_header
              _
            $region593: #{tpu_custom_call.1} parent=590 // loop_header
              %s1367 = sphi 0, %s1371
              %p1368 = scmp.ge.s32.totalorder %s1367, 1
              %s1372 = sphi %s1362, %s1362
              %s1373 = sphi %s1364, %s1364
            $region594: #{tpu_custom_call.1} parent=590 // loop_header_branch
              %1370 = sbr.rel (%p1368) target = $region598
            $region595: #{tpu_custom_call.1} parent=590 // loop_body
              %v1374 = vld [vmem:[%s1372] sm:%s1365]
              %1375 = vst [vmem:[%s1373] sm:%s1365] %v1374
            $region596: #{tpu_custom_call.1} parent=590 // loop_footer
              %s1371 = sadd.s32 1, %s1367
            $region597: #{tpu_custom_call.1} parent=590 // loop_footer_branch
              %1366 = sbr.rel target = $region593
            $region598: #{tpu_custom_call.1} parent=590 // loop_exit
              _
          $region591: #{tpu_custom_call.1} parent=575 // pred_fallthru
            _
        $region576: #{tpu_custom_call.1} parent=339 // pred_fallthru
          _
        // Predicated region
        $region577: #{tpu_custom_call.1} parent=339 // pred_check
          %p1341 = pneg %p1337
        $region578: #{tpu_custom_call.1} parent=339 // pred_check_branch
          %1343 = sbr.rel (%p1341) target = $region580
        $region579: #{tpu_custom_call.1} parent=339 // pred_region
          %s1344 = sshllo.u32 0, 1
          loop: start=0, step=1, limit=1
          $region581: #{tpu_custom_call.1} parent=579 // loop_pre_header
            _
          $region582: #{tpu_custom_call.1} parent=579 // loop_header
            %s1346 = sphi 0, %s1350
            %p1347 = scmp.ge.s32.totalorder %s1346, 1
            %s1351 = sphi %s1334, %s1334
            %s1352 = sphi %s1335, %s1335
          $region583: #{tpu_custom_call.1} parent=579 // loop_header_branch
            %1349 = sbr.rel (%p1347) target = $region587
          $region584: #{tpu_custom_call.1} parent=579 // loop_body
            %v1353 = vld [vmem:[%s1351] sm:%s1344]
            %1354 = vst [vmem:[%s1352] sm:%s1344] %v1353
          $region585: #{tpu_custom_call.1} parent=579 // loop_footer
            %s1350 = sadd.s32 1, %s1346
          $region586: #{tpu_custom_call.1} parent=579 // loop_footer_branch
            %1345 = sbr.rel target = $region582
          $region587: #{tpu_custom_call.1} parent=579 // loop_exit
            _
        $region580: #{tpu_custom_call.1} parent=339 // pred_fallthru
          _
        // Predicated region
        $region599: #{tpu_custom_call.1} parent=339 // pred_check
          _
        $region600: #{tpu_custom_call.1} parent=339 // pred_check_branch
          %1378 = sbr.rel (0) target = $region602
        $region601: #{tpu_custom_call.1} parent=339 // pred_region
          %1379 = vsyncadd %s780, 16
        $region602: #{tpu_custom_call.1} parent=339 // pred_fallthru
          _
        %s1380 = sadd.s32 %s1326, 2
        %s1381 = smul.u32 %s1380, 128
        %s1382 = sadd.s32 %s1381, %s1331
        %s1383 = sld [smem:[#allocation7 + %s1382]]
        %s1384 = smul.addr %s1383, 16
        %s1385 = scalar_lea.hbm %s1, %s1384
        %s1386 = scalar_lea.vmem [#allocation4], %s1310
        // Predicated region
        $region603: #{tpu_custom_call.1} parent=339 // pred_check
          _
        $region604: #{tpu_custom_call.1} parent=339 // pred_check_branch
          %1388 = sbr.rel target = $region606
        $region605: #{tpu_custom_call.1} parent=339 // pred_region
          %1389 = sst [smem:[#allocation15]] [#allocation89]
          %1390 = sst [smem:[#allocation16]] [#allocation88]
        $region606: #{tpu_custom_call.1} parent=339 // pred_fallthru
          _
        %1392 = shalt.err (0)
        %s1394 = sshll.u32 %s1386, 4
        %s1395 = int_to_ptr.vmem [resolvable:$true] %s1394
        %1397 = dma.hbm_to_vmem [thread:$0]  %s1385, 16, %s1395, %s780
        %s1398 = sadd.s32 %s775, 7
        %s1399 = sadd.s32 %s774, 7
        %s1400 = sld [smem:[#allocation7 + %s1398]]
        %s1401 = smul.addr %s1400, 16
        %s1402 = scalar_lea.hbm %s1, %s1401
        %s1403 = scalar_lea.vmem [#allocation2], %s1399
        // Predicated region
        $region607: #{tpu_custom_call.1} parent=339 // pred_check
          _
        $region608: #{tpu_custom_call.1} parent=339 // pred_check_branch
          %1405 = sbr.rel target = $region610
        $region609: #{tpu_custom_call.1} parent=339 // pred_region
          %1406 = sst [smem:[#allocation15]] [#allocation91]
          %1407 = sst [smem:[#allocation16]] [#allocation90]
        $region610: #{tpu_custom_call.1} parent=339 // pred_fallthru
          _
        %1409 = shalt.err (0)
        %s1411 = sshll.u32 %s1403, 4
        %s1412 = int_to_ptr.vmem [resolvable:$true] %s1411
        %1414 = dma.hbm_to_vmem [thread:$0]  %s1402, 16, %s1412, %s780
        %s1415 = sshra.s32 %s1398, 7
        %s1416 = sand.u32 %s1398, 127
        %s1417 = sadd.s32 %s1415, 1
        %s1418 = smul.u32 %s1417, 128
        %s1419 = sshra.s32 %s1398, 7
        %s1420 = sand.u32 %s1398, 127
        %s1421 = sadd.s32 %s1418, %s1420
        %s1422 = sld [smem:[#allocation7 + %s1421]]
        %s1423 = scalar_lea.vmem %s2, %s1422
        %s1424 = scalar_lea.vmem [#allocation3], %s1399
        %p1426 = scmp.lt.u32.totalorder 1, 8
        %p1427 = pneg %p1426
        // Predicated region
        $region611: #{tpu_custom_call.1} parent=339 // pred_check
          _
        $region612: #{tpu_custom_call.1} parent=339 // pred_check_branch
          %1429 = sbr.rel (%p1426) target = $region614
        $region613: #{tpu_custom_call.1} parent=339 // pred_region
          %s1444 = sand.u32 1, 7
          %p1445 = scmp.eq.s32.totalorder %s1444, 0
          %p1446 = pneg %p1445
          // Predicated region
          $region626: #{tpu_custom_call.1} parent=613 // pred_check
            _
          $region627: #{tpu_custom_call.1} parent=613 // pred_check_branch
            %1448 = sbr.rel (%p1445) target = $region629
          $region628: #{tpu_custom_call.1} parent=613 // pred_region
            %s1449 = sand.u32 1, 7
            %s1450 = ssub.s32 1, %s1449
            %s1451 = scalar_lea.vmem %s1423, %s1450
            %s1452 = ssub.s32 1, %s1449
            %s1453 = scalar_lea.vmem %s1424, %s1452 [#allocation3]
            %s1454 = sshllo.u32 0, %s1449
            loop: start=0, step=1, limit=1
            $region630: #{tpu_custom_call.1} parent=628 // loop_pre_header
              _
            $region631: #{tpu_custom_call.1} parent=628 // loop_header
              %s1456 = sphi 0, %s1460
              %p1457 = scmp.ge.s32.totalorder %s1456, 1
              %s1461 = sphi %s1451, %s1451
              %s1462 = sphi %s1453, %s1453
            $region632: #{tpu_custom_call.1} parent=628 // loop_header_branch
              %1459 = sbr.rel (%p1457) target = $region636
            $region633: #{tpu_custom_call.1} parent=628 // loop_body
              %v1463 = vld [vmem:[%s1461] sm:%s1454]
              %1464 = vst [vmem:[%s1462] sm:%s1454] %v1463
            $region634: #{tpu_custom_call.1} parent=628 // loop_footer
              %s1460 = sadd.s32 1, %s1456
            $region635: #{tpu_custom_call.1} parent=628 // loop_footer_branch
              %1455 = sbr.rel target = $region631
            $region636: #{tpu_custom_call.1} parent=628 // loop_exit
              _
          $region629: #{tpu_custom_call.1} parent=613 // pred_fallthru
            _
        $region614: #{tpu_custom_call.1} parent=339 // pred_fallthru
          _
        // Predicated region
        $region615: #{tpu_custom_call.1} parent=339 // pred_check
          %p1430 = pneg %p1426
        $region616: #{tpu_custom_call.1} parent=339 // pred_check_branch
          %1432 = sbr.rel (%p1430) target = $region618
        $region617: #{tpu_custom_call.1} parent=339 // pred_region
          %s1433 = sshllo.u32 0, 1
          loop: start=0, step=1, limit=1
          $region619: #{tpu_custom_call.1} parent=617 // loop_pre_header
            _
          $region620: #{tpu_custom_call.1} parent=617 // loop_header
            %s1435 = sphi 0, %s1439
            %p1436 = scmp.ge.s32.totalorder %s1435, 1
            %s1440 = sphi %s1423, %s1423
            %s1441 = sphi %s1424, %s1424
          $region621: #{tpu_custom_call.1} parent=617 // loop_header_branch
            %1438 = sbr.rel (%p1436) target = $region625
          $region622: #{tpu_custom_call.1} parent=617 // loop_body
            %v1442 = vld [vmem:[%s1440] sm:%s1433]
            %1443 = vst [vmem:[%s1441] sm:%s1433] %v1442
          $region623: #{tpu_custom_call.1} parent=617 // loop_footer
            %s1439 = sadd.s32 1, %s1435
          $region624: #{tpu_custom_call.1} parent=617 // loop_footer_branch
            %1434 = sbr.rel target = $region620
          $region625: #{tpu_custom_call.1} parent=617 // loop_exit
            _
        $region618: #{tpu_custom_call.1} parent=339 // pred_fallthru
          _
        // Predicated region
        $region637: #{tpu_custom_call.1} parent=339 // pred_check
          _
        $region638: #{tpu_custom_call.1} parent=339 // pred_check_branch
          %1467 = sbr.rel (0) target = $region640
        $region639: #{tpu_custom_call.1} parent=339 // pred_region
          %1468 = vsyncadd %s780, 16
        $region640: #{tpu_custom_call.1} parent=339 // pred_fallthru
          _
        %s1469 = sadd.s32 %s1415, 2
        %s1470 = smul.u32 %s1469, 128
        %s1471 = sadd.s32 %s1470, %s1420
        %s1472 = sld [smem:[#allocation7 + %s1471]]
        %s1473 = smul.addr %s1472, 16
        %s1474 = scalar_lea.hbm %s1, %s1473
        %s1475 = scalar_lea.vmem [#allocation4], %s1399
        // Predicated region
        $region641: #{tpu_custom_call.1} parent=339 // pred_check
          _
        $region642: #{tpu_custom_call.1} parent=339 // pred_check_branch
          %1477 = sbr.rel target = $region644
        $region643: #{tpu_custom_call.1} parent=339 // pred_region
          %1478 = sst [smem:[#allocation15]] [#allocation94]
          %1479 = sst [smem:[#allocation16]] [#allocation93]
        $region644: #{tpu_custom_call.1} parent=339 // pred_fallthru
          _
        %1481 = shalt.err (0)
        %s1483 = sshll.u32 %s1475, 4
        %s1484 = int_to_ptr.vmem [resolvable:$true] %s1483
        %1486 = dma.hbm_to_vmem [thread:$0]  %s1474, 16, %s1484, %s780
      $region340: #{tpu_custom_call.1} parent=333 // pred_fallthru
        _
      %p1487 = scmp.lt.s32.totalorder %s752, 0
      %s1488 = ssub.s32 0, %s752
      %s1489 = scalar_select %p1487, %s1488, %s752
      %s1490 = sand.u32 %s1489, 1
      %s1491 = ssub.s32 0, %s1490
      %s1492 = scalar_select %p1487, %s1491, %s1490
      %p1493 = scmp.ne.s32.totalorder %s1492, 0
      %p1494 = scmp.lt.s32.totalorder %s1492, 0
      %p1495 = pnand %p1494, %p1493
      %p1496 = pneg %p1495
      %s1497 = sadd.s32 %s1492, 2
      %s1498 = scalar_select %p1496, %s1497, %s1492
      %s1499 = scalar_lea.sflag [#allocation5], %s1498
      %s1500 = smul.u32 1, 1
      %s1501 = sshll.u32 %s1500, 4
      %1502 = dma.done %s1499, %s1501
      %s1503 = sshll.u32 %s1500, 4
      %1504 = dma.done %s1499, %s1503
      %s1505 = sshll.u32 %s1500, 4
      %1506 = dma.done %s1499, %s1505
      %s1507 = sshll.u32 %s1500, 4
      %1508 = dma.done %s1499, %s1507
      %s1509 = sshll.u32 %s1500, 4
      %1510 = dma.done %s1499, %s1509
      %s1511 = sshll.u32 %s1500, 4
      %1512 = dma.done %s1499, %s1511
      %s1513 = sshll.u32 %s1500, 4
      %1514 = dma.done %s1499, %s1513
      %s1515 = sshll.u32 %s1500, 4
      %1516 = dma.done %s1499, %s1515
      %s1517 = sshll.u32 %s1500, 4
      %1518 = dma.done %s1499, %s1517
      %s1519 = sshll.u32 %s1500, 4
      %1520 = dma.done %s1499, %s1519
      %s1521 = sshll.u32 %s1500, 4
      %1522 = dma.done %s1499, %s1521
      %s1523 = sshll.u32 %s1500, 4
      %1524 = dma.done %s1499, %s1523
      %s1525 = sshll.u32 %s1500, 4
      %1526 = dma.done %s1499, %s1525
      %s1527 = sshll.u32 %s1500, 4
      %1528 = dma.done %s1499, %s1527
      %s1529 = sshll.u32 %s1500, 4
      %1530 = dma.done %s1499, %s1529
      %s1531 = sshll.u32 %s1500, 4
      %1532 = dma.done %s1499, %s1531
      %s1533 = sshll.u32 %s1500, 4
      %1534 = dma.done %s1499, %s1533
      %s1535 = sshll.u32 %s1500, 4
      %1536 = dma.done %s1499, %s1535
      %s1537 = sshll.u32 %s1500, 4
      %1538 = dma.done %s1499, %s1537
      %s1539 = sshll.u32 %s1500, 4
      %1540 = dma.done %s1499, %s1539
      %s1541 = sshll.u32 %s1500, 4
      %1542 = dma.done %s1499, %s1541
      %s1543 = sshll.u32 %s1500, 4
      %1544 = dma.done %s1499, %s1543
      %s1545 = sshll.u32 %s1500, 4
      %1546 = dma.done %s1499, %s1545
      %s1547 = sshll.u32 %s1500, 4
      %1548 = dma.done %s1499, %s1547
      %s1549 = smul.u32 %s752, 8
      %s1550 = scalar_lea.vmem [#allocation2], %s1549
      %v1551 = vld [vmem:[%s1550] sm:$0xff]
      %s1552 = scalar_lea.vmem [#allocation3], %s1549
      %v1553 = vld [vmem:[%s1552] sm:$0xff]
      %s1554 = scalar_lea.vmem [#allocation4], %s1549
      %v1555 = vld [vmem:[%s1554] sm:$0xff]
      %s1556 = sld [smem:[#allocation9]]
      %v1557 = vstv %s1556
      %v1558 = vmul.f32 %v1557, %v1551
      %s1559 = sld [smem:[#allocation9 + $0x1]]
      %v1560 = vstv %s1559
      %v1561 = vmul.f32 %v1560, %v1553
      %v1562 = vadd.f32 %v1558, %v1561
      %s1563 = sld [smem:[#allocation9 + $0x2]]
      %v1564 = vstv %s1563
      %v1565 = vmul.f32 %v1564, %v1555
      %v1566 = vadd.f32 %v1562, %v1565
      %s1567 = sld [smem:[#allocation11]]
      %v1568 = vstv %s1567
      %v1569 = vadd.f32 %v1566, %v1568
      %v1570 = vmax.f32 %v1569, 0.0
      %v1571 = vld [vmem:[%s3] sm:$0x1]
      %v1572 = vlaneseq
      %v1573 = vshrl.u32 %v1572, 7
      %v1574 = vsub.s32 0, %v1573
      %v1575 = vrot.slane %v1571, %v1574
      %v1576 = vmul.f32 %v1570, %v1575
      %v1577 = vadd.f32 %v1576, 0.0
      %s1578 = sld [smem:[#allocation9 + $0x80]]
      %v1579 = vstv %s1578
      %v1580 = vmul.f32 %v1579, %v1551
      %s1581 = sld [smem:[#allocation9 + $0x81]]
      %v1582 = vstv %s1581
      %v1583 = vmul.f32 %v1582, %v1553
      %v1584 = vadd.f32 %v1580, %v1583
      %s1585 = sld [smem:[#allocation9 + $0x82]]
      %v1586 = vstv %s1585
      %v1587 = vmul.f32 %v1586, %v1555
      %v1588 = vadd.f32 %v1584, %v1587
      %s1589 = sld [smem:[#allocation11 + $0x1]]
      %v1590 = vstv %s1589
      %v1591 = vadd.f32 %v1588, %v1590
      %v1592 = vmax.f32 %v1591, 0.0
      %v1593 = vld [vmem:[%s3 + $0x1] sm:$0x1]
      %v1594 = vlaneseq
      %v1595 = vshrl.u32 %v1594, 7
      %v1596 = vsub.s32 0, %v1595
      %v1597 = vrot.slane %v1593, %v1596
      %v1598 = vmul.f32 %v1592, %v1597
      %v1599 = vadd.f32 %v1577, %v1598
      %s1600 = sld [smem:[#allocation9 + $0x100]]
      %v1601 = vstv %s1600
      %v1602 = vmul.f32 %v1601, %v1551
      %s1603 = sld [smem:[#allocation9 + $0x101]]
      %v1604 = vstv %s1603
      %v1605 = vmul.f32 %v1604, %v1553
      %v1606 = vadd.f32 %v1602, %v1605
      %s1607 = sld [smem:[#allocation9 + $0x102]]
      %v1608 = vstv %s1607
      %v1609 = vmul.f32 %v1608, %v1555
      %v1610 = vadd.f32 %v1606, %v1609
      %s1611 = sld [smem:[#allocation11 + $0x2]]
      %v1612 = vstv %s1611
      %v1613 = vadd.f32 %v1610, %v1612
      %v1614 = vmax.f32 %v1613, 0.0
      %v1615 = vld [vmem:[%s3 + $0x2] sm:$0x1]
      %v1616 = vlaneseq
      %v1617 = vshrl.u32 %v1616, 7
      %v1618 = vsub.s32 0, %v1617
      %v1619 = vrot.slane %v1615, %v1618
      %v1620 = vmul.f32 %v1614, %v1619
      %v1621 = vadd.f32 %v1599, %v1620
      %s1622 = sld [smem:[#allocation9 + $0x180]]
      %v1623 = vstv %s1622
      %v1624 = vmul.f32 %v1623, %v1551
      %s1625 = sld [smem:[#allocation9 + $0x181]]
      %v1626 = vstv %s1625
      %v1627 = vmul.f32 %v1626, %v1553
      %v1628 = vadd.f32 %v1624, %v1627
      %s1629 = sld [smem:[#allocation9 + $0x182]]
      %v1630 = vstv %s1629
      %v1631 = vmul.f32 %v1630, %v1555
      %v1632 = vadd.f32 %v1628, %v1631
      %s1633 = sld [smem:[#allocation11 + $0x3]]
      %v1634 = vstv %s1633
      %v1635 = vadd.f32 %v1632, %v1634
      %v1636 = vmax.f32 %v1635, 0.0
      %v1637 = vld [vmem:[%s3 + $0x3] sm:$0x1]
      %v1638 = vlaneseq
      %v1639 = vshrl.u32 %v1638, 7
      %v1640 = vsub.s32 0, %v1639
      %v1641 = vrot.slane %v1637, %v1640
      %v1642 = vmul.f32 %v1636, %v1641
      %v1643 = vadd.f32 %v1621, %v1642
      %s1644 = sld [smem:[#allocation9 + $0x200]]
      %v1645 = vstv %s1644
      %v1646 = vmul.f32 %v1645, %v1551
      %s1647 = sld [smem:[#allocation9 + $0x201]]
      %v1648 = vstv %s1647
      %v1649 = vmul.f32 %v1648, %v1553
      %v1650 = vadd.f32 %v1646, %v1649
      %s1651 = sld [smem:[#allocation9 + $0x202]]
      %v1652 = vstv %s1651
      %v1653 = vmul.f32 %v1652, %v1555
      %v1654 = vadd.f32 %v1650, %v1653
      %s1655 = sld [smem:[#allocation11 + $0x4]]
      %v1656 = vstv %s1655
      %v1657 = vadd.f32 %v1654, %v1656
      %v1658 = vmax.f32 %v1657, 0.0
      %v1659 = vld [vmem:[%s3 + $0x4] sm:$0x1]
      %v1660 = vlaneseq
      %v1661 = vshrl.u32 %v1660, 7
      %v1662 = vsub.s32 0, %v1661
      %v1663 = vrot.slane %v1659, %v1662
      %v1664 = vmul.f32 %v1658, %v1663
      %v1665 = vadd.f32 %v1643, %v1664
      %s1666 = sld [smem:[#allocation9 + $0x280]]
      %v1667 = vstv %s1666
      %v1668 = vmul.f32 %v1667, %v1551
      %s1669 = sld [smem:[#allocation9 + $0x281]]
      %v1670 = vstv %s1669
      %v1671 = vmul.f32 %v1670, %v1553
      %v1672 = vadd.f32 %v1668, %v1671
      %s1673 = sld [smem:[#allocation9 + $0x282]]
      %v1674 = vstv %s1673
      %v1675 = vmul.f32 %v1674, %v1555
      %v1676 = vadd.f32 %v1672, %v1675
      %s1677 = sld [smem:[#allocation11 + $0x5]]
      %v1678 = vstv %s1677
      %v1679 = vadd.f32 %v1676, %v1678
      %v1680 = vmax.f32 %v1679, 0.0
      %v1681 = vld [vmem:[%s3 + $0x5] sm:$0x1]
      %v1682 = vlaneseq
      %v1683 = vshrl.u32 %v1682, 7
      %v1684 = vsub.s32 0, %v1683
      %v1685 = vrot.slane %v1681, %v1684
      %v1686 = vmul.f32 %v1680, %v1685
      %v1687 = vadd.f32 %v1665, %v1686
      %s1688 = sld [smem:[#allocation9 + $0x300]]
      %v1689 = vstv %s1688
      %v1690 = vmul.f32 %v1689, %v1551
      %s1691 = sld [smem:[#allocation9 + $0x301]]
      %v1692 = vstv %s1691
      %v1693 = vmul.f32 %v1692, %v1553
      %v1694 = vadd.f32 %v1690, %v1693
      %s1695 = sld [smem:[#allocation9 + $0x302]]
      %v1696 = vstv %s1695
      %v1697 = vmul.f32 %v1696, %v1555
      %v1698 = vadd.f32 %v1694, %v1697
      %s1699 = sld [smem:[#allocation11 + $0x6]]
      %v1700 = vstv %s1699
      %v1701 = vadd.f32 %v1698, %v1700
      %v1702 = vmax.f32 %v1701, 0.0
      %v1703 = vld [vmem:[%s3 + $0x6] sm:$0x1]
      %v1704 = vlaneseq
      %v1705 = vshrl.u32 %v1704, 7
      %v1706 = vsub.s32 0, %v1705
      %v1707 = vrot.slane %v1703, %v1706
      %v1708 = vmul.f32 %v1702, %v1707
      %v1709 = vadd.f32 %v1687, %v1708
      %s1710 = sld [smem:[#allocation9 + $0x380]]
      %v1711 = vstv %s1710
      %v1712 = vmul.f32 %v1711, %v1551
      %s1713 = sld [smem:[#allocation9 + $0x381]]
      %v1714 = vstv %s1713
      %v1715 = vmul.f32 %v1714, %v1553
      %v1716 = vadd.f32 %v1712, %v1715
      %s1717 = sld [smem:[#allocation9 + $0x382]]
      %v1718 = vstv %s1717
      %v1719 = vmul.f32 %v1718, %v1555
      %v1720 = vadd.f32 %v1716, %v1719
      %s1721 = sld [smem:[#allocation11 + $0x7]]
      %v1722 = vstv %s1721
      %v1723 = vadd.f32 %v1720, %v1722
      %v1724 = vmax.f32 %v1723, 0.0
      %v1725 = vld [vmem:[%s3 + $0x7] sm:$0x1]
      %v1726 = vlaneseq
      %v1727 = vshrl.u32 %v1726, 7
      %v1728 = vsub.s32 0, %v1727
      %v1729 = vrot.slane %v1725, %v1728
      %v1730 = vmul.f32 %v1724, %v1729
      %v1731 = vadd.f32 %v1709, %v1730
      %1732 = vadd.xlane.f32.xlu0 %v1731
      %v1733 = vpop.xlane.xlu0 %1732
      %s1734 = sld [smem:[#allocation8]]
      %v1735 = vstv %s1734
      %v1736 = vadd.f32 %v1733, %v1735
      %s1737 = scalar_lea.vmem %s7, %s1549
      %vm1738 = vcmask 7168
      %1739 = vst.msk [vmem:[%s1737] sm:$0xff] %vm1738, %v1736
    $region334: #{tpu_custom_call.1} parent=1 // loop_footer
      %s756 = sadd.s32 1, %s752
    $region335: #{tpu_custom_call.1} parent=1 // loop_footer_branch
      %751 = sbr.rel target = $region331
    $region336: #{tpu_custom_call.1} parent=1 // loop_exit
      _
    // Predicated region
    $region645: #{tpu_custom_call.1} parent=1 // pred_check
      _
    $region646: #{tpu_custom_call.1} parent=1 // pred_check_branch
      %1741 = sbr.rel (0) target = $region648
    $region647: #{tpu_custom_call.1} parent=1 // pred_region
      _
    $region648: #{tpu_custom_call.1} parent=1 // pred_fallthru
      _
    // Predicated region
    $region649: #{tpu_custom_call.1} parent=1 // pred_check
      _
    $region650: #{tpu_custom_call.1} parent=1 // pred_check_branch
      %1743 = sbr.rel (0) target = $region652
    $region651: #{tpu_custom_call.1} parent=1 // pred_region
      _
    $region652: #{tpu_custom_call.1} parent=1 // pred_fallthru
      _
    %1744 = vsyncpa [#allocation10], 1
    %1745 = vsyncpa [#allocation12], 1
  %1746 = vsyncmov [#allocation5]
  %s1747 = vpop.sfrf %1746
  %p1748 = scmp.eq.s32.totalorder %s1747, 0
  %p1749 = pneg %p1748
  %1751 = shalt.err (%p1749)
  %s1752 = scalar_lea.sflag [#allocation5], 1
  %1753 = vsyncmov %s1752
  %s1754 = vpop.sfrf %1753
  %p1755 = scmp.eq.s32.totalorder %s1754, 0
  %p1756 = pneg %p1755
  %1758 = shalt.err (%p1756)

</llo_original>
